<compile_context>
chip_gen: v5e
topology: v5e:2x2
jax: 0.10.0
libtpu: 0.0.40
codegen_flags: <defaults>
</compile_context>

<pallas_src>
import functools

import jax
import jax.numpy as jnp
from jax import lax
from jax.experimental import pallas as pl
from jax.experimental.pallas import tpu as pltpu

EPS = 1e-5
M_CHUNK = 128           # rows per inner matmul chunk
MAX_BATCH_TILE = 64     # max batch elements per grid step (multiple of 8)


def _round_up(x, m):
    return ((x + m - 1) // m) * m


def _conv_layer(src_ref, w_ref, shift_ref, dst_ref, *, n_rows, m_chunk, dst_taps):
    """relu(conv + folded-BN shift) over a lane-im2col'd source.

    src_ref  : (n_rows, Kin) bf16 -- row r already holds the full contraction
               window of output row r, so each M-chunk is ONE aligned slab load
               feeding ONE MXU dot (no shifted loads, no lane concats).
    w_ref    : (Kin, Cout) bf16, eval-BN scale folded in (tap-major rows).
    shift_ref: (1, Cout) f32, conv bias + BN shift folded.
    dst_ref  : dst_taps == 1 -> (n_rows, Cout) plain output buffer.
               dst_taps  > 1 -> (n_rows, dst_taps*Cout) bf16 lane-im2col buffer
               for the *next* layer: dst[r, t*Cout:(t+1)*Cout] = y[r + t]; the
               producer writes its chunk into each tap block at row offset -t
               (shifted stores) so all consumer loads stay aligned.

    The chunk loop is a static Python loop on purpose: every chunk is full size
    (any tail is still a multiple of 8) and all offsets are compile-time
    constants, letting Mosaic plan the packed-bf16 shifted stores statically.
    """
    w = w_ref[...]
    shift = shift_ref[...]
    cout = w_ref.shape[1]
    m0 = 0
    while m0 < n_rows:
        m = min(m_chunk, n_rows - m0)                      # multiple of 8
        y = jnp.dot(src_ref[m0:m0 + m, :], w, preferred_element_type=jnp.float32)
        y = jnp.maximum(y + shift, 0.0)
        if dst_taps == 1:
            dst_ref[m0:m0 + m, :] = y.astype(dst_ref.dtype)
        else:
            yb = y.astype(jnp.bfloat16)                    # cast once per element
            for t in range(dst_taps):
                lo = m0 - t
                if lo >= 0:
                    dst_ref[lo:lo + m, t * cout:(t + 1) * cout] = yb
                else:
                    # first chunk only: rows s < t have no consumer row (r < 0)
                    dst_ref[0:m + lo, t * cout:(t + 1) * cout] = yb[-lo:, :]
        m0 += m


def _stack_kernel(xw_ref, w1_ref, w2_ref, w3_ref,
                  sh1_ref, sh2_ref, sh3_ref, sel_ref,
                  o_ref, h1w_ref, h2w_ref, h3_ref,
                  *, n_rows, m_chunk, k2, k3, l_valid):
    # Tap-tail rows that no producer ever writes must hold *finite* values every
    # step: they feed boundary-garbage rows that `sel` multiplies by exactly 0,
    # and 0 * NaN from stale / uninitialised VMEM would poison the mean.  Doing
    # this per step (a handful of rows) keeps the kernel independent of
    # program_id / scratch persistence, so it is megacore-safe.
    h1w_ref[n_rows - (k2 - 1):, :] = jnp.zeros((k2 - 1, h1w_ref.shape[1]), h1w_ref.dtype)
    h2w_ref[n_rows - (k3 - 1):, :] = jnp.zeros((k3 - 1, h2w_ref.shape[1]), h2w_ref.dtype)

    # layer 1: host-side im2col'd input (contraction depth K1*Cin = 64); the
    # bf16 ReLU output is staged straight into the K2 lane blocks of h1w.
    _conv_layer(xw_ref, w1_ref, sh1_ref, h1w_ref,
                n_rows=n_rows, m_chunk=m_chunk, dst_taps=k2)
    # layer 2: one aligned (m, K2*C1 = 640) slab -> one dot per chunk; staged
    # into the K3 lane blocks of h2w.
    _conv_layer(h1w_ref, w2_ref, sh2_ref, h2w_ref,
                n_rows=n_rows, m_chunk=m_chunk, dst_taps=k3)
    # layer 3: one aligned (m, K3*C2 = 768) slab -> one dot per chunk.
    _conv_layer(h2w_ref, w3_ref, sh3_ref, h3_ref,
                n_rows=n_rows, m_chunk=m_chunk, dst_taps=1)

    # per-batch mean over the L3 valid positions: one aligned bf16 selection
    # matmul ({0,1} entries, exact) scaled by a static 1/L3.
    o_ref[...] = jnp.dot(sel_ref[...], h3_ref[...],
                         preferred_element_type=jnp.float32) * (1.0 / l_valid)


def conv1d_three_layers(x, params, *, max_batch_tile=MAX_BATCH_TILE, m_chunk=M_CHUNK):
    B, L, Cin = x.shape

    # The torch forward starts with a *raw reshape* (NOT a transpose):
    # (B, L, Cin) -> (B, Cin, L).  We then go channels-last for the kernel.
    x_ncl = jnp.reshape(x, (B, Cin, L))
    x_cl = jnp.transpose(x_ncl, (0, 2, 1)).astype(jnp.float32)      # (B, L, Cin)

    def prep(lp):
        # fold eval-mode BN scale into the conv weights; bias + BN shift stays a
        # separate per-channel add.
        scale = lp['gamma'] * lax.rsqrt(lp['var'] + EPS)
        w = jnp.transpose(lp['w'], (2, 1, 0)) * scale[None, None, :]   # (K, I, O)
        K, I, O = w.shape
        wflat = w.reshape(K * I, O).astype(jnp.bfloat16)               # tap-major rows
        shift = ((lp['b'] - lp['mean']) * scale + lp['beta']).astype(jnp.float32)[None, :]
        return wflat, shift, K, O

    w1, sh1, K1, C1 = prep(params['l1'])
    w2, sh2, K2, C2 = prep(params['l2'])
    w3, sh3, K3, C3 = prep(params['l3'])
    L3 = L - (K1 - 1) - (K2 - 1) - (K3 - 1)          # valid length after 3 convs
    assert L3 >= 1, "sequence too short for the three valid convolutions"

    # Batch tile: multiple of 8, <= max_batch_tile, and (when B allows) at least
    # two grid steps so both v7x TensorCores get work.
    b8 = _round_up(B, 8)
    bt = min(max_batch_tile, b8)
    if b8 // bt < 2 and bt > 8:
        bt = max(8, _round_up(bt // 2, 8))
    B_pad = _round_up(b8, bt)
    N = bt * L                                        # rows per grid step (multiple of 8)

    if B_pad != B:
        x_cl = jnp.pad(x_cl, ((0, B_pad - B), (0, 0), (0, 0)))

    # Host-side im2col for layer 1 (layout plumbing):
    # (B_pad, L, Cin) -> (B_pad*L, K1*Cin) bf16, zero padded per batch element so
    # every flattened row has a finite (if boundary-garbage) window.
    x_zp = jnp.pad(x_cl, ((0, 0), (0, K1 - 1), (0, 0)))
    x_win = jnp.concatenate([x_zp[:, t:t + L, :] for t in range(K1)], axis=-1)
    x_win = x_win.reshape(B_pad * L, K1 * Cin).astype(jnp.bfloat16)

    # {0,1} selection matrix for the per-batch mean over the L3 valid positions
    # (exact in bf16; the 1/L3 scale is applied as a static scalar in-kernel).
    r = jnp.arange(N)[None, :]
    start = (jnp.arange(bt) * L)[:, None]
    sel = ((r >= start) & (r < start + L3)).astype(jnp.bfloat16)

    kernel = functools.partial(_stack_kernel, n_rows=N, m_chunk=m_chunk,
                               k2=K2, k3=K3, l_valid=L3)

    out = pl.pallas_call(
        kernel,
        out_shape=jax.ShapeDtypeStruct((B_pad, C3), jnp.float32),
        grid_spec=pltpu.PrefetchScalarGridSpec(
            num_scalar_prefetch=0,
            grid=(B_pad // bt,),
            in_specs=[
                pl.BlockSpec((N, K1 * Cin), lambda b: (b, 0)),     # im2col'd input tile
                pl.BlockSpec((K1 * Cin, C1), lambda b: (0, 0)),    # weights (bf16, BN folded)
                pl.BlockSpec((K2 * C1, C2), lambda b: (0, 0)),
                pl.BlockSpec((K3 * C2, C3), lambda b: (0, 0)),
                pl.BlockSpec((1, C1), lambda b: (0, 0)),           # bias + BN shift (f32)
                pl.BlockSpec((1, C2), lambda b: (0, 0)),
                pl.BlockSpec((1, C3), lambda b: (0, 0)),
                pl.BlockSpec((bt, N), lambda b: (0, 0)),           # mean-selection matrix
            ],
            out_specs=pl.BlockSpec((bt, C3), lambda b: (b, 0)),
            scratch_shapes=[
                pltpu.VMEM((N, K2 * C1), jnp.bfloat16),            # h1 lane-im2col (N, 640)
                pltpu.VMEM((N, K3 * C2), jnp.bfloat16),            # h2 lane-im2col (N, 768)
                pltpu.VMEM((N, C3), jnp.bfloat16),                 # h3 (N, 128)
            ],
        ),
        compiler_params=pltpu.CompilerParams(
            dimension_semantics=("parallel",),        # independent batch tiles (2 TCs on v7x)
            vmem_limit_bytes=32 * 1024 * 1024,        # v5e's scoped default is 16 MiB
        ),
    )(x_win, w1, w2, w3, sh1, sh2, sh3, sel)
    return out[:B]                                    # (B, 128)


def init_params(key, input_size, c1=128, c2=256, c3=128):
    ks = iter(jax.random.split(key, 18))

    def u(shape, lo=-0.1, hi=0.1):
        return jax.random.uniform(next(ks), shape, jnp.float32, lo, hi)

    def layer(cin, cout, ksize):
        return dict(
            w=u((cout, cin, ksize)),          # PyTorch Conv1d weight layout (O, I, K)
            b=u((cout,)),                     # conv bias
            gamma=u((cout,), 0.8, 1.2),       # BN weight
            beta=u((cout,)),                  # BN bias
            mean=u((cout,)),                  # BN running_mean
            var=u((cout,), 0.5, 1.5),         # BN running_var (positive)
        )

    return dict(l1=layer(input_size, c1, 8),
                l2=layer(c1, c2, 5),
                l3=layer(c2, c3, 3))


def reference(x, params):
    """Pure-JAX f32 reference mirroring the PyTorch forward (eval-mode BN)."""
    B, L, Cin = x.shape
    h = jnp.reshape(x, (B, Cin, L)).astype(jnp.float32)
    for lp in (params['l1'], params['l2'], params['l3']):
        y = lax.conv_general_dilated(h, lp['w'], (1,), 'VALID',
                                     dimension_numbers=('NCH', 'OIH', 'NCH'))
        y = y + lp['b'][None, :, None]
        y = (y - lp['mean'][None, :, None]) / jnp.sqrt(lp['var'][None, :, None] + EPS)
        y = y * lp['gamma'][None, :, None] + lp['beta'][None, :, None]
        h = jnp.maximum(y, 0.0)
    return jnp.mean(h, axis=2)


if __name__ == "__main__":
    key = jax.random.PRNGKey(0)
    kx, kp = jax.random.split(key)

    B, L, input_size = 10, 32, 8          # small; L >= 15 required by the 3 valid convs
    x = jax.random.normal(kx, (B, L, input_size), jnp.float32)
    params = init_params(kp, input_size)

    out = jax.jit(conv1d_three_layers)(x, params)
    out = jax.block_until_ready(out)

    ref = reference(x, params)
    assert out.shape == (B, 128), out.shape
    max_err = float(jnp.max(jnp.abs(out - ref)))
    scale = float(jnp.max(jnp.abs(ref)))
    tol = 3e-2 * scale + 3e-3             # bf16 matmul operands / bf16 staging vs f32 reference
    if max_err > tol:
        raise AssertionError(f"mismatch vs reference: max abs err {max_err} > tol {tol}")

    print("KERNEL_OK")
</pallas_src>

<mosaic_0001>
module attributes {stable_mosaic.version = 11 : i64} {
  func.func @_stack_kernel(%arg0: i32, %arg1: memref<256x64xbf16, #tpu.memory_space<vmem>>, %arg2: memref<64x128xbf16, #tpu.memory_space<vmem>>, %arg3: memref<640x256xbf16, #tpu.memory_space<vmem>>, %arg4: memref<768x128xbf16, #tpu.memory_space<vmem>>, %arg5: memref<1x128xf32, #tpu.memory_space<vmem>>, %arg6: memref<1x256xf32, #tpu.memory_space<vmem>>, %arg7: memref<1x128xf32, #tpu.memory_space<vmem>>, %arg8: memref<8x256xbf16, #tpu.memory_space<vmem>>, %arg9: memref<8x128xf32, #tpu.memory_space<vmem>>, %arg10: memref<256x640xbf16, #tpu.memory_space<vmem>>, %arg11: memref<256x768xbf16, #tpu.memory_space<vmem>>, %arg12: memref<256x128xbf16, #tpu.memory_space<vmem>>) attributes {dimension_semantics = [#tpu.dimension_semantics<parallel>], iteration_bounds = array<i64: 2>, scalar_prefetch = 0 : i64, scratch_operands = 3 : i64, tpu.core_type = #tpu.core_type<tc>, window_params = [{transform_indices = @transform_0, window_bounds = array<i64: 256, 64>}, {pipeline_mode = #tpu.pipeline_mode<synchronous>, transform_indices = @transform_1, window_bounds = array<i64: 64, 128>}, {pipeline_mode = #tpu.pipeline_mode<synchronous>, transform_indices = @transform_2, window_bounds = array<i64: 640, 256>}, {pipeline_mode = #tpu.pipeline_mode<synchronous>, transform_indices = @transform_3, window_bounds = array<i64: 768, 128>}, {pipeline_mode = #tpu.pipeline_mode<synchronous>, transform_indices = @transform_4, window_bounds = array<i64: 1, 128>}, {pipeline_mode = #tpu.pipeline_mode<synchronous>, transform_indices = @transform_5, window_bounds = array<i64: 1, 256>}, {pipeline_mode = #tpu.pipeline_mode<synchronous>, transform_indices = @transform_6, window_bounds = array<i64: 1, 128>}, {pipeline_mode = #tpu.pipeline_mode<synchronous>, transform_indices = @transform_7, window_bounds = array<i64: 8, 256>}, {transform_indices = @transform_8, window_bounds = array<i64: 8, 128>}]} {
    %cst = arith.constant 0.000000e+00 : bf16
    %0 = vector.broadcast %cst : bf16 to vector<4x640xbf16>
    %c252 = arith.constant 252 : index
    %c0 = arith.constant 0 : index
    %1 = vector.load %arg10[%c252, %c0] : memref<256x640xbf16, #tpu.memory_space<vmem>>, vector<4x640xbf16>
    tpu.vector_store %arg10[%c252, %c0], %0 {strides = array<i32>} : memref<256x640xbf16, #tpu.memory_space<vmem>>, vector<4x640xbf16>,
    %cst_0 = arith.constant 0.000000e+00 : bf16
    %2 = vector.broadcast %cst_0 : bf16 to vector<2x768xbf16>
    %c254 = arith.constant 254 : index
    %c0_1 = arith.constant 0 : index
    %3 = vector.load %arg11[%c254, %c0_1] : memref<256x768xbf16, #tpu.memory_space<vmem>>, vector<2x768xbf16>
    tpu.vector_store %arg11[%c254, %c0_1], %2 {strides = array<i32>} : memref<256x768xbf16, #tpu.memory_space<vmem>>, vector<2x768xbf16>,
    %c0_2 = arith.constant 0 : index
    %c0_3 = arith.constant 0 : index
    %4 = vector.load %arg2[%c0_2, %c0_3] : memref<64x128xbf16, #tpu.memory_space<vmem>>, vector<64x128xbf16>
    %c0_4 = arith.constant 0 : index
    %c0_5 = arith.constant 0 : index
    %5 = vector.load %arg5[%c0_4, %c0_5] : memref<1x128xf32, #tpu.memory_space<vmem>>, vector<1x128xf32>
    %c0_6 = arith.constant 0 : index
    %c0_7 = arith.constant 0 : index
    %6 = vector.load %arg1[%c0_6, %c0_7] : memref<256x64xbf16, #tpu.memory_space<vmem>>, vector<128x64xbf16>
    %cst_8 = arith.constant dense<0.000000e+00> : vector<128x128xf32>
    %7 = tpu.matmul %6, %4, %cst_8 {dimension_numbers = #tpu.dot_dimension_numbers<[1], [0], [0], [1], [0, 0, 1, 1], [], []>} : vector<128x64xbf16>, vector<64x128xbf16>, vector<128x128xf32> -> vector<128x128xf32>
    %8 = vector.broadcast %5 : vector<1x128xf32> to vector<128x128xf32>
    %9 = arith.addf %7, %8 : vector<128x128xf32>
    %cst_9 = arith.constant 0.000000e+00 : f32
    %10 = vector.broadcast %cst_9 : f32 to vector<128x128xf32>
    %11 = arith.maximumf %9, %10 : vector<128x128xf32>
    %12 = arith.truncf %11 : vector<128x128xf32> to vector<128x128xbf16>
    %c0_10 = arith.constant 0 : index
    %c0_11 = arith.constant 0 : index
    %13 = vector.load %arg10[%c0_10, %c0_11] : memref<256x640xbf16, #tpu.memory_space<vmem>>, vector<128x128xbf16>
    tpu.vector_store %arg10[%c0_10, %c0_11], %12 {strides = array<i32>} : memref<256x640xbf16, #tpu.memory_space<vmem>>, vector<128x128xbf16>,
    %14 = vector.extract_strided_slice %12 {offsets = [1, 0], sizes = [127, 128], strides = [1, 1]} : vector<128x128xbf16> to vector<127x128xbf16>
    %c0_12 = arith.constant 0 : index
    %c128 = arith.constant 128 : index
    %15 = vector.load %arg10[%c0_12, %c128] : memref<256x640xbf16, #tpu.memory_space<vmem>>, vector<127x128xbf16>
    tpu.vector_store %arg10[%c0_12, %c128], %14 {strides = array<i32>} : memref<256x640xbf16, #tpu.memory_space<vmem>>, vector<127x128xbf16>,
    %16 = vector.extract_strided_slice %12 {offsets = [2, 0], sizes = [126, 128], strides = [1, 1]} : vector<128x128xbf16> to vector<126x128xbf16>
    %c0_13 = arith.constant 0 : index
    %c256 = arith.constant 256 : index
    %17 = vector.load %arg10[%c0_13, %c256] : memref<256x640xbf16, #tpu.memory_space<vmem>>, vector<126x128xbf16>
    tpu.vector_store %arg10[%c0_13, %c256], %16 {strides = array<i32>} : memref<256x640xbf16, #tpu.memory_space<vmem>>, vector<126x128xbf16>,
    %18 = vector.extract_strided_slice %12 {offsets = [3, 0], sizes = [125, 128], strides = [1, 1]} : vector<128x128xbf16> to vector<125x128xbf16>
    %c0_14 = arith.constant 0 : index
    %c384 = arith.constant 384 : index
    %19 = vector.load %arg10[%c0_14, %c384] : memref<256x640xbf16, #tpu.memory_space<vmem>>, vector<125x128xbf16>
    tpu.vector_store %arg10[%c0_14, %c384], %18 {strides = array<i32>} : memref<256x640xbf16, #tpu.memory_space<vmem>>, vector<125x128xbf16>,
    %20 = vector.extract_strided_slice %12 {offsets = [4, 0], sizes = [124, 128], strides = [1, 1]} : vector<128x128xbf16> to vector<124x128xbf16>
    %c0_15 = arith.constant 0 : index
    %c512 = arith.constant 512 : index
    %21 = vector.load %arg10[%c0_15, %c512] : memref<256x640xbf16, #tpu.memory_space<vmem>>, vector<124x128xbf16>
    tpu.vector_store %arg10[%c0_15, %c512], %20 {strides = array<i32>} : memref<256x640xbf16, #tpu.memory_space<vmem>>, vector<124x128xbf16>,
    %c128_16 = arith.constant 128 : index
    %c0_17 = arith.constant 0 : index
    %22 = vector.load %arg1[%c128_16, %c0_17] : memref<256x64xbf16, #tpu.memory_space<vmem>>, vector<128x64xbf16>
    %cst_18 = arith.constant dense<0.000000e+00> : vector<128x128xf32>
    %23 = tpu.matmul %22, %4, %cst_18 {dimension_numbers = #tpu.dot_dimension_numbers<[1], [0], [0], [1], [0, 0, 1, 1], [], []>} : vector<128x64xbf16>, vector<64x128xbf16>, vector<128x128xf32> -> vector<128x128xf32>
    %24 = vector.broadcast %5 : vector<1x128xf32> to vector<128x128xf32>
    %25 = arith.addf %23, %24 : vector<128x128xf32>
    %cst_19 = arith.constant 0.000000e+00 : f32
    %26 = vector.broadcast %cst_19 : f32 to vector<128x128xf32>
    %27 = arith.maximumf %25, %26 : vector<128x128xf32>
    %28 = arith.truncf %27 : vector<128x128xf32> to vector<128x128xbf16>
    %c128_20 = arith.constant 128 : index
    %c0_21 = arith.constant 0 : index
    %29 = vector.load %arg10[%c128_20, %c0_21] : memref<256x640xbf16, #tpu.memory_space<vmem>>, vector<128x128xbf16>
    tpu.vector_store %arg10[%c128_20, %c0_21], %28 {strides = array<i32>} : memref<256x640xbf16, #tpu.memory_space<vmem>>, vector<128x128xbf16>,
    %c127 = arith.constant 127 : index
    %c128_22 = arith.constant 128 : index
    %30 = vector.load %arg10[%c127, %c128_22] : memref<256x640xbf16, #tpu.memory_space<vmem>>, vector<128x128xbf16>
    tpu.vector_store %arg10[%c127, %c128_22], %28 {strides = array<i32>} : memref<256x640xbf16, #tpu.memory_space<vmem>>, vector<128x128xbf16>,
    %c126 = arith.constant 126 : index
    %c256_23 = arith.constant 256 : index
    %31 = vector.load %arg10[%c126, %c256_23] : memref<256x640xbf16, #tpu.memory_space<vmem>>, vector<128x128xbf16>
    tpu.vector_store %arg10[%c126, %c256_23], %28 {strides = array<i32>} : memref<256x640xbf16, #tpu.memory_space<vmem>>, vector<128x128xbf16>,
    %c125 = arith.constant 125 : index
    %c384_24 = arith.constant 384 : index
    %32 = vector.load %arg10[%c125, %c384_24] : memref<256x640xbf16, #tpu.memory_space<vmem>>, vector<128x128xbf16>
    tpu.vector_store %arg10[%c125, %c384_24], %28 {strides = array<i32>} : memref<256x640xbf16, #tpu.memory_space<vmem>>, vector<128x128xbf16>,
    %c124 = arith.constant 124 : index
    %c512_25 = arith.constant 512 : index
    %33 = vector.load %arg10[%c124, %c512_25] : memref<256x640xbf16, #tpu.memory_space<vmem>>, vector<128x128xbf16>
    tpu.vector_store %arg10[%c124, %c512_25], %28 {strides = array<i32>} : memref<256x640xbf16, #tpu.memory_space<vmem>>, vector<128x128xbf16>,
    %c0_26 = arith.constant 0 : index
    %c0_27 = arith.constant 0 : index
    %34 = vector.load %arg3[%c0_26, %c0_27] : memref<640x256xbf16, #tpu.memory_space<vmem>>, vector<640x256xbf16>
    %c0_28 = arith.constant 0 : index
    %c0_29 = arith.constant 0 : index
    %35 = vector.load %arg6[%c0_28, %c0_29] : memref<1x256xf32, #tpu.memory_space<vmem>>, vector<1x256xf32>
    %c0_30 = arith.constant 0 : index
    %c0_31 = arith.constant 0 : index
    %36 = vector.load %arg10[%c0_30, %c0_31] : memref<256x640xbf16, #tpu.memory_space<vmem>>, vector<128x640xbf16>
    %cst_32 = arith.constant dense<0.000000e+00> : vector<128x256xf32>
    %37 = tpu.matmul %36, %34, %cst_32 {dimension_numbers = #tpu.dot_dimension_numbers<[1], [0], [0], [1], [0, 0, 1, 1], [], []>} : vector<128x640xbf16>, vector<640x256xbf16>, vector<128x256xf32> -> vector<128x256xf32>
    %38 = vector.broadcast %35 : vector<1x256xf32> to vector<128x256xf32>
    %39 = arith.addf %37, %38 : vector<128x256xf32>
    %cst_33 = arith.constant 0.000000e+00 : f32
    %40 = vector.broadcast %cst_33 : f32 to vector<128x256xf32>
    %41 = arith.maximumf %39, %40 : vector<128x256xf32>
    %42 = arith.truncf %41 : vector<128x256xf32> to vector<128x256xbf16>
    %c0_34 = arith.constant 0 : index
    %c0_35 = arith.constant 0 : index
    %43 = vector.load %arg11[%c0_34, %c0_35] : memref<256x768xbf16, #tpu.memory_space<vmem>>, vector<128x256xbf16>
    tpu.vector_store %arg11[%c0_34, %c0_35], %42 {strides = array<i32>} : memref<256x768xbf16, #tpu.memory_space<vmem>>, vector<128x256xbf16>,
    %44 = vector.extract_strided_slice %42 {offsets = [1, 0], sizes = [127, 256], strides = [1, 1]} : vector<128x256xbf16> to vector<127x256xbf16>
    %c0_36 = arith.constant 0 : index
    %c256_37 = arith.constant 256 : index
    %45 = vector.load %arg11[%c0_36, %c256_37] : memref<256x768xbf16, #tpu.memory_space<vmem>>, vector<127x256xbf16>
    tpu.vector_store %arg11[%c0_36, %c256_37], %44 {strides = array<i32>} : memref<256x768xbf16, #tpu.memory_space<vmem>>, vector<127x256xbf16>,
    %46 = vector.extract_strided_slice %42 {offsets = [2, 0], sizes = [126, 256], strides = [1, 1]} : vector<128x256xbf16> to vector<126x256xbf16>
    %c0_38 = arith.constant 0 : index
    %c512_39 = arith.constant 512 : index
    %47 = vector.load %arg11[%c0_38, %c512_39] : memref<256x768xbf16, #tpu.memory_space<vmem>>, vector<126x256xbf16>
    tpu.vector_store %arg11[%c0_38, %c512_39], %46 {strides = array<i32>} : memref<256x768xbf16, #tpu.memory_space<vmem>>, vector<126x256xbf16>,
    %c128_40 = arith.constant 128 : index
    %c0_41 = arith.constant 0 : index
    %48 = vector.load %arg10[%c128_40, %c0_41] : memref<256x640xbf16, #tpu.memory_space<vmem>>, vector<128x640xbf16>
    %cst_42 = arith.constant dense<0.000000e+00> : vector<128x256xf32>
    %49 = tpu.matmul %48, %34, %cst_42 {dimension_numbers = #tpu.dot_dimension_numbers<[1], [0], [0], [1], [0, 0, 1, 1], [], []>} : vector<128x640xbf16>, vector<640x256xbf16>, vector<128x256xf32> -> vector<128x256xf32>
    %50 = vector.broadcast %35 : vector<1x256xf32> to vector<128x256xf32>
    %51 = arith.addf %49, %50 : vector<128x256xf32>
    %cst_43 = arith.constant 0.000000e+00 : f32
    %52 = vector.broadcast %cst_43 : f32 to vector<128x256xf32>
    %53 = arith.maximumf %51, %52 : vector<128x256xf32>
    %54 = arith.truncf %53 : vector<128x256xf32> to vector<128x256xbf16>
    %c128_44 = arith.constant 128 : index
    %c0_45 = arith.constant 0 : index
    %55 = vector.load %arg11[%c128_44, %c0_45] : memref<256x768xbf16, #tpu.memory_space<vmem>>, vector<128x256xbf16>
    tpu.vector_store %arg11[%c128_44, %c0_45], %54 {strides = array<i32>} : memref<256x768xbf16, #tpu.memory_space<vmem>>, vector<128x256xbf16>,
    %c127_46 = arith.constant 127 : index
    %c256_47 = arith.constant 256 : index
    %56 = vector.load %arg11[%c127_46, %c256_47] : memref<256x768xbf16, #tpu.memory_space<vmem>>, vector<128x256xbf16>
    tpu.vector_store %arg11[%c127_46, %c256_47], %54 {strides = array<i32>} : memref<256x768xbf16, #tpu.memory_space<vmem>>, vector<128x256xbf16>,
    %c126_48 = arith.constant 126 : index
    %c512_49 = arith.constant 512 : index
    %57 = vector.load %arg11[%c126_48, %c512_49] : memref<256x768xbf16, #tpu.memory_space<vmem>>, vector<128x256xbf16>
    tpu.vector_store %arg11[%c126_48, %c512_49], %54 {strides = array<i32>} : memref<256x768xbf16, #tpu.memory_space<vmem>>, vector<128x256xbf16>,
    %c0_50 = arith.constant 0 : index
    %c0_51 = arith.constant 0 : index
    %58 = vector.load %arg4[%c0_50, %c0_51] : memref<768x128xbf16, #tpu.memory_space<vmem>>, vector<768x128xbf16>
    %c0_52 = arith.constant 0 : index
    %c0_53 = arith.constant 0 : index
    %59 = vector.load %arg7[%c0_52, %c0_53] : memref<1x128xf32, #tpu.memory_space<vmem>>, vector<1x128xf32>
    %c0_54 = arith.constant 0 : index
    %c0_55 = arith.constant 0 : index
    %60 = vector.load %arg11[%c0_54, %c0_55] : memref<256x768xbf16, #tpu.memory_space<vmem>>, vector<128x768xbf16>
    %cst_56 = arith.constant dense<0.000000e+00> : vector<128x128xf32>
    %61 = tpu.matmul %60, %58, %cst_56 {dimension_numbers = #tpu.dot_dimension_numbers<[1], [0], [0], [1], [0, 0, 1, 1], [], []>} : vector<128x768xbf16>, vector<768x128xbf16>, vector<128x128xf32> -> vector<128x128xf32>
    %62 = vector.broadcast %59 : vector<1x128xf32> to vector<128x128xf32>
    %63 = arith.addf %61, %62 : vector<128x128xf32>
    %cst_57 = arith.constant 0.000000e+00 : f32
    %64 = vector.broadcast %cst_57 : f32 to vector<128x128xf32>
    %65 = arith.maximumf %63, %64 : vector<128x128xf32>
    %66 = arith.truncf %65 : vector<128x128xf32> to vector<128x128xbf16>
    %c0_58 = arith.constant 0 : index
    %c0_59 = arith.constant 0 : index
    %67 = vector.load %arg12[%c0_58, %c0_59] : memref<256x128xbf16, #tpu.memory_space<vmem>>, vector<128x128xbf16>
    tpu.vector_store %arg12[%c0_58, %c0_59], %66 {strides = array<i32>} : memref<256x128xbf16, #tpu.memory_space<vmem>>, vector<128x128xbf16>,
    %c128_60 = arith.constant 128 : index
    %c0_61 = arith.constant 0 : index
    %68 = vector.load %arg11[%c128_60, %c0_61] : memref<256x768xbf16, #tpu.memory_space<vmem>>, vector<128x768xbf16>
    %cst_62 = arith.constant dense<0.000000e+00> : vector<128x128xf32>
    %69 = tpu.matmul %68, %58, %cst_62 {dimension_numbers = #tpu.dot_dimension_numbers<[1], [0], [0], [1], [0, 0, 1, 1], [], []>} : vector<128x768xbf16>, vector<768x128xbf16>, vector<128x128xf32> -> vector<128x128xf32>
    %70 = vector.broadcast %59 : vector<1x128xf32> to vector<128x128xf32>
    %71 = arith.addf %69, %70 : vector<128x128xf32>
    %cst_63 = arith.constant 0.000000e+00 : f32
    %72 = vector.broadcast %cst_63 : f32 to vector<128x128xf32>
    %73 = arith.maximumf %71, %72 : vector<128x128xf32>
    %74 = arith.truncf %73 : vector<128x128xf32> to vector<128x128xbf16>
    %c128_64 = arith.constant 128 : index
    %c0_65 = arith.constant 0 : index
    %75 = vector.load %arg12[%c128_64, %c0_65] : memref<256x128xbf16, #tpu.memory_space<vmem>>, vector<128x128xbf16>
    tpu.vector_store %arg12[%c128_64, %c0_65], %74 {strides = array<i32>} : memref<256x128xbf16, #tpu.memory_space<vmem>>, vector<128x128xbf16>,
    %c0_66 = arith.constant 0 : index
    %c0_67 = arith.constant 0 : index
    %76 = vector.load %arg8[%c0_66, %c0_67] : memref<8x256xbf16, #tpu.memory_space<vmem>>, vector<8x256xbf16>
    %c0_68 = arith.constant 0 : index
    %c0_69 = arith.constant 0 : index
    %77 = vector.load %arg12[%c0_68, %c0_69] : memref<256x128xbf16, #tpu.memory_space<vmem>>, vector<256x128xbf16>
    %cst_70 = arith.constant dense<0.000000e+00> : vector<8x128xf32>
    %78 = tpu.matmul %76, %77, %cst_70 {dimension_numbers = #tpu.dot_dimension_numbers<[1], [0], [0], [1], [0, 0, 1, 1], [], []>} : vector<8x256xbf16>, vector<256x128xbf16>, vector<8x128xf32> -> vector<8x128xf32>
    %cst_71 = arith.constant 0.0526315793 : f32
    %79 = vector.broadcast %cst_71 : f32 to vector<8x128xf32>
    %80 = arith.mulf %78, %79 : vector<8x128xf32>
    %c0_72 = arith.constant 0 : index
    %c0_73 = arith.constant 0 : index
    %81 = vector.load %arg9[%c0_72, %c0_73] : memref<8x128xf32, #tpu.memory_space<vmem>>, vector<8x128xf32>
    tpu.vector_store %arg9[%c0_72, %c0_73], %80 {strides = array<i32>} : memref<8x128xf32, #tpu.memory_space<vmem>>, vector<8x128xf32>,
    return
  }
  func.func @transform_0(%arg0: i32) -> (i32, i32) {
    %c0_i32 = arith.constant 0 : i32
    %c0_i32_0 = arith.constant 0 : i32
    return %arg0, %c0_i32 : i32, i32
  }
  func.func @transform_1(%arg0: i32) -> (i32, i32) {
    %c0_i32 = arith.constant 0 : i32
    %c0_i32_0 = arith.constant 0 : i32
    %c0_i32_1 = arith.constant 0 : i32
    return %c0_i32, %c0_i32_0 : i32, i32
  }
  func.func @transform_2(%arg0: i32) -> (i32, i32) {
    %c0_i32 = arith.constant 0 : i32
    %c0_i32_0 = arith.constant 0 : i32
    %c0_i32_1 = arith.constant 0 : i32
    return %c0_i32, %c0_i32_0 : i32, i32
  }
  func.func @transform_3(%arg0: i32) -> (i32, i32) {
    %c0_i32 = arith.constant 0 : i32
    %c0_i32_0 = arith.constant 0 : i32
    %c0_i32_1 = arith.constant 0 : i32
    return %c0_i32, %c0_i32_0 : i32, i32
  }
  func.func @transform_4(%arg0: i32) -> (i32, i32) {
    %c0_i32 = arith.constant 0 : i32
    %c0_i32_0 = arith.constant 0 : i32
    %c0_i32_1 = arith.constant 0 : i32
    return %c0_i32, %c0_i32_0 : i32, i32
  }
  func.func @transform_5(%arg0: i32) -> (i32, i32) {
    %c0_i32 = arith.constant 0 : i32
    %c0_i32_0 = arith.constant 0 : i32
    %c0_i32_1 = arith.constant 0 : i32
    return %c0_i32, %c0_i32_0 : i32, i32
  }
  func.func @transform_6(%arg0: i32) -> (i32, i32) {
    %c0_i32 = arith.constant 0 : i32
    %c0_i32_0 = arith.constant 0 : i32
    %c0_i32_1 = arith.constant 0 : i32
    return %c0_i32, %c0_i32_0 : i32, i32
  }
  func.func @transform_7(%arg0: i32) -> (i32, i32) {
    %c0_i32 = arith.constant 0 : i32
    %c0_i32_0 = arith.constant 0 : i32
    %c0_i32_1 = arith.constant 0 : i32
    return %c0_i32, %c0_i32_0 : i32, i32
  }
  func.func @transform_8(%arg0: i32) -> (i32, i32) {
    %c0_i32 = arith.constant 0 : i32
    %c0_i32_0 = arith.constant 0 : i32
    return %arg0, %c0_i32 : i32, i32
  }
}

</mosaic_0001>

<llo_original>
// kernel: conv1d_three_layers.1
$region0: #{conv1d_three_layers.1}
  #allocation0 [shape = 'u32[]', space=smem, size = 0x4, offset = 0x4, fixed_abs, tag = 'smem constant byte address 0x4 - core index']
  #allocation1 [shape = 'u32[72,128]{1,0:T(1,128)}', space=vmem, size = 0x9000, scoped, tag = 'internal scratch']
  #allocation2 [shape = 'bf16[256,640]{1,0:T(8,128)(2,1)}', space=vmem, size = 0x50000, scoped, tag = 'scratch operand']
  #allocation3 [shape = 'bf16[256,768]{1,0:T(8,128)(2,1)}', space=vmem, size = 0x60000, scoped, tag = 'scratch operand']
  #allocation4 [shape = 'bf16[256,128]{1,0:T(8,128)(2,1)}', space=vmem, size = 0x10000, scoped, tag = 'scratch operand']
  %s0 = inlined_call_operand.vmem [shape: bf16[512,64], index: 0, kind: input, shape index: {}]
  %s1 = inlined_call_operand.vmem [shape: bf16[64,128], index: 1, kind: input, shape index: {}]
  %s2 = inlined_call_operand.vmem [shape: bf16[640,256], index: 2, kind: input, shape index: {}]
  %s3 = inlined_call_operand.vmem [shape: bf16[768,128], index: 3, kind: input, shape index: {}]
  %s4 = inlined_call_operand.vmem [shape: f32[1,128], index: 4, kind: input, shape index: {}]
  %s5 = inlined_call_operand.vmem [shape: f32[1,256], index: 5, kind: input, shape index: {}]
  %s6 = inlined_call_operand.vmem [shape: f32[1,128], index: 6, kind: input, shape index: {}]
  %s7 = inlined_call_operand.vmem [shape: bf16[8,256], index: 7, kind: input, shape index: {}]
  %s8 = inlined_call_operand.hbm [shape: f32[16,128], index: 8, kind: output, shape index: {}]
  %s9 = sld [smem:[#allocation0]]
  $region65: #{conv1d_three_layers.1} parent=0
    _
  %s11 = ssub.s32 1, %s9
  %s12 = scalar_select 0, %s11, %s9
  $region1: #{conv1d_three_layers.1} parent=0
    #allocation5 [shape = 'u8[8192]{0}', space=vmem, size = 0x2000, scoped, tag = 'output window, operand 0']
    #allocation6 [shape = 's32[2]{0}', space=sflag, size = 0x8, scoped, tag = 'scoped memory for conv1d_three_layers.1']
    %13 = vsyncpa [#allocation6], 0
    %s14 = scalar_lea.sflag [#allocation6], 1
    %15 = vsyncpa %s14, 0
    loop: start=0, step=1, limit=4
    $region2: #{conv1d_three_layers.1} parent=1 // loop_pre_header
      _
    $region3: #{conv1d_three_layers.1} parent=1 // loop_header
      %s17 = sphi 0, %s21
      %p18 = scmp.ge.s32.totalorder %s17, 4
      %s27 = sphi 0, %s29
      %s30 = sphi 0, %s27
      %s31 = sphi 0, %s30
      %s47 = sphi 0, %s31
      %s51 = sphi 0, %s51
      %s53 = sphi 0, %s51
      %s54 = sphi 0, %s53
      %s68 = sphi 0, %s54
      %s72 = sphi 0, %s72
      %s74 = sphi 0, %s72
      %s75 = sphi 0, %s74
      %s89 = sphi 0, %s75
      %s93 = sphi 0, %s93
      %s95 = sphi 0, %s93
      %s96 = sphi 0, %s95
      %s110 = sphi 0, %s96
      %s114 = sphi 0, %s114
      %s116 = sphi 0, %s114
      %s117 = sphi 0, %s116
      %s131 = sphi 0, %s117
      %s135 = sphi 0, %s135
      %s137 = sphi 0, %s135
      %s138 = sphi 0, %s137
      %s152 = sphi 0, %s138
      %s156 = sphi 0, %s156
      %s158 = sphi 0, %s156
      %s159 = sphi 0, %s158
      %s173 = sphi 0, %s159
      %s177 = sphi 0, %s177
      %s179 = sphi 0, %s177
      %s180 = sphi 0, %s179
      %s194 = sphi 0, %s180
      %s200 = sphi 0, %s202
      %s203 = sphi 0, %s200
      %s204 = sphi 0, %s203
      %s220 = sphi 0, %s204
    $region4: #{conv1d_three_layers.1} parent=1 // loop_header_branch
      %20 = sbr.rel (%p18) target = $region8
    $region5: #{conv1d_three_layers.1} parent=1 // loop_body
      %s22 = ssub.s32 %s17, 1
      %s23 = ssub.s32 %s17, 2
      %s24 = sadd.s32 %s17, 1
      %s25 = ssub.s32 %s17, %s24
      %p26 = scmp.eq.s32.totalorder %s25, 0
      %s28 = sadd.s32 %s27, 1
      %s29 = scalar_select %p26, %s27, %s28
      %p32 = pneg %p26
      %p33 = scmp.eq.s32.totalorder %s17, 1
      %p34 = por %p32, %p33
      %p35 = scmp.ne.s32.totalorder %s27, %s30
      %p36 = scmp.eq.s32.totalorder %s17, 0
      %p37 = por %p35, %p36
      %p38 = scmp.ne.s32.totalorder %s27, %s30
      %p39 = scmp.eq.s32.totalorder %s22, 1
      %p40 = por %p38, %p39
      %p41 = scmp.ne.s32.totalorder %s30, %s31
      %p42 = scmp.eq.s32.totalorder %s22, 0
      %p43 = por %p41, %p42
      %p44 = scmp.ne.s32.totalorder %s30, %s31
      %p45 = scmp.eq.s32.totalorder %s23, 1
      %p46 = por %p44, %p45
      %p48 = scmp.ne.s32.totalorder %s31, %s47
      %p49 = scmp.eq.s32.totalorder %s23, 0
      %p50 = por %p48, %p49
      %s52 = sadd.s32 %s51, 1
      %p55 = scmp.eq.s32.totalorder %s17, 1
      %p56 = scmp.ne.s32.totalorder %s51, %s53
      %p57 = scmp.eq.s32.totalorder %s17, 0
      %p58 = por %p56, %p57
      %p59 = scmp.ne.s32.totalorder %s51, %s53
      %p60 = scmp.eq.s32.totalorder %s22, 1
      %p61 = por %p59, %p60
      %p62 = scmp.ne.s32.totalorder %s53, %s54
      %p63 = scmp.eq.s32.totalorder %s22, 0
      %p64 = por %p62, %p63
      %p65 = scmp.ne.s32.totalorder %s53, %s54
      %p66 = scmp.eq.s32.totalorder %s23, 1
      %p67 = por %p65, %p66
      %p69 = scmp.ne.s32.totalorder %s54, %s68
      %p70 = scmp.eq.s32.totalorder %s23, 0
      %p71 = por %p69, %p70
      %s73 = sadd.s32 %s72, 1
      %p76 = scmp.eq.s32.totalorder %s17, 1
      %p77 = scmp.ne.s32.totalorder %s72, %s74
      %p78 = scmp.eq.s32.totalorder %s17, 0
      %p79 = por %p77, %p78
      %p80 = scmp.ne.s32.totalorder %s72, %s74
      %p81 = scmp.eq.s32.totalorder %s22, 1
      %p82 = por %p80, %p81
      %p83 = scmp.ne.s32.totalorder %s74, %s75
      %p84 = scmp.eq.s32.totalorder %s22, 0
      %p85 = por %p83, %p84
      %p86 = scmp.ne.s32.totalorder %s74, %s75
      %p87 = scmp.eq.s32.totalorder %s23, 1
      %p88 = por %p86, %p87
      %p90 = scmp.ne.s32.totalorder %s75, %s89
      %p91 = scmp.eq.s32.totalorder %s23, 0
      %p92 = por %p90, %p91
      %s94 = sadd.s32 %s93, 1
      %p97 = scmp.eq.s32.totalorder %s17, 1
      %p98 = scmp.ne.s32.totalorder %s93, %s95
      %p99 = scmp.eq.s32.totalorder %s17, 0
      %p100 = por %p98, %p99
      %p101 = scmp.ne.s32.totalorder %s93, %s95
      %p102 = scmp.eq.s32.totalorder %s22, 1
      %p103 = por %p101, %p102
      %p104 = scmp.ne.s32.totalorder %s95, %s96
      %p105 = scmp.eq.s32.totalorder %s22, 0
      %p106 = por %p104, %p105
      %p107 = scmp.ne.s32.totalorder %s95, %s96
      %p108 = scmp.eq.s32.totalorder %s23, 1
      %p109 = por %p107, %p108
      %p111 = scmp.ne.s32.totalorder %s96, %s110
      %p112 = scmp.eq.s32.totalorder %s23, 0
      %p113 = por %p111, %p112
      %s115 = sadd.s32 %s114, 1
      %p118 = scmp.eq.s32.totalorder %s17, 1
      %p119 = scmp.ne.s32.totalorder %s114, %s116
      %p120 = scmp.eq.s32.totalorder %s17, 0
      %p121 = por %p119, %p120
      %p122 = scmp.ne.s32.totalorder %s114, %s116
      %p123 = scmp.eq.s32.totalorder %s22, 1
      %p124 = por %p122, %p123
      %p125 = scmp.ne.s32.totalorder %s116, %s117
      %p126 = scmp.eq.s32.totalorder %s22, 0
      %p127 = por %p125, %p126
      %p128 = scmp.ne.s32.totalorder %s116, %s117
      %p129 = scmp.eq.s32.totalorder %s23, 1
      %p130 = por %p128, %p129
      %p132 = scmp.ne.s32.totalorder %s117, %s131
      %p133 = scmp.eq.s32.totalorder %s23, 0
      %p134 = por %p132, %p133
      %s136 = sadd.s32 %s135, 1
      %p139 = scmp.eq.s32.totalorder %s17, 1
      %p140 = scmp.ne.s32.totalorder %s135, %s137
      %p141 = scmp.eq.s32.totalorder %s17, 0
      %p142 = por %p140, %p141
      %p143 = scmp.ne.s32.totalorder %s135, %s137
      %p144 = scmp.eq.s32.totalorder %s22, 1
      %p145 = por %p143, %p144
      %p146 = scmp.ne.s32.totalorder %s137, %s138
      %p147 = scmp.eq.s32.totalorder %s22, 0
      %p148 = por %p146, %p147
      %p149 = scmp.ne.s32.totalorder %s137, %s138
      %p150 = scmp.eq.s32.totalorder %s23, 1
      %p151 = por %p149, %p150
      %p153 = scmp.ne.s32.totalorder %s138, %s152
      %p154 = scmp.eq.s32.totalorder %s23, 0
      %p155 = por %p153, %p154
      %s157 = sadd.s32 %s156, 1
      %p160 = scmp.eq.s32.totalorder %s17, 1
      %p161 = scmp.ne.s32.totalorder %s156, %s158
      %p162 = scmp.eq.s32.totalorder %s17, 0
      %p163 = por %p161, %p162
      %p164 = scmp.ne.s32.totalorder %s156, %s158
      %p165 = scmp.eq.s32.totalorder %s22, 1
      %p166 = por %p164, %p165
      %p167 = scmp.ne.s32.totalorder %s158, %s159
      %p168 = scmp.eq.s32.totalorder %s22, 0
      %p169 = por %p167, %p168
      %p170 = scmp.ne.s32.totalorder %s158, %s159
      %p171 = scmp.eq.s32.totalorder %s23, 1
      %p172 = por %p170, %p171
      %p174 = scmp.ne.s32.totalorder %s159, %s173
      %p175 = scmp.eq.s32.totalorder %s23, 0
      %p176 = por %p174, %p175
      %s178 = sadd.s32 %s177, 1
      %p181 = scmp.eq.s32.totalorder %s17, 1
      %p182 = scmp.ne.s32.totalorder %s177, %s179
      %p183 = scmp.eq.s32.totalorder %s17, 0
      %p184 = por %p182, %p183
      %p185 = scmp.ne.s32.totalorder %s177, %s179
      %p186 = scmp.eq.s32.totalorder %s22, 1
      %p187 = por %p185, %p186
      %p188 = scmp.ne.s32.totalorder %s179, %s180
      %p189 = scmp.eq.s32.totalorder %s22, 0
      %p190 = por %p188, %p189
      %p191 = scmp.ne.s32.totalorder %s179, %s180
      %p192 = scmp.eq.s32.totalorder %s23, 1
      %p193 = por %p191, %p192
      %p195 = scmp.ne.s32.totalorder %s180, %s194
      %p196 = scmp.eq.s32.totalorder %s23, 0
      %p197 = por %p195, %p196
      %s198 = ssub.s32 %s17, %s24
      %p199 = scmp.eq.s32.totalorder %s198, 0
      %s201 = sadd.s32 %s200, 1
      %s202 = scalar_select %p199, %s200, %s201
      %p205 = pneg %p199
      %p206 = scmp.eq.s32.totalorder %s17, 1
      %p207 = por %p205, %p206
      %p208 = scmp.ne.s32.totalorder %s200, %s203
      %p209 = scmp.eq.s32.totalorder %s17, 0
      %p210 = por %p208, %p209
      %p211 = scmp.ne.s32.totalorder %s200, %s203
      %p212 = scmp.eq.s32.totalorder %s22, 1
      %p213 = por %p211, %p212
      %p214 = scmp.ne.s32.totalorder %s203, %s204
      %p215 = scmp.eq.s32.totalorder %s22, 0
      %p216 = por %p214, %p215
      %p217 = scmp.ne.s32.totalorder %s203, %s204
      %p218 = scmp.eq.s32.totalorder %s23, 1
      %p219 = por %p217, %p218
      %p221 = scmp.ne.s32.totalorder %s204, %s220
      %p222 = scmp.eq.s32.totalorder %s23, 0
      %p223 = por %p221, %p222
      %p224 = scmp.le.s32.totalorder 1, %s17
      %p225 = scmp.lt.s32.totalorder %s17, 3
      %p226 = pnand %p224, %p225
      %p227 = pneg %p226
      // Predicated region
      $region9: #{conv1d_three_layers.1} parent=5 // pred_check
        _
      $region10: #{conv1d_three_layers.1} parent=5 // pred_check_branch
        %229 = sbr.rel (%p226) target = $region12
      $region11: #{conv1d_three_layers.1} parent=5 // pred_region
        %s230 = ssub.s32 %s17, 1
        // Predicated region
        $region13: #{conv1d_three_layers.1} parent=11 // pred_check
          %p231 = pneg %p64
        $region14: #{conv1d_three_layers.1} parent=11 // pred_check_branch
          %233 = sbr.rel (%p231) target = $region16
        $region15: #{conv1d_three_layers.1} parent=11 // pred_region
          _
        $region16: #{conv1d_three_layers.1} parent=11 // pred_fallthru
          _
        // Predicated region
        $region17: #{conv1d_three_layers.1} parent=11 // pred_check
          %p234 = pneg %p85
        $region18: #{conv1d_three_layers.1} parent=11 // pred_check_branch
          %236 = sbr.rel (%p234) target = $region20
        $region19: #{conv1d_three_layers.1} parent=11 // pred_region
          _
        $region20: #{conv1d_three_layers.1} parent=11 // pred_fallthru
          _
        // Predicated region
        $region21: #{conv1d_three_layers.1} parent=11 // pred_check
          %p237 = pneg %p106
        $region22: #{conv1d_three_layers.1} parent=11 // pred_check_branch
          %239 = sbr.rel (%p237) target = $region24
        $region23: #{conv1d_three_layers.1} parent=11 // pred_region
          _
        $region24: #{conv1d_three_layers.1} parent=11 // pred_fallthru
          _
        // Predicated region
        $region25: #{conv1d_three_layers.1} parent=11 // pred_check
          %p240 = pneg %p127
        $region26: #{conv1d_three_layers.1} parent=11 // pred_check_branch
          %242 = sbr.rel (%p240) target = $region28
        $region27: #{conv1d_three_layers.1} parent=11 // pred_region
          _
        $region28: #{conv1d_three_layers.1} parent=11 // pred_fallthru
          _
        // Predicated region
        $region29: #{conv1d_three_layers.1} parent=11 // pred_check
          %p243 = pneg %p148
        $region30: #{conv1d_three_layers.1} parent=11 // pred_check_branch
          %245 = sbr.rel (%p243) target = $region32
        $region31: #{conv1d_three_layers.1} parent=11 // pred_region
          _
        $region32: #{conv1d_three_layers.1} parent=11 // pred_fallthru
          _
        // Predicated region
        $region33: #{conv1d_three_layers.1} parent=11 // pred_check
          %p246 = pneg %p169
        $region34: #{conv1d_three_layers.1} parent=11 // pred_check_branch
          %248 = sbr.rel (%p246) target = $region36
        $region35: #{conv1d_three_layers.1} parent=11 // pred_region
          _
        $region36: #{conv1d_three_layers.1} parent=11 // pred_fallthru
          _
        // Predicated region
        $region37: #{conv1d_three_layers.1} parent=11 // pred_check
          %p249 = pneg %p190
        $region38: #{conv1d_three_layers.1} parent=11 // pred_check_branch
          %251 = sbr.rel (%p249) target = $region40
        $region39: #{conv1d_three_layers.1} parent=11 // pred_region
          _
        $region40: #{conv1d_three_layers.1} parent=11 // pred_fallthru
          _
      $region12: #{conv1d_three_layers.1} parent=5 // pred_fallthru
        _
      %p252 = scmp.lt.s32.totalorder %s17, 2
      // Predicated region
      $region41: #{conv1d_three_layers.1} parent=5 // pred_check
        %p253 = pneg %p252
      $region42: #{conv1d_three_layers.1} parent=5 // pred_check_branch
        %255 = sbr.rel (%p253) target = $region44
      $region43: #{conv1d_three_layers.1} parent=5 // pred_region
        // Predicated region
        $region45: #{conv1d_three_layers.1} parent=43 // pred_check
          %p256 = pneg %p37
        $region46: #{conv1d_three_layers.1} parent=43 // pred_check_branch
          %258 = sbr.rel (%p256) target = $region48
        $region47: #{conv1d_three_layers.1} parent=43 // pred_region
          %s259 = smul.u32 32, %s17
          %p260 = scmp.lt.s32.totalorder %s259, 63
          %s261 = scalar_select %p260, %s259, 63
          %s262 = smul.addr %s261, 4
          %s263 = scalar_lea.vmem %s0, %s262
          %s264 = smul.u32 32, %s17
        $region48: #{conv1d_three_layers.1} parent=43 // pred_fallthru
          _
      $region44: #{conv1d_three_layers.1} parent=5 // pred_fallthru
        _
      %p265 = scmp.le.s32.totalorder 1, %s17
      %p266 = scmp.lt.s32.totalorder %s17, 3
      %p267 = pnand %p265, %p266
      %p268 = pneg %p267
      // Predicated region
      $region49: #{conv1d_three_layers.1} parent=5 // pred_check
        _
      $region50: #{conv1d_three_layers.1} parent=5 // pred_check_branch
        %270 = sbr.rel (%p267) target = $region52
      $region51: #{conv1d_three_layers.1} parent=5 // pred_region
        %s271 = ssub.s32 %s17, 1
        %s272 = smul.u32 32, %s22
        %p273 = scmp.lt.s32.totalorder %s272, 63
        %s274 = scalar_select %p273, %s272, 63
        %s275 = smul.addr %s274, 4
        %s276 = scalar_lea.vmem %s0, %s275
        %p277 = pneg %p43
        %p278 = pneg %p40
        %p279 = pneg %p64
        %p280 = pneg %p61
        %p281 = pneg %p85
        %p282 = pneg %p82
        %p283 = pneg %p106
        %p284 = pneg %p103
        %p285 = pneg %p127
        %p286 = pneg %p124
        %p287 = pneg %p148
        %p288 = pneg %p145
        %p289 = pneg %p169
        %p290 = pneg %p166
        %p291 = pneg %p190
        %p292 = pneg %p187
        %p293 = pneg %p216
        %p294 = pneg %p213
        %s295 = sand.u32 %s203, 1
        %s296 = scalar_lea.sflag [#allocation6], %s295
        %s297 = sand.u32 %s203, 1
        %s298 = smul.addr %s297, 8
        %s299 = scalar_lea.vmem [#allocation5], %s298
        %s300 = smul.u32 32, %s22
        %p301 = scmp.lt.s32.totalorder %s300, 63
        %s302 = scalar_select %p301, %s300, 63
        %s303 = smul.addr %s302, 4
        %s304 = scalar_lea.vmem %s0, %s303
        %s305 = smul.u32 32, %s22
        %307 = vst [vmem:[#allocation2 + $0x26c] sm:$0xcc] 0
        %308 = vst [vmem:[#allocation2 + $0x274] sm:$0xcc] 0
        %309 = vst [vmem:[#allocation2 + $0x27c] sm:$0xc] 0
        %310 = vst [vmem:[#allocation3 + $0x2e8] sm:$0x88] 0
        %311 = vst [vmem:[#allocation3 + $0x2f0] sm:$0x88] 0
        %312 = vst [vmem:[#allocation3 + $0x2f8] sm:$0x88] 0
        %v313 = vld [vmem:[%s1] sm:$0xf]
        %v314 = vld [vmem:[%s1 + $0x4] sm:$0xf]
        %v315 = vld [vmem:[%s1 + $0x8] sm:$0xf]
        %v316 = vld [vmem:[%s1 + $0xc] sm:$0xf]
        %v317 = vld [vmem:[%s1 + $0x10] sm:$0xf]
        %v318 = vld [vmem:[%s1 + $0x14] sm:$0xf]
        %v319 = vld [vmem:[%s1 + $0x18] sm:$0xf]
        %v320 = vld [vmem:[%s1 + $0x1c] sm:$0xf]
        %v321 = vld [vmem:[%s4] sm:$0x1]
        %v322 = vld [vmem:[%s304] sm:$0xf]
        %v323 = vld [vmem:[%s304 + $0x4] sm:$0xf]
        %v324 = vld [vmem:[%s304 + $0x8] sm:$0xf]
        %v325 = vld [vmem:[%s304 + $0xc] sm:$0xf]
        %v326 = vld [vmem:[%s304 + $0x10] sm:$0xf]
        %v327 = vld [vmem:[%s304 + $0x14] sm:$0xf]
        %v328 = vld [vmem:[%s304 + $0x18] sm:$0xf]
        %v329 = vld [vmem:[%s304 + $0x1c] sm:$0xf]
        %v330 = vld [vmem:[%s304 + $0x20] sm:$0xf]
        %v331 = vld [vmem:[%s304 + $0x24] sm:$0xf]
        %v332 = vld [vmem:[%s304 + $0x28] sm:$0xf]
        %v333 = vld [vmem:[%s304 + $0x2c] sm:$0xf]
        %v334 = vld [vmem:[%s304 + $0x30] sm:$0xf]
        %v335 = vld [vmem:[%s304 + $0x34] sm:$0xf]
        %v336 = vld [vmem:[%s304 + $0x38] sm:$0xf]
        %v337 = vld [vmem:[%s304 + $0x3c] sm:$0xf]
        %v339 = vperm.slane %v321, 0
        %v357 = vunpack.c.l.b16 %v322
        %v358 = vunpack.c.l.b16 %v323
        %v359 = vunpack.c.l.b16 %v324
        %v360 = vunpack.c.l.b16 %v325
        %v361 = vunpack.c.l.b16 %v326
        %v362 = vunpack.c.l.b16 %v327
        %v363 = vunpack.c.l.b16 %v328
        %v364 = vunpack.c.l.b16 %v329
        %v365 = vunpack.c.l.b16 %v330
        %v366 = vunpack.c.l.b16 %v331
        %v367 = vunpack.c.l.b16 %v332
        %v368 = vunpack.c.l.b16 %v333
        %v369 = vunpack.c.l.b16 %v334
        %v370 = vunpack.c.l.b16 %v335
        %v371 = vunpack.c.l.b16 %v336
        %v372 = vunpack.c.l.b16 %v337
        %v373 = vpack.c.b16 %v358, %v357
        %v374 = vpack.c.b16 %v360, %v359
        %v375 = vpack.c.b16 %v362, %v361
        %v376 = vpack.c.b16 %v364, %v363
        %v377 = vpack.c.b16 %v366, %v365
        %v378 = vpack.c.b16 %v368, %v367
        %v379 = vpack.c.b16 %v370, %v369
        %v380 = vpack.c.b16 %v372, %v371
        %v389 = vunpack.c.l.b16 %v313
        %v390 = vunpack.c.l.b16 %v314
        %v391 = vunpack.c.l.b16 %v315
        %v392 = vunpack.c.l.b16 %v316
        %v393 = vunpack.c.l.b16 %v317
        %v394 = vunpack.c.l.b16 %v318
        %v395 = vunpack.c.l.b16 %v319
        %v396 = vunpack.c.l.b16 %v320
        %v397 = vpack.c.b16 %v390, %v389
        %v398 = vpack.c.b16 %v392, %v391
        %v399 = vpack.c.b16 %v394, %v393
        %v400 = vpack.c.b16 %v396, %v395
        %vm405 = vcmask 523264
        %v407 = vsel %vm405, %v373, 0
        %v410 = vsel %vm405, %v374, 0
        %v413 = vsel %vm405, %v375, 0
        %v416 = vsel %vm405, %v376, 0
        %v419 = vsel %vm405, %v377, 0
        %v422 = vsel %vm405, %v378, 0
        %v425 = vsel %vm405, %v379, 0
        %v428 = vsel %vm405, %v380, 0
        %430 = vmatpush.bf16.msra.mxu0 0
        %431 = vmatpush.bf16.msra.mxu0 0
        %432 = vmatpush.bf16.msra.mxu0 0
        %433 = vmatpush.bf16.msra.mxu0 0
        %434 = vmatpush.bf16.msra.mxu0 %v400
        %435 = vmatpush.bf16.msra.mxu0 %v399
        %436 = vmatpush.bf16.msra.mxu0 %v398
        %437 = vmatpush.bf16.msra.mxu0 %v397
        %438 = vmatmul.bf16.gmra.mxu0 %v407
        %v439 = vpop.f32.mrf.mxu0
        %v440 = vadd.f32 %v339, %v439
        %v441 = vpop.f32.mrf.mxu0
        %v442 = vadd.f32 %v339, %v441
        %443 = vmatmul.bf16.gmra.mxu0 %v410
        %v444 = vpop.f32.mrf.mxu0
        %v445 = vadd.f32 %v339, %v444
        %v446 = vpop.f32.mrf.mxu0
        %v447 = vadd.f32 %v339, %v446
        %448 = vmatmul.bf16.gmra.mxu0 %v413
        %v449 = vpop.f32.mrf.mxu0
        %v450 = vadd.f32 %v339, %v449
        %v451 = vpop.f32.mrf.mxu0
        %v452 = vadd.f32 %v339, %v451
        %453 = vmatmul.bf16.gmra.mxu0 %v416
        %v454 = vpop.f32.mrf.mxu0
        %v455 = vadd.f32 %v339, %v454
        %v456 = vpop.f32.mrf.mxu0
        %v457 = vadd.f32 %v339, %v456
        %458 = vmatmul.bf16.gmra.mxu0 %v419
        %v459 = vpop.f32.mrf.mxu0
        %v460 = vadd.f32 %v339, %v459
        %v461 = vpop.f32.mrf.mxu0
        %v462 = vadd.f32 %v339, %v461
        %463 = vmatmul.bf16.gmra.mxu0 %v422
        %v464 = vpop.f32.mrf.mxu0
        %v465 = vadd.f32 %v339, %v464
        %v466 = vpop.f32.mrf.mxu0
        %v467 = vadd.f32 %v339, %v466
        %468 = vmatmul.bf16.gmra.mxu0 %v425
        %v469 = vpop.f32.mrf.mxu0
        %v470 = vadd.f32 %v339, %v469
        %v471 = vpop.f32.mrf.mxu0
        %v472 = vadd.f32 %v339, %v471
        %473 = vmatmul.bf16.gmra.mxu0 %v428
        %v474 = vpop.f32.mrf.mxu0
        %v475 = vadd.f32 %v339, %v474
        %v476 = vpop.f32.mrf.mxu0
        %v477 = vadd.f32 %v339, %v476
        %478 = vdwg.mxu0
        %v479 = vmax.f32 %v440, 0.0
        %v480 = vmax.f32 %v442, 0.0
        %v481 = vmax.f32 %v445, 0.0
        %v482 = vmax.f32 %v447, 0.0
        %v483 = vmax.f32 %v450, 0.0
        %v484 = vmax.f32 %v452, 0.0
        %v485 = vmax.f32 %v455, 0.0
        %v486 = vmax.f32 %v457, 0.0
        %v487 = vmax.f32 %v460, 0.0
        %v488 = vmax.f32 %v462, 0.0
        %v489 = vmax.f32 %v465, 0.0
        %v490 = vmax.f32 %v467, 0.0
        %v491 = vmax.f32 %v470, 0.0
        %v492 = vmax.f32 %v472, 0.0
        %v493 = vmax.f32 %v475, 0.0
        %v494 = vmax.f32 %v477, 0.0
        %v495 = vpack.c.bf16 %v479, %v479
        %v496 = vpack.c.bf16 %v480, %v480
        %v497 = vpack.c.bf16 %v481, %v481
        %v498 = vpack.c.bf16 %v482, %v482
        %v499 = vpack.c.bf16 %v483, %v483
        %v500 = vpack.c.bf16 %v484, %v484
        %v501 = vpack.c.bf16 %v485, %v485
        %v502 = vpack.c.bf16 %v486, %v486
        %v503 = vpack.c.bf16 %v487, %v487
        %v504 = vpack.c.bf16 %v488, %v488
        %v505 = vpack.c.bf16 %v489, %v489
        %v506 = vpack.c.bf16 %v490, %v490
        %v507 = vpack.c.bf16 %v491, %v491
        %v508 = vpack.c.bf16 %v492, %v492
        %v509 = vpack.c.bf16 %v493, %v493
        %v510 = vpack.c.bf16 %v494, %v494
        %511 = vst [vmem:[#allocation2] sm:$0xf] %v495
        %512 = vst [vmem:[#allocation2 + $0x14] sm:$0xf] %v496
        %513 = vst [vmem:[#allocation2 + $0x28] sm:$0xf] %v497
        %514 = vst [vmem:[#allocation2 + $0x3c] sm:$0xf] %v498
        %515 = vst [vmem:[#allocation2 + $0x50] sm:$0xf] %v499
        %516 = vst [vmem:[#allocation2 + $0x64] sm:$0xf] %v500
        %517 = vst [vmem:[#allocation2 + $0x78] sm:$0xf] %v501
        %518 = vst [vmem:[#allocation2 + $0x8c] sm:$0xf] %v502
        %519 = vst [vmem:[#allocation2 + $0xa0] sm:$0xf] %v503
        %520 = vst [vmem:[#allocation2 + $0xb4] sm:$0xf] %v504
        %521 = vst [vmem:[#allocation2 + $0xc8] sm:$0xf] %v505
        %522 = vst [vmem:[#allocation2 + $0xdc] sm:$0xf] %v506
        %523 = vst [vmem:[#allocation2 + $0xf0] sm:$0xf] %v507
        %524 = vst [vmem:[#allocation2 + $0x104] sm:$0xf] %v508
        %525 = vst [vmem:[#allocation2 + $0x118] sm:$0xf] %v509
        %526 = vst [vmem:[#allocation2 + $0x12c] sm:$0xf] %v510
        %vm527 = vsmask.f32 3328
        %vm528 = vsmask.f32 7440
        %vm529 = vmor %vm527, %vm528
        %v531 = vshrl.u32 %v495, 16
        %v533 = vrot.slane %v531, 4
        %v534 = vshll.u32 %v495, 16
        %v536 = vrot.slane %v534, 5
        %v537 = vor.u32 %v533, %v536
        %v538 = vrot.slane %v537, 4
        %v540 = vshll.u32 %v496, 16
        %v542 = vrot.slane %v540, 5
        %v543 = vsel %vm529, %v538, %v542
        %v544 = vshrl.u32 %v496, 16
        %v546 = vrot.slane %v544, 4
        %v547 = vor.u32 %v546, %v542
        %v548 = vrot.slane %v547, 4
        %v550 = vshll.u32 %v497, 16
        %v552 = vrot.slane %v550, 5
        %v553 = vsel %vm529, %v548, %v552
        %v554 = vshrl.u32 %v497, 16
        %v556 = vrot.slane %v554, 4
        %v557 = vor.u32 %v556, %v552
        %v558 = vrot.slane %v557, 4
        %v560 = vshll.u32 %v498, 16
        %v562 = vrot.slane %v560, 5
        %v563 = vsel %vm529, %v558, %v562
        %v564 = vshrl.u32 %v498, 16
        %v566 = vrot.slane %v564, 4
        %v567 = vor.u32 %v566, %v562
        %v568 = vrot.slane %v567, 4
        %v570 = vshll.u32 %v499, 16
        %v572 = vrot.slane %v570, 5
        %v573 = vsel %vm529, %v568, %v572
        %v574 = vshrl.u32 %v499, 16
        %v576 = vrot.slane %v574, 4
        %v577 = vor.u32 %v576, %v572
        %v578 = vrot.slane %v577, 4
        %v580 = vshll.u32 %v500, 16
        %v582 = vrot.slane %v580, 5
        %v583 = vsel %vm529, %v578, %v582
        %v584 = vshrl.u32 %v500, 16
        %v586 = vrot.slane %v584, 4
        %v587 = vor.u32 %v586, %v582
        %v588 = vrot.slane %v587, 4
        %v590 = vshll.u32 %v501, 16
        %v592 = vrot.slane %v590, 5
        %v593 = vsel %vm529, %v588, %v592
        %v594 = vshrl.u32 %v501, 16
        %v596 = vrot.slane %v594, 4
        %v597 = vor.u32 %v596, %v592
        %v598 = vrot.slane %v597, 4
        %v600 = vshll.u32 %v502, 16
        %v602 = vrot.slane %v600, 5
        %v603 = vsel %vm529, %v598, %v602
        %v604 = vshrl.u32 %v502, 16
        %v606 = vrot.slane %v604, 4
        %v607 = vor.u32 %v606, %v602
        %v608 = vrot.slane %v607, 4
        %v610 = vshll.u32 %v503, 16
        %v612 = vrot.slane %v610, 5
        %v613 = vsel %vm529, %v608, %v612
        %v614 = vshrl.u32 %v503, 16
        %v616 = vrot.slane %v614, 4
        %v617 = vor.u32 %v616, %v612
        %v618 = vrot.slane %v617, 4
        %v620 = vshll.u32 %v504, 16
        %v622 = vrot.slane %v620, 5
        %v623 = vsel %vm529, %v618, %v622
        %v624 = vshrl.u32 %v504, 16
        %v626 = vrot.slane %v624, 4
        %v627 = vor.u32 %v626, %v622
        %v628 = vrot.slane %v627, 4
        %v630 = vshll.u32 %v505, 16
        %v632 = vrot.slane %v630, 5
        %v633 = vsel %vm529, %v628, %v632
        %v634 = vshrl.u32 %v505, 16
        %v636 = vrot.slane %v634, 4
        %v637 = vor.u32 %v636, %v632
        %v638 = vrot.slane %v637, 4
        %v640 = vshll.u32 %v506, 16
        %v642 = vrot.slane %v640, 5
        %v643 = vsel %vm529, %v638, %v642
        %v644 = vshrl.u32 %v506, 16
        %v646 = vrot.slane %v644, 4
        %v647 = vor.u32 %v646, %v642
        %v648 = vrot.slane %v647, 4
        %v650 = vshll.u32 %v507, 16
        %v652 = vrot.slane %v650, 5
        %v653 = vsel %vm529, %v648, %v652
        %v654 = vshrl.u32 %v507, 16
        %v656 = vrot.slane %v654, 4
        %v657 = vor.u32 %v656, %v652
        %v658 = vrot.slane %v657, 4
        %v660 = vshll.u32 %v508, 16
        %v662 = vrot.slane %v660, 5
        %v663 = vsel %vm529, %v658, %v662
        %v664 = vshrl.u32 %v508, 16
        %v666 = vrot.slane %v664, 4
        %v667 = vor.u32 %v666, %v662
        %v668 = vrot.slane %v667, 4
        %v670 = vshll.u32 %v509, 16
        %v672 = vrot.slane %v670, 5
        %v673 = vsel %vm529, %v668, %v672
        %v674 = vshrl.u32 %v509, 16
        %v676 = vrot.slane %v674, 4
        %v677 = vor.u32 %v676, %v672
        %v678 = vrot.slane %v677, 4
        %v680 = vshll.u32 %v510, 16
        %v682 = vrot.slane %v680, 5
        %v683 = vsel %vm529, %v678, %v682
        %v684 = vshrl.u32 %v510, 16
        %v686 = vrot.slane %v684, 4
        %v687 = vor.u32 %v686, %v682
        %v688 = vrot.slane %v687, 4
        %705 = vst [vmem:[#allocation2 + $0x4] sm:$0xf] %v543
        %706 = vst [vmem:[#allocation2 + $0x18] sm:$0xf] %v553
        %707 = vst [vmem:[#allocation2 + $0x2c] sm:$0xf] %v563
        %708 = vst [vmem:[#allocation2 + $0x40] sm:$0xf] %v573
        %709 = vst [vmem:[#allocation2 + $0x54] sm:$0xf] %v583
        %710 = vst [vmem:[#allocation2 + $0x68] sm:$0xf] %v593
        %711 = vst [vmem:[#allocation2 + $0x7c] sm:$0xf] %v603
        %712 = vst [vmem:[#allocation2 + $0x90] sm:$0xf] %v613
        %713 = vst [vmem:[#allocation2 + $0xa4] sm:$0xf] %v623
        %714 = vst [vmem:[#allocation2 + $0xb8] sm:$0xf] %v633
        %715 = vst [vmem:[#allocation2 + $0xcc] sm:$0xf] %v643
        %716 = vst [vmem:[#allocation2 + $0xe0] sm:$0xf] %v653
        %717 = vst [vmem:[#allocation2 + $0xf4] sm:$0xf] %v663
        %718 = vst [vmem:[#allocation2 + $0x108] sm:$0xf] %v673
        %719 = vst [vmem:[#allocation2 + $0x11c] sm:$0xf] %v683
        %vm720 = vcmask 1043456
        %vm721 = vmand %vm720, %vm527
        %v722 = vld [vmem:[#allocation2 + $0x130] sm:$0xf]
        %v723 = vsel %vm721, %v688, %v722
        %724 = vst [vmem:[#allocation2 + $0x130] sm:$0xf] %v723
        %vm741 = vcmask 1042432
        %vm742 = vcmask 1046532
        %vm743 = vmor %vm741, %vm742
        %v744 = vrot.slane %v495, 5
        %v745 = vrot.slane %v744, 4
        %v746 = vrot.slane %v496, 5
        %v747 = vsel %vm743, %v745, %v746
        %v748 = vrot.slane %v746, 4
        %v749 = vrot.slane %v497, 5
        %v750 = vsel %vm743, %v748, %v749
        %v751 = vrot.slane %v749, 4
        %v752 = vrot.slane %v498, 5
        %v753 = vsel %vm743, %v751, %v752
        %v754 = vrot.slane %v752, 4
        %v755 = vrot.slane %v499, 5
        %v756 = vsel %vm743, %v754, %v755
        %v757 = vrot.slane %v755, 4
        %v758 = vrot.slane %v500, 5
        %v759 = vsel %vm743, %v757, %v758
        %v760 = vrot.slane %v758, 4
        %v761 = vrot.slane %v501, 5
        %v762 = vsel %vm743, %v760, %v761
        %v763 = vrot.slane %v761, 4
        %v764 = vrot.slane %v502, 5
        %v765 = vsel %vm743, %v763, %v764
        %v766 = vrot.slane %v764, 4
        %v767 = vrot.slane %v503, 5
        %v768 = vsel %vm743, %v766, %v767
        %v769 = vrot.slane %v767, 4
        %v770 = vrot.slane %v504, 5
        %v771 = vsel %vm743, %v769, %v770
        %v772 = vrot.slane %v770, 4
        %v773 = vrot.slane %v505, 5
        %v774 = vsel %vm743, %v772, %v773
        %v775 = vrot.slane %v773, 4
        %v776 = vrot.slane %v506, 5
        %v777 = vsel %vm743, %v775, %v776
        %v778 = vrot.slane %v776, 4
        %v779 = vrot.slane %v507, 5
        %v780 = vsel %vm743, %v778, %v779
        %v781 = vrot.slane %v779, 4
        %v782 = vrot.slane %v508, 5
        %v783 = vsel %vm743, %v781, %v782
        %v784 = vrot.slane %v782, 4
        %v785 = vrot.slane %v509, 5
        %v786 = vsel %vm743, %v784, %v785
        %v787 = vrot.slane %v785, 4
        %v788 = vrot.slane %v510, 5
        %v789 = vsel %vm743, %v787, %v788
        %v790 = vrot.slane %v788, 4
        %807 = vst [vmem:[#allocation2 + $0x8] sm:$0xf] %v747
        %808 = vst [vmem:[#allocation2 + $0x1c] sm:$0xf] %v750
        %809 = vst [vmem:[#allocation2 + $0x30] sm:$0xf] %v753
        %810 = vst [vmem:[#allocation2 + $0x44] sm:$0xf] %v756
        %811 = vst [vmem:[#allocation2 + $0x58] sm:$0xf] %v759
        %812 = vst [vmem:[#allocation2 + $0x6c] sm:$0xf] %v762
        %813 = vst [vmem:[#allocation2 + $0x80] sm:$0xf] %v765
        %814 = vst [vmem:[#allocation2 + $0x94] sm:$0xf] %v768
        %815 = vst [vmem:[#allocation2 + $0xa8] sm:$0xf] %v771
        %816 = vst [vmem:[#allocation2 + $0xbc] sm:$0xf] %v774
        %817 = vst [vmem:[#allocation2 + $0xd0] sm:$0xf] %v777
        %818 = vst [vmem:[#allocation2 + $0xe4] sm:$0xf] %v780
        %819 = vst [vmem:[#allocation2 + $0xf8] sm:$0xf] %v783
        %820 = vst [vmem:[#allocation2 + $0x10c] sm:$0xf] %v786
        %821 = vst [vmem:[#allocation2 + $0x120] sm:$0xf] %v789
        %822 = vst [vmem:[#allocation2 + $0x134] sm:$0x7] %v790
        %vm823 = vsmask.f32 2304
        %vm824 = vsmask.f32 6416
        %vm825 = vmor %vm823, %vm824
        %v826 = vrot.slane %v531, 5
        %v827 = vrot.slane %v534, 6
        %v828 = vor.u32 %v826, %v827
        %v829 = vrot.slane %v828, 4
        %v830 = vrot.slane %v544, 5
        %v831 = vrot.slane %v540, 6
        %v832 = vor.u32 %v830, %v831
        %v833 = vsel %vm825, %v829, %v832
        %v834 = vrot.slane %v832, 4
        %v835 = vrot.slane %v554, 5
        %v836 = vrot.slane %v550, 6
        %v837 = vor.u32 %v835, %v836
        %v838 = vsel %vm825, %v834, %v837
        %v839 = vrot.slane %v837, 4
        %v840 = vrot.slane %v564, 5
        %v841 = vrot.slane %v560, 6
        %v842 = vor.u32 %v840, %v841
        %v843 = vsel %vm825, %v839, %v842
        %v844 = vrot.slane %v842, 4
        %v845 = vrot.slane %v574, 5
        %v846 = vrot.slane %v570, 6
        %v847 = vor.u32 %v845, %v846
        %v848 = vsel %vm825, %v844, %v847
        %v849 = vrot.slane %v847, 4
        %v850 = vrot.slane %v584, 5
        %v851 = vrot.slane %v580, 6
        %v852 = vor.u32 %v850, %v851
        %v853 = vsel %vm825, %v849, %v852
        %v854 = vrot.slane %v852, 4
        %v855 = vrot.slane %v594, 5
        %v856 = vrot.slane %v590, 6
        %v857 = vor.u32 %v855, %v856
        %v858 = vsel %vm825, %v854, %v857
        %v859 = vrot.slane %v857, 4
        %v860 = vrot.slane %v604, 5
        %v861 = vrot.slane %v600, 6
        %v862 = vor.u32 %v860, %v861
        %v863 = vsel %vm825, %v859, %v862
        %v864 = vrot.slane %v862, 4
        %v865 = vrot.slane %v614, 5
        %v866 = vrot.slane %v610, 6
        %v867 = vor.u32 %v865, %v866
        %v868 = vsel %vm825, %v864, %v867
        %v869 = vrot.slane %v867, 4
        %v870 = vrot.slane %v624, 5
        %v871 = vrot.slane %v620, 6
        %v872 = vor.u32 %v870, %v871
        %v873 = vsel %vm825, %v869, %v872
        %v874 = vrot.slane %v872, 4
        %v875 = vrot.slane %v634, 5
        %v876 = vrot.slane %v630, 6
        %v877 = vor.u32 %v875, %v876
        %v878 = vsel %vm825, %v874, %v877
        %v879 = vrot.slane %v877, 4
        %v880 = vrot.slane %v644, 5
        %v881 = vrot.slane %v640, 6
        %v882 = vor.u32 %v880, %v881
        %v883 = vsel %vm825, %v879, %v882
        %v884 = vrot.slane %v882, 4
        %v885 = vrot.slane %v654, 5
        %v886 = vrot.slane %v650, 6
        %v887 = vor.u32 %v885, %v886
        %v888 = vsel %vm825, %v884, %v887
        %v889 = vrot.slane %v887, 4
        %v890 = vrot.slane %v664, 5
        %v891 = vrot.slane %v660, 6
        %v892 = vor.u32 %v890, %v891
        %v893 = vsel %vm825, %v889, %v892
        %v894 = vrot.slane %v892, 4
        %v895 = vrot.slane %v674, 5
        %v896 = vrot.slane %v670, 6
        %v897 = vor.u32 %v895, %v896
        %v898 = vsel %vm825, %v894, %v897
        %v899 = vrot.slane %v897, 4
        %v900 = vrot.slane %v684, 5
        %v901 = vrot.slane %v680, 6
        %v902 = vor.u32 %v900, %v901
        %v903 = vsel %vm825, %v899, %v902
        %v904 = vrot.slane %v902, 4
        %921 = vst [vmem:[#allocation2 + $0xc] sm:$0xf] %v833
        %922 = vst [vmem:[#allocation2 + $0x20] sm:$0xf] %v838
        %923 = vst [vmem:[#allocation2 + $0x34] sm:$0xf] %v843
        %924 = vst [vmem:[#allocation2 + $0x48] sm:$0xf] %v848
        %925 = vst [vmem:[#allocation2 + $0x5c] sm:$0xf] %v853
        %926 = vst [vmem:[#allocation2 + $0x70] sm:$0xf] %v858
        %927 = vst [vmem:[#allocation2 + $0x84] sm:$0xf] %v863
        %928 = vst [vmem:[#allocation2 + $0x98] sm:$0xf] %v868
        %929 = vst [vmem:[#allocation2 + $0xac] sm:$0xf] %v873
        %930 = vst [vmem:[#allocation2 + $0xc0] sm:$0xf] %v878
        %931 = vst [vmem:[#allocation2 + $0xd4] sm:$0xf] %v883
        %932 = vst [vmem:[#allocation2 + $0xe8] sm:$0xf] %v888
        %933 = vst [vmem:[#allocation2 + $0xfc] sm:$0xf] %v893
        %934 = vst [vmem:[#allocation2 + $0x110] sm:$0xf] %v898
        %935 = vst [vmem:[#allocation2 + $0x124] sm:$0xf] %v903
        %vm936 = vmand %vm741, %vm823
        %v937 = vld [vmem:[#allocation2 + $0x138] sm:$0x7]
        %v938 = vsel %vm936, %v904, %v937
        %939 = vst [vmem:[#allocation2 + $0x138] sm:$0x7] %v938
        %vm940 = vcmask 1041408
        %vm941 = vcmask 1045508
        %vm942 = vmor %vm940, %vm941
        %v943 = vrot.slane %v495, 6
        %v944 = vrot.slane %v943, 4
        %v945 = vrot.slane %v496, 6
        %v946 = vsel %vm942, %v944, %v945
        %v947 = vrot.slane %v945, 4
        %v948 = vrot.slane %v497, 6
        %v949 = vsel %vm942, %v947, %v948
        %v950 = vrot.slane %v948, 4
        %v951 = vrot.slane %v498, 6
        %v952 = vsel %vm942, %v950, %v951
        %v953 = vrot.slane %v951, 4
        %v954 = vrot.slane %v499, 6
        %v955 = vsel %vm942, %v953, %v954
        %v956 = vrot.slane %v954, 4
        %v957 = vrot.slane %v500, 6
        %v958 = vsel %vm942, %v956, %v957
        %v959 = vrot.slane %v957, 4
        %v960 = vrot.slane %v501, 6
        %v961 = vsel %vm942, %v959, %v960
        %v962 = vrot.slane %v960, 4
        %v963 = vrot.slane %v502, 6
        %v964 = vsel %vm942, %v962, %v963
        %v965 = vrot.slane %v963, 4
        %v966 = vrot.slane %v503, 6
        %v967 = vsel %vm942, %v965, %v966
        %v968 = vrot.slane %v966, 4
        %v969 = vrot.slane %v504, 6
        %v970 = vsel %vm942, %v968, %v969
        %v971 = vrot.slane %v969, 4
        %v972 = vrot.slane %v505, 6
        %v973 = vsel %vm942, %v971, %v972
        %v974 = vrot.slane %v972, 4
        %v975 = vrot.slane %v506, 6
        %v976 = vsel %vm942, %v974, %v975
        %v977 = vrot.slane %v975, 4
        %v978 = vrot.slane %v507, 6
        %v979 = vsel %vm942, %v977, %v978
        %v980 = vrot.slane %v978, 4
        %v981 = vrot.slane %v508, 6
        %v982 = vsel %vm942, %v980, %v981
        %v983 = vrot.slane %v981, 4
        %v984 = vrot.slane %v509, 6
        %v985 = vsel %vm942, %v983, %v984
        %v986 = vrot.slane %v984, 4
        %v987 = vrot.slane %v510, 6
        %v988 = vsel %vm942, %v986, %v987
        %v989 = vrot.slane %v987, 4
        %1006 = vst [vmem:[#allocation2 + $0x10] sm:$0xf] %v946
        %1007 = vst [vmem:[#allocation2 + $0x24] sm:$0xf] %v949
        %1008 = vst [vmem:[#allocation2 + $0x38] sm:$0xf] %v952
        %1009 = vst [vmem:[#allocation2 + $0x4c] sm:$0xf] %v955
        %1010 = vst [vmem:[#allocation2 + $0x60] sm:$0xf] %v958
        %1011 = vst [vmem:[#allocation2 + $0x74] sm:$0xf] %v961
        %1012 = vst [vmem:[#allocation2 + $0x88] sm:$0xf] %v964
        %1013 = vst [vmem:[#allocation2 + $0x9c] sm:$0xf] %v967
        %1014 = vst [vmem:[#allocation2 + $0xb0] sm:$0xf] %v970
        %1015 = vst [vmem:[#allocation2 + $0xc4] sm:$0xf] %v973
        %1016 = vst [vmem:[#allocation2 + $0xd8] sm:$0xf] %v976
        %1017 = vst [vmem:[#allocation2 + $0xec] sm:$0xf] %v979
        %1018 = vst [vmem:[#allocation2 + $0x100] sm:$0xf] %v982
        %1019 = vst [vmem:[#allocation2 + $0x114] sm:$0xf] %v985
        %1020 = vst [vmem:[#allocation2 + $0x128] sm:$0xf] %v988
        %1021 = vst [vmem:[#allocation2 + $0x13c] sm:$0x3] %v989
        %v1022 = vld [vmem:[%s304 + $0x40] sm:$0xf]
        %v1023 = vld [vmem:[%s304 + $0x44] sm:$0xf]
        %v1024 = vld [vmem:[%s304 + $0x48] sm:$0xf]
        %v1025 = vld [vmem:[%s304 + $0x4c] sm:$0xf]
        %v1026 = vld [vmem:[%s304 + $0x50] sm:$0xf]
        %v1027 = vld [vmem:[%s304 + $0x54] sm:$0xf]
        %v1028 = vld [vmem:[%s304 + $0x58] sm:$0xf]
        %v1029 = vld [vmem:[%s304 + $0x5c] sm:$0xf]
        %v1030 = vld [vmem:[%s304 + $0x60] sm:$0xf]
        %v1031 = vld [vmem:[%s304 + $0x64] sm:$0xf]
        %v1032 = vld [vmem:[%s304 + $0x68] sm:$0xf]
        %v1033 = vld [vmem:[%s304 + $0x6c] sm:$0xf]
        %v1034 = vld [vmem:[%s304 + $0x70] sm:$0xf]
        %v1035 = vld [vmem:[%s304 + $0x74] sm:$0xf]
        %v1036 = vld [vmem:[%s304 + $0x78] sm:$0xf]
        %v1037 = vld [vmem:[%s304 + $0x7c] sm:$0xf]
        %v1054 = vunpack.c.l.b16 %v1022
        %v1055 = vunpack.c.l.b16 %v1023
        %v1056 = vunpack.c.l.b16 %v1024
        %v1057 = vunpack.c.l.b16 %v1025
        %v1058 = vunpack.c.l.b16 %v1026
        %v1059 = vunpack.c.l.b16 %v1027
        %v1060 = vunpack.c.l.b16 %v1028
        %v1061 = vunpack.c.l.b16 %v1029
        %v1062 = vunpack.c.l.b16 %v1030
        %v1063 = vunpack.c.l.b16 %v1031
        %v1064 = vunpack.c.l.b16 %v1032
        %v1065 = vunpack.c.l.b16 %v1033
        %v1066 = vunpack.c.l.b16 %v1034
        %v1067 = vunpack.c.l.b16 %v1035
        %v1068 = vunpack.c.l.b16 %v1036
        %v1069 = vunpack.c.l.b16 %v1037
        %v1070 = vpack.c.b16 %v1055, %v1054
        %v1071 = vpack.c.b16 %v1057, %v1056
        %v1072 = vpack.c.b16 %v1059, %v1058
        %v1073 = vpack.c.b16 %v1061, %v1060
        %v1074 = vpack.c.b16 %v1063, %v1062
        %v1075 = vpack.c.b16 %v1065, %v1064
        %v1076 = vpack.c.b16 %v1067, %v1066
        %v1077 = vpack.c.b16 %v1069, %v1068
        %v1079 = vsel %vm405, %v1070, 0
        %v1082 = vsel %vm405, %v1071, 0
        %v1085 = vsel %vm405, %v1072, 0
        %v1088 = vsel %vm405, %v1073, 0
        %v1091 = vsel %vm405, %v1074, 0
        %v1094 = vsel %vm405, %v1075, 0
        %v1097 = vsel %vm405, %v1076, 0
        %v1100 = vsel %vm405, %v1077, 0
        %1102 = vmatpush.bf16.msra.mxu0 0
        %1103 = vmatpush.bf16.msra.mxu0 0
        %1104 = vmatpush.bf16.msra.mxu0 0
        %1105 = vmatpush.bf16.msra.mxu0 0
        %1106 = vmatpush.bf16.msra.mxu0 %v400
        %1107 = vmatpush.bf16.msra.mxu0 %v399
        %1108 = vmatpush.bf16.msra.mxu0 %v398
        %1109 = vmatpush.bf16.msra.mxu0 %v397
        %1110 = vmatmul.bf16.gmra.mxu0 %v1079
        %v1111 = vpop.f32.mrf.mxu0
        %v1112 = vadd.f32 %v339, %v1111
        %v1113 = vpop.f32.mrf.mxu0
        %v1114 = vadd.f32 %v339, %v1113
        %1115 = vmatmul.bf16.gmra.mxu0 %v1082
        %v1116 = vpop.f32.mrf.mxu0
        %v1117 = vadd.f32 %v339, %v1116
        %v1118 = vpop.f32.mrf.mxu0
        %v1119 = vadd.f32 %v339, %v1118
        %1120 = vmatmul.bf16.gmra.mxu0 %v1085
        %v1121 = vpop.f32.mrf.mxu0
        %v1122 = vadd.f32 %v339, %v1121
        %v1123 = vpop.f32.mrf.mxu0
        %v1124 = vadd.f32 %v339, %v1123
        %1125 = vmatmul.bf16.gmra.mxu0 %v1088
        %v1126 = vpop.f32.mrf.mxu0
        %v1127 = vadd.f32 %v339, %v1126
        %v1128 = vpop.f32.mrf.mxu0
        %v1129 = vadd.f32 %v339, %v1128
        %1130 = vmatmul.bf16.gmra.mxu0 %v1091
        %v1131 = vpop.f32.mrf.mxu0
        %v1132 = vadd.f32 %v339, %v1131
        %v1133 = vpop.f32.mrf.mxu0
        %v1134 = vadd.f32 %v339, %v1133
        %1135 = vmatmul.bf16.gmra.mxu0 %v1094
        %v1136 = vpop.f32.mrf.mxu0
        %v1137 = vadd.f32 %v339, %v1136
        %v1138 = vpop.f32.mrf.mxu0
        %v1139 = vadd.f32 %v339, %v1138
        %1140 = vmatmul.bf16.gmra.mxu0 %v1097
        %v1141 = vpop.f32.mrf.mxu0
        %v1142 = vadd.f32 %v339, %v1141
        %v1143 = vpop.f32.mrf.mxu0
        %v1144 = vadd.f32 %v339, %v1143
        %1145 = vmatmul.bf16.gmra.mxu0 %v1100
        %v1146 = vpop.f32.mrf.mxu0
        %v1147 = vadd.f32 %v339, %v1146
        %v1148 = vpop.f32.mrf.mxu0
        %v1149 = vadd.f32 %v339, %v1148
        %1150 = vdwg.mxu0
        %v1151 = vmax.f32 %v1112, 0.0
        %v1152 = vmax.f32 %v1114, 0.0
        %v1153 = vmax.f32 %v1117, 0.0
        %v1154 = vmax.f32 %v1119, 0.0
        %v1155 = vmax.f32 %v1122, 0.0
        %v1156 = vmax.f32 %v1124, 0.0
        %v1157 = vmax.f32 %v1127, 0.0
        %v1158 = vmax.f32 %v1129, 0.0
        %v1159 = vmax.f32 %v1132, 0.0
        %v1160 = vmax.f32 %v1134, 0.0
        %v1161 = vmax.f32 %v1137, 0.0
        %v1162 = vmax.f32 %v1139, 0.0
        %v1163 = vmax.f32 %v1142, 0.0
        %v1164 = vmax.f32 %v1144, 0.0
        %v1165 = vmax.f32 %v1147, 0.0
        %v1166 = vmax.f32 %v1149, 0.0
        %v1167 = vpack.c.bf16 %v1151, %v1151
        %v1168 = vpack.c.bf16 %v1152, %v1152
        %v1169 = vpack.c.bf16 %v1153, %v1153
        %v1170 = vpack.c.bf16 %v1154, %v1154
        %v1171 = vpack.c.bf16 %v1155, %v1155
        %v1172 = vpack.c.bf16 %v1156, %v1156
        %v1173 = vpack.c.bf16 %v1157, %v1157
        %v1174 = vpack.c.bf16 %v1158, %v1158
        %v1175 = vpack.c.bf16 %v1159, %v1159
        %v1176 = vpack.c.bf16 %v1160, %v1160
        %v1177 = vpack.c.bf16 %v1161, %v1161
        %v1178 = vpack.c.bf16 %v1162, %v1162
        %v1179 = vpack.c.bf16 %v1163, %v1163
        %v1180 = vpack.c.bf16 %v1164, %v1164
        %v1181 = vpack.c.bf16 %v1165, %v1165
        %v1182 = vpack.c.bf16 %v1166, %v1166
        %1183 = vst [vmem:[#allocation2 + $0x140] sm:$0xf] %v1167
        %1184 = vst [vmem:[#allocation2 + $0x154] sm:$0xf] %v1168
        %1185 = vst [vmem:[#allocation2 + $0x168] sm:$0xf] %v1169
        %1186 = vst [vmem:[#allocation2 + $0x17c] sm:$0xf] %v1170
        %1187 = vst [vmem:[#allocation2 + $0x190] sm:$0xf] %v1171
        %1188 = vst [vmem:[#allocation2 + $0x1a4] sm:$0xf] %v1172
        %1189 = vst [vmem:[#allocation2 + $0x1b8] sm:$0xf] %v1173
        %1190 = vst [vmem:[#allocation2 + $0x1cc] sm:$0xf] %v1174
        %1191 = vst [vmem:[#allocation2 + $0x1e0] sm:$0xf] %v1175
        %1192 = vst [vmem:[#allocation2 + $0x1f4] sm:$0xf] %v1176
        %1193 = vst [vmem:[#allocation2 + $0x208] sm:$0xf] %v1177
        %1194 = vst [vmem:[#allocation2 + $0x21c] sm:$0xf] %v1178
        %1195 = vst [vmem:[#allocation2 + $0x230] sm:$0xf] %v1179
        %1196 = vst [vmem:[#allocation2 + $0x244] sm:$0xf] %v1180
        %1197 = vst [vmem:[#allocation2 + $0x258] sm:$0xf] %v1181
        %1198 = vst [vmem:[#allocation2 + $0x26c] sm:$0xf] %v1182
        %v1200 = vshll.u32 %v1167, 16
        %v1202 = vrot.slane %v1200, 5
        %v1203 = vshrl.u32 %v1167, 16
        %v1205 = vrot.slane %v1203, 4
        %v1206 = vor.u32 %v1205, %v1202
        %v1207 = vrot.slane %v1206, 4
        %v1209 = vshll.u32 %v1168, 16
        %v1211 = vrot.slane %v1209, 5
        %v1212 = vsel %vm529, %v1207, %v1211
        %v1213 = vshrl.u32 %v1168, 16
        %v1215 = vrot.slane %v1213, 4
        %v1216 = vor.u32 %v1215, %v1211
        %v1217 = vrot.slane %v1216, 4
        %v1219 = vshll.u32 %v1169, 16
        %v1221 = vrot.slane %v1219, 5
        %v1222 = vsel %vm529, %v1217, %v1221
        %v1223 = vshrl.u32 %v1169, 16
        %v1225 = vrot.slane %v1223, 4
        %v1226 = vor.u32 %v1225, %v1221
        %v1227 = vrot.slane %v1226, 4
        %v1229 = vshll.u32 %v1170, 16
        %v1231 = vrot.slane %v1229, 5
        %v1232 = vsel %vm529, %v1227, %v1231
        %v1233 = vshrl.u32 %v1170, 16
        %v1235 = vrot.slane %v1233, 4
        %v1236 = vor.u32 %v1235, %v1231
        %v1237 = vrot.slane %v1236, 4
        %v1239 = vshll.u32 %v1171, 16
        %v1241 = vrot.slane %v1239, 5
        %v1242 = vsel %vm529, %v1237, %v1241
        %v1243 = vshrl.u32 %v1171, 16
        %v1245 = vrot.slane %v1243, 4
        %v1246 = vor.u32 %v1245, %v1241
        %v1247 = vrot.slane %v1246, 4
        %v1249 = vshll.u32 %v1172, 16
        %v1251 = vrot.slane %v1249, 5
        %v1252 = vsel %vm529, %v1247, %v1251
        %v1253 = vshrl.u32 %v1172, 16
        %v1255 = vrot.slane %v1253, 4
        %v1256 = vor.u32 %v1255, %v1251
        %v1257 = vrot.slane %v1256, 4
        %v1259 = vshll.u32 %v1173, 16
        %v1261 = vrot.slane %v1259, 5
        %v1262 = vsel %vm529, %v1257, %v1261
        %v1263 = vshrl.u32 %v1173, 16
        %v1265 = vrot.slane %v1263, 4
        %v1266 = vor.u32 %v1265, %v1261
        %v1267 = vrot.slane %v1266, 4
        %v1269 = vshll.u32 %v1174, 16
        %v1271 = vrot.slane %v1269, 5
        %v1272 = vsel %vm529, %v1267, %v1271
        %v1273 = vshrl.u32 %v1174, 16
        %v1275 = vrot.slane %v1273, 4
        %v1276 = vor.u32 %v1275, %v1271
        %v1277 = vrot.slane %v1276, 4
        %v1279 = vshll.u32 %v1175, 16
        %v1281 = vrot.slane %v1279, 5
        %v1282 = vsel %vm529, %v1277, %v1281
        %v1283 = vshrl.u32 %v1175, 16
        %v1285 = vrot.slane %v1283, 4
        %v1286 = vor.u32 %v1285, %v1281
        %v1287 = vrot.slane %v1286, 4
        %v1289 = vshll.u32 %v1176, 16
        %v1291 = vrot.slane %v1289, 5
        %v1292 = vsel %vm529, %v1287, %v1291
        %v1293 = vshrl.u32 %v1176, 16
        %v1295 = vrot.slane %v1293, 4
        %v1296 = vor.u32 %v1295, %v1291
        %v1297 = vrot.slane %v1296, 4
        %v1299 = vshll.u32 %v1177, 16
        %v1301 = vrot.slane %v1299, 5
        %v1302 = vsel %vm529, %v1297, %v1301
        %v1303 = vshrl.u32 %v1177, 16
        %v1305 = vrot.slane %v1303, 4
        %v1306 = vor.u32 %v1305, %v1301
        %v1307 = vrot.slane %v1306, 4
        %v1309 = vshll.u32 %v1178, 16
        %v1311 = vrot.slane %v1309, 5
        %v1312 = vsel %vm529, %v1307, %v1311
        %v1313 = vshrl.u32 %v1178, 16
        %v1315 = vrot.slane %v1313, 4
        %v1316 = vor.u32 %v1315, %v1311
        %v1317 = vrot.slane %v1316, 4
        %v1319 = vshll.u32 %v1179, 16
        %v1321 = vrot.slane %v1319, 5
        %v1322 = vsel %vm529, %v1317, %v1321
        %v1323 = vshrl.u32 %v1179, 16
        %v1325 = vrot.slane %v1323, 4
        %v1326 = vor.u32 %v1325, %v1321
        %v1327 = vrot.slane %v1326, 4
        %v1329 = vshll.u32 %v1180, 16
        %v1331 = vrot.slane %v1329, 5
        %v1332 = vsel %vm529, %v1327, %v1331
        %v1333 = vshrl.u32 %v1180, 16
        %v1335 = vrot.slane %v1333, 4
        %v1336 = vor.u32 %v1335, %v1331
        %v1337 = vrot.slane %v1336, 4
        %v1339 = vshll.u32 %v1181, 16
        %v1341 = vrot.slane %v1339, 5
        %v1342 = vsel %vm529, %v1337, %v1341
        %v1343 = vshrl.u32 %v1181, 16
        %v1345 = vrot.slane %v1343, 4
        %v1346 = vor.u32 %v1345, %v1341
        %v1347 = vrot.slane %v1346, 4
        %v1349 = vshll.u32 %v1182, 16
        %v1351 = vrot.slane %v1349, 5
        %v1352 = vsel %vm529, %v1347, %v1351
        %v1353 = vshrl.u32 %v1182, 16
        %v1355 = vrot.slane %v1353, 4
        %v1356 = vor.u32 %v1355, %v1351
        %v1357 = vrot.slane %v1356, 4
        %vm1375 = vcmask 1043459
        %vm1376 = vsmask.f32 7950
        %vm1377 = vmand %vm1375, %vm1376
        %v1378 = vld [vmem:[#allocation2 + $0x130] sm:$0x8]
        %v1379 = vsel %vm1377, %v1202, %v1378
        %1380 = vst [vmem:[#allocation2 + $0x130] sm:$0x8] %v1379
        %1381 = vst [vmem:[#allocation2 + $0x144] sm:$0xf] %v1212
        %1382 = vst [vmem:[#allocation2 + $0x158] sm:$0xf] %v1222
        %1383 = vst [vmem:[#allocation2 + $0x16c] sm:$0xf] %v1232
        %1384 = vst [vmem:[#allocation2 + $0x180] sm:$0xf] %v1242
        %1385 = vst [vmem:[#allocation2 + $0x194] sm:$0xf] %v1252
        %1386 = vst [vmem:[#allocation2 + $0x1a8] sm:$0xf] %v1262
        %1387 = vst [vmem:[#allocation2 + $0x1bc] sm:$0xf] %v1272
        %1388 = vst [vmem:[#allocation2 + $0x1d0] sm:$0xf] %v1282
        %1389 = vst [vmem:[#allocation2 + $0x1e4] sm:$0xf] %v1292
        %1390 = vst [vmem:[#allocation2 + $0x1f8] sm:$0xf] %v1302
        %1391 = vst [vmem:[#allocation2 + $0x20c] sm:$0xf] %v1312
        %1392 = vst [vmem:[#allocation2 + $0x220] sm:$0xf] %v1322
        %1393 = vst [vmem:[#allocation2 + $0x234] sm:$0xf] %v1332
        %1394 = vst [vmem:[#allocation2 + $0x248] sm:$0xf] %v1342
        %1395 = vst [vmem:[#allocation2 + $0x25c] sm:$0xf] %v1352
        %v1396 = vld [vmem:[#allocation2 + $0x270] sm:$0xf]
        %v1397 = vsel %vm721, %v1357, %v1396
        %1398 = vst [vmem:[#allocation2 + $0x270] sm:$0xf] %v1397
        %v1415 = vrot.slane %v1167, 5
        %v1416 = vrot.slane %v1415, 4
        %v1417 = vrot.slane %v1168, 5
        %v1418 = vsel %vm743, %v1416, %v1417
        %v1419 = vrot.slane %v1417, 4
        %v1420 = vrot.slane %v1169, 5
        %v1421 = vsel %vm743, %v1419, %v1420
        %v1422 = vrot.slane %v1420, 4
        %v1423 = vrot.slane %v1170, 5
        %v1424 = vsel %vm743, %v1422, %v1423
        %v1425 = vrot.slane %v1423, 4
        %v1426 = vrot.slane %v1171, 5
        %v1427 = vsel %vm743, %v1425, %v1426
        %v1428 = vrot.slane %v1426, 4
        %v1429 = vrot.slane %v1172, 5
        %v1430 = vsel %vm743, %v1428, %v1429
        %v1431 = vrot.slane %v1429, 4
        %v1432 = vrot.slane %v1173, 5
        %v1433 = vsel %vm743, %v1431, %v1432
        %v1434 = vrot.slane %v1432, 4
        %v1435 = vrot.slane %v1174, 5
        %v1436 = vsel %vm743, %v1434, %v1435
        %v1437 = vrot.slane %v1435, 4
        %v1438 = vrot.slane %v1175, 5
        %v1439 = vsel %vm743, %v1437, %v1438
        %v1440 = vrot.slane %v1438, 4
        %v1441 = vrot.slane %v1176, 5
        %v1442 = vsel %vm743, %v1440, %v1441
        %v1443 = vrot.slane %v1441, 4
        %v1444 = vrot.slane %v1177, 5
        %v1445 = vsel %vm743, %v1443, %v1444
        %v1446 = vrot.slane %v1444, 4
        %v1447 = vrot.slane %v1178, 5
        %v1448 = vsel %vm743, %v1446, %v1447
        %v1449 = vrot.slane %v1447, 4
        %v1450 = vrot.slane %v1179, 5
        %v1451 = vsel %vm743, %v1449, %v1450
        %v1452 = vrot.slane %v1450, 4
        %v1453 = vrot.slane %v1180, 5
        %v1454 = vsel %vm743, %v1452, %v1453
        %v1455 = vrot.slane %v1453, 4
        %v1456 = vrot.slane %v1181, 5
        %v1457 = vsel %vm743, %v1455, %v1456
        %v1458 = vrot.slane %v1456, 4
        %v1459 = vrot.slane %v1182, 5
        %v1460 = vsel %vm743, %v1458, %v1459
        %v1461 = vrot.slane %v1459, 4
        %1479 = vst [vmem:[#allocation2 + $0x134] sm:$0x8] %v1415
        %1480 = vst [vmem:[#allocation2 + $0x148] sm:$0xf] %v1418
        %1481 = vst [vmem:[#allocation2 + $0x15c] sm:$0xf] %v1421
        %1482 = vst [vmem:[#allocation2 + $0x170] sm:$0xf] %v1424
        %1483 = vst [vmem:[#allocation2 + $0x184] sm:$0xf] %v1427
        %1484 = vst [vmem:[#allocation2 + $0x198] sm:$0xf] %v1430
        %1485 = vst [vmem:[#allocation2 + $0x1ac] sm:$0xf] %v1433
        %1486 = vst [vmem:[#allocation2 + $0x1c0] sm:$0xf] %v1436
        %1487 = vst [vmem:[#allocation2 + $0x1d4] sm:$0xf] %v1439
        %1488 = vst [vmem:[#allocation2 + $0x1e8] sm:$0xf] %v1442
        %1489 = vst [vmem:[#allocation2 + $0x1fc] sm:$0xf] %v1445
        %1490 = vst [vmem:[#allocation2 + $0x210] sm:$0xf] %v1448
        %1491 = vst [vmem:[#allocation2 + $0x224] sm:$0xf] %v1451
        %1492 = vst [vmem:[#allocation2 + $0x238] sm:$0xf] %v1454
        %1493 = vst [vmem:[#allocation2 + $0x24c] sm:$0xf] %v1457
        %1494 = vst [vmem:[#allocation2 + $0x260] sm:$0xf] %v1460
        %1495 = vst [vmem:[#allocation2 + $0x274] sm:$0x7] %v1461
        %v1496 = vrot.slane %v1203, 5
        %v1497 = vrot.slane %v1200, 6
        %v1498 = vor.u32 %v1496, %v1497
        %v1499 = vrot.slane %v1498, 4
        %v1500 = vrot.slane %v1213, 5
        %v1501 = vrot.slane %v1209, 6
        %v1502 = vor.u32 %v1500, %v1501
        %v1503 = vsel %vm825, %v1499, %v1502
        %v1504 = vrot.slane %v1502, 4
        %v1505 = vrot.slane %v1223, 5
        %v1506 = vrot.slane %v1219, 6
        %v1507 = vor.u32 %v1505, %v1506
        %v1508 = vsel %vm825, %v1504, %v1507
        %v1509 = vrot.slane %v1507, 4
        %v1510 = vrot.slane %v1233, 5
        %v1511 = vrot.slane %v1229, 6
        %v1512 = vor.u32 %v1510, %v1511
        %v1513 = vsel %vm825, %v1509, %v1512
        %v1514 = vrot.slane %v1512, 4
        %v1515 = vrot.slane %v1243, 5
        %v1516 = vrot.slane %v1239, 6
        %v1517 = vor.u32 %v1515, %v1516
        %v1518 = vsel %vm825, %v1514, %v1517
        %v1519 = vrot.slane %v1517, 4
        %v1520 = vrot.slane %v1253, 5
        %v1521 = vrot.slane %v1249, 6
        %v1522 = vor.u32 %v1520, %v1521
        %v1523 = vsel %vm825, %v1519, %v1522
        %v1524 = vrot.slane %v1522, 4
        %v1525 = vrot.slane %v1263, 5
        %v1526 = vrot.slane %v1259, 6
        %v1527 = vor.u32 %v1525, %v1526
        %v1528 = vsel %vm825, %v1524, %v1527
        %v1529 = vrot.slane %v1527, 4
        %v1530 = vrot.slane %v1273, 5
        %v1531 = vrot.slane %v1269, 6
        %v1532 = vor.u32 %v1530, %v1531
        %v1533 = vsel %vm825, %v1529, %v1532
        %v1534 = vrot.slane %v1532, 4
        %v1535 = vrot.slane %v1283, 5
        %v1536 = vrot.slane %v1279, 6
        %v1537 = vor.u32 %v1535, %v1536
        %v1538 = vsel %vm825, %v1534, %v1537
        %v1539 = vrot.slane %v1537, 4
        %v1540 = vrot.slane %v1293, 5
        %v1541 = vrot.slane %v1289, 6
        %v1542 = vor.u32 %v1540, %v1541
        %v1543 = vsel %vm825, %v1539, %v1542
        %v1544 = vrot.slane %v1542, 4
        %v1545 = vrot.slane %v1303, 5
        %v1546 = vrot.slane %v1299, 6
        %v1547 = vor.u32 %v1545, %v1546
        %v1548 = vsel %vm825, %v1544, %v1547
        %v1549 = vrot.slane %v1547, 4
        %v1550 = vrot.slane %v1313, 5
        %v1551 = vrot.slane %v1309, 6
        %v1552 = vor.u32 %v1550, %v1551
        %v1553 = vsel %vm825, %v1549, %v1552
        %v1554 = vrot.slane %v1552, 4
        %v1555 = vrot.slane %v1323, 5
        %v1556 = vrot.slane %v1319, 6
        %v1557 = vor.u32 %v1555, %v1556
        %v1558 = vsel %vm825, %v1554, %v1557
        %v1559 = vrot.slane %v1557, 4
        %v1560 = vrot.slane %v1333, 5
        %v1561 = vrot.slane %v1329, 6
        %v1562 = vor.u32 %v1560, %v1561
        %v1563 = vsel %vm825, %v1559, %v1562
        %v1564 = vrot.slane %v1562, 4
        %v1565 = vrot.slane %v1343, 5
        %v1566 = vrot.slane %v1339, 6
        %v1567 = vor.u32 %v1565, %v1566
        %v1568 = vsel %vm825, %v1564, %v1567
        %v1569 = vrot.slane %v1567, 4
        %v1570 = vrot.slane %v1353, 5
        %v1571 = vrot.slane %v1349, 6
        %v1572 = vor.u32 %v1570, %v1571
        %v1573 = vsel %vm825, %v1569, %v1572
        %v1574 = vrot.slane %v1572, 4
        %vm1592 = vcmask 1043458
        %vm1593 = vsmask.f32 7946
        %vm1594 = vmand %vm1592, %vm1593
        %v1595 = vld [vmem:[#allocation2 + $0x138] sm:$0xc]
        %v1596 = vsel %vm1594, %v1498, %v1595
        %1597 = vst [vmem:[#allocation2 + $0x138] sm:$0xc] %v1596
        %1598 = vst [vmem:[#allocation2 + $0x14c] sm:$0xf] %v1503
        %1599 = vst [vmem:[#allocation2 + $0x160] sm:$0xf] %v1508
        %1600 = vst [vmem:[#allocation2 + $0x174] sm:$0xf] %v1513
        %1601 = vst [vmem:[#allocation2 + $0x188] sm:$0xf] %v1518
        %1602 = vst [vmem:[#allocation2 + $0x19c] sm:$0xf] %v1523
        %1603 = vst [vmem:[#allocation2 + $0x1b0] sm:$0xf] %v1528
        %1604 = vst [vmem:[#allocation2 + $0x1c4] sm:$0xf] %v1533
        %1605 = vst [vmem:[#allocation2 + $0x1d8] sm:$0xf] %v1538
        %1606 = vst [vmem:[#allocation2 + $0x1ec] sm:$0xf] %v1543
        %1607 = vst [vmem:[#allocation2 + $0x200] sm:$0xf] %v1548
        %1608 = vst [vmem:[#allocation2 + $0x214] sm:$0xf] %v1553
        %1609 = vst [vmem:[#allocation2 + $0x228] sm:$0xf] %v1558
        %1610 = vst [vmem:[#allocation2 + $0x23c] sm:$0xf] %v1563
        %1611 = vst [vmem:[#allocation2 + $0x250] sm:$0xf] %v1568
        %1612 = vst [vmem:[#allocation2 + $0x264] sm:$0xf] %v1573
        %v1613 = vld [vmem:[#allocation2 + $0x278] sm:$0x7]
        %v1614 = vsel %vm936, %v1574, %v1613
        %1615 = vst [vmem:[#allocation2 + $0x278] sm:$0x7] %v1614
        %v1616 = vrot.slane %v1167, 6
        %v1617 = vrot.slane %v1616, 4
        %v1618 = vrot.slane %v1168, 6
        %v1619 = vsel %vm942, %v1617, %v1618
        %v1620 = vrot.slane %v1618, 4
        %v1621 = vrot.slane %v1169, 6
        %v1622 = vsel %vm942, %v1620, %v1621
        %v1623 = vrot.slane %v1621, 4
        %v1624 = vrot.slane %v1170, 6
        %v1625 = vsel %vm942, %v1623, %v1624
        %v1626 = vrot.slane %v1624, 4
        %v1627 = vrot.slane %v1171, 6
        %v1628 = vsel %vm942, %v1626, %v1627
        %v1629 = vrot.slane %v1627, 4
        %v1630 = vrot.slane %v1172, 6
        %v1631 = vsel %vm942, %v1629, %v1630
        %v1632 = vrot.slane %v1630, 4
        %v1633 = vrot.slane %v1173, 6
        %v1634 = vsel %vm942, %v1632, %v1633
        %v1635 = vrot.slane %v1633, 4
        %v1636 = vrot.slane %v1174, 6
        %v1637 = vsel %vm942, %v1635, %v1636
        %v1638 = vrot.slane %v1636, 4
        %v1639 = vrot.slane %v1175, 6
        %v1640 = vsel %vm942, %v1638, %v1639
        %v1641 = vrot.slane %v1639, 4
        %v1642 = vrot.slane %v1176, 6
        %v1643 = vsel %vm942, %v1641, %v1642
        %v1644 = vrot.slane %v1642, 4
        %v1645 = vrot.slane %v1177, 6
        %v1646 = vsel %vm942, %v1644, %v1645
        %v1647 = vrot.slane %v1645, 4
        %v1648 = vrot.slane %v1178, 6
        %v1649 = vsel %vm942, %v1647, %v1648
        %v1650 = vrot.slane %v1648, 4
        %v1651 = vrot.slane %v1179, 6
        %v1652 = vsel %vm942, %v1650, %v1651
        %v1653 = vrot.slane %v1651, 4
        %v1654 = vrot.slane %v1180, 6
        %v1655 = vsel %vm942, %v1653, %v1654
        %v1656 = vrot.slane %v1654, 4
        %v1657 = vrot.slane %v1181, 6
        %v1658 = vsel %vm942, %v1656, %v1657
        %v1659 = vrot.slane %v1657, 4
        %v1660 = vrot.slane %v1182, 6
        %v1661 = vsel %vm942, %v1659, %v1660
        %v1662 = vrot.slane %v1660, 4
        %1680 = vst [vmem:[#allocation2 + $0x13c] sm:$0xc] %v1616
        %1681 = vst [vmem:[#allocation2 + $0x150] sm:$0xf] %v1619
        %1682 = vst [vmem:[#allocation2 + $0x164] sm:$0xf] %v1622
        %1683 = vst [vmem:[#allocation2 + $0x178] sm:$0xf] %v1625
        %1684 = vst [vmem:[#allocation2 + $0x18c] sm:$0xf] %v1628
        %1685 = vst [vmem:[#allocation2 + $0x1a0] sm:$0xf] %v1631
        %1686 = vst [vmem:[#allocation2 + $0x1b4] sm:$0xf] %v1634
        %1687 = vst [vmem:[#allocation2 + $0x1c8] sm:$0xf] %v1637
        %1688 = vst [vmem:[#allocation2 + $0x1dc] sm:$0xf] %v1640
        %1689 = vst [vmem:[#allocation2 + $0x1f0] sm:$0xf] %v1643
        %1690 = vst [vmem:[#allocation2 + $0x204] sm:$0xf] %v1646
        %1691 = vst [vmem:[#allocation2 + $0x218] sm:$0xf] %v1649
        %1692 = vst [vmem:[#allocation2 + $0x22c] sm:$0xf] %v1652
        %1693 = vst [vmem:[#allocation2 + $0x240] sm:$0xf] %v1655
        %1694 = vst [vmem:[#allocation2 + $0x254] sm:$0xf] %v1658
        %1695 = vst [vmem:[#allocation2 + $0x268] sm:$0xf] %v1661
        %1696 = vst [vmem:[#allocation2 + $0x27c] sm:$0x3] %v1662
        %v1697 = vld [vmem:[%s2] sm:$0xff]
        %v1698 = vld [vmem:[%s2 + $0x8] sm:$0xff]
        %v1699 = vld [vmem:[%s2 + $0x10] sm:$0xff]
        %v1700 = vld [vmem:[%s2 + $0x18] sm:$0xff]
        %v1701 = vld [vmem:[%s2 + $0x20] sm:$0xff]
        %v1702 = vld [vmem:[%s2 + $0x28] sm:$0xff]
        %v1703 = vld [vmem:[%s2 + $0x30] sm:$0xff]
        %v1704 = vld [vmem:[%s2 + $0x38] sm:$0xff]
        %v1705 = vld [vmem:[%s2 + $0x40] sm:$0xff]
        %v1706 = vld [vmem:[%s2 + $0x48] sm:$0xff]
        %v1707 = vld [vmem:[%s2 + $0x50] sm:$0xff]
        %v1708 = vld [vmem:[%s2 + $0x58] sm:$0xff]
        %v1709 = vld [vmem:[%s2 + $0x60] sm:$0xff]
        %v1710 = vld [vmem:[%s2 + $0x68] sm:$0xff]
        %v1711 = vld [vmem:[%s2 + $0x70] sm:$0xff]
        %v1712 = vld [vmem:[%s2 + $0x78] sm:$0xff]
        %v1713 = vld [vmem:[%s2 + $0x80] sm:$0xff]
        %v1714 = vld [vmem:[%s2 + $0x88] sm:$0xff]
        %v1715 = vld [vmem:[%s2 + $0x90] sm:$0xff]
        %v1716 = vld [vmem:[%s2 + $0x98] sm:$0xff]
        %v1717 = vld [vmem:[%s2 + $0xa0] sm:$0xff]
        %v1718 = vld [vmem:[%s2 + $0xa8] sm:$0xff]
        %v1719 = vld [vmem:[%s2 + $0xb0] sm:$0xff]
        %v1720 = vld [vmem:[%s2 + $0xb8] sm:$0xff]
        %v1721 = vld [vmem:[%s2 + $0xc0] sm:$0xff]
        %v1722 = vld [vmem:[%s2 + $0xc8] sm:$0xff]
        %v1723 = vld [vmem:[%s2 + $0xd0] sm:$0xff]
        %v1724 = vld [vmem:[%s2 + $0xd8] sm:$0xff]
        %v1725 = vld [vmem:[%s2 + $0xe0] sm:$0xff]
        %v1726 = vld [vmem:[%s2 + $0xe8] sm:$0xff]
        %v1727 = vld [vmem:[%s2 + $0xf0] sm:$0xff]
        %v1728 = vld [vmem:[%s2 + $0xf8] sm:$0xff]
        %v1729 = vld [vmem:[%s2 + $0x100] sm:$0xff]
        %v1730 = vld [vmem:[%s2 + $0x108] sm:$0xff]
        %v1731 = vld [vmem:[%s2 + $0x110] sm:$0xff]
        %v1732 = vld [vmem:[%s2 + $0x118] sm:$0xff]
        %v1733 = vld [vmem:[%s2 + $0x120] sm:$0xff]
        %v1734 = vld [vmem:[%s2 + $0x128] sm:$0xff]
        %v1735 = vld [vmem:[%s2 + $0x130] sm:$0xff]
        %v1736 = vld [vmem:[%s2 + $0x138] sm:$0xff]
        %v1737 = vld [vmem:[%s2 + $0x140] sm:$0xff]
        %v1738 = vld [vmem:[%s2 + $0x148] sm:$0xff]
        %v1739 = vld [vmem:[%s2 + $0x150] sm:$0xff]
        %v1740 = vld [vmem:[%s2 + $0x158] sm:$0xff]
        %v1741 = vld [vmem:[%s2 + $0x160] sm:$0xff]
        %v1742 = vld [vmem:[%s2 + $0x168] sm:$0xff]
        %v1743 = vld [vmem:[%s2 + $0x170] sm:$0xff]
        %v1744 = vld [vmem:[%s2 + $0x178] sm:$0xff]
        %v1745 = vld [vmem:[%s2 + $0x180] sm:$0xff]
        %v1746 = vld [vmem:[%s2 + $0x188] sm:$0xff]
        %v1747 = vld [vmem:[%s2 + $0x190] sm:$0xff]
        %v1748 = vld [vmem:[%s2 + $0x198] sm:$0xff]
        %v1749 = vld [vmem:[%s2 + $0x1a0] sm:$0xff]
        %v1750 = vld [vmem:[%s2 + $0x1a8] sm:$0xff]
        %v1751 = vld [vmem:[%s2 + $0x1b0] sm:$0xff]
        %v1752 = vld [vmem:[%s2 + $0x1b8] sm:$0xff]
        %v1753 = vld [vmem:[%s2 + $0x1c0] sm:$0xff]
        %v1754 = vld [vmem:[%s2 + $0x1c8] sm:$0xff]
        %v1755 = vld [vmem:[%s2 + $0x1d0] sm:$0xff]
        %v1756 = vld [vmem:[%s2 + $0x1d8] sm:$0xff]
        %v1757 = vld [vmem:[%s2 + $0x1e0] sm:$0xff]
        %v1758 = vld [vmem:[%s2 + $0x1e8] sm:$0xff]
        %v1759 = vld [vmem:[%s2 + $0x1f0] sm:$0xff]
        %v1760 = vld [vmem:[%s2 + $0x1f8] sm:$0xff]
        %v1761 = vld [vmem:[%s2 + $0x200] sm:$0xff]
        %v1762 = vld [vmem:[%s2 + $0x208] sm:$0xff]
        %v1763 = vld [vmem:[%s2 + $0x210] sm:$0xff]
        %v1764 = vld [vmem:[%s2 + $0x218] sm:$0xff]
        %v1765 = vld [vmem:[%s2 + $0x220] sm:$0xff]
        %v1766 = vld [vmem:[%s2 + $0x228] sm:$0xff]
        %v1767 = vld [vmem:[%s2 + $0x230] sm:$0xff]
        %v1768 = vld [vmem:[%s2 + $0x238] sm:$0xff]
        %v1769 = vld [vmem:[%s2 + $0x240] sm:$0xff]
        %v1770 = vld [vmem:[%s2 + $0x248] sm:$0xff]
        %v1771 = vld [vmem:[%s2 + $0x250] sm:$0xff]
        %v1772 = vld [vmem:[%s2 + $0x258] sm:$0xff]
        %v1773 = vld [vmem:[%s2 + $0x260] sm:$0xff]
        %v1774 = vld [vmem:[%s2 + $0x268] sm:$0xff]
        %v1775 = vld [vmem:[%s2 + $0x270] sm:$0xff]
        %v1776 = vld [vmem:[%s2 + $0x278] sm:$0xff]
        %v1777 = vld [vmem:[%s5] sm:$0x3]
        %v1778 = vld [vmem:[#allocation2] sm:$0xff]
        %v1779 = vld [vmem:[#allocation2 + $0x8] sm:$0xff]
        %v1780 = vld [vmem:[#allocation2 + $0x10] sm:$0xf]
        %v1781 = vld [vmem:[#allocation2 + $0x14] sm:$0xff]
        %v1782 = vld [vmem:[#allocation2 + $0x1c] sm:$0xff]
        %v1783 = vld [vmem:[#allocation2 + $0x24] sm:$0xf]
        %v1784 = vld [vmem:[#allocation2 + $0x28] sm:$0xff]
        %v1785 = vld [vmem:[#allocation2 + $0x30] sm:$0xff]
        %v1786 = vld [vmem:[#allocation2 + $0x38] sm:$0xf]
        %v1787 = vld [vmem:[#allocation2 + $0x3c] sm:$0xff]
        %v1788 = vld [vmem:[#allocation2 + $0x44] sm:$0xff]
        %v1789 = vld [vmem:[#allocation2 + $0x4c] sm:$0xf]
        %v1790 = vld [vmem:[#allocation2 + $0x50] sm:$0xff]
        %v1791 = vld [vmem:[#allocation2 + $0x58] sm:$0xff]
        %v1792 = vld [vmem:[#allocation2 + $0x60] sm:$0xf]
        %v1793 = vld [vmem:[#allocation2 + $0x64] sm:$0xff]
        %v1794 = vld [vmem:[#allocation2 + $0x6c] sm:$0xff]
        %v1795 = vld [vmem:[#allocation2 + $0x74] sm:$0xf]
        %v1796 = vld [vmem:[#allocation2 + $0x78] sm:$0xff]
        %v1797 = vld [vmem:[#allocation2 + $0x80] sm:$0xff]
        %v1798 = vld [vmem:[#allocation2 + $0x88] sm:$0xf]
        %v1799 = vld [vmem:[#allocation2 + $0x8c] sm:$0xff]
        %v1800 = vld [vmem:[#allocation2 + $0x94] sm:$0xff]
        %v1801 = vld [vmem:[#allocation2 + $0x9c] sm:$0xf]
        %v1802 = vld [vmem:[#allocation2 + $0xa0] sm:$0xff]
        %v1803 = vld [vmem:[#allocation2 + $0xa8] sm:$0xff]
        %v1804 = vld [vmem:[#allocation2 + $0xb0] sm:$0xf]
        %v1805 = vld [vmem:[#allocation2 + $0xb4] sm:$0xff]
        %v1806 = vld [vmem:[#allocation2 + $0xbc] sm:$0xff]
        %v1807 = vld [vmem:[#allocation2 + $0xc4] sm:$0xf]
        %v1808 = vld [vmem:[#allocation2 + $0xc8] sm:$0xff]
        %v1809 = vld [vmem:[#allocation2 + $0xd0] sm:$0xff]
        %v1810 = vld [vmem:[#allocation2 + $0xd8] sm:$0xf]
        %v1811 = vld [vmem:[#allocation2 + $0xdc] sm:$0xff]
        %v1812 = vld [vmem:[#allocation2 + $0xe4] sm:$0xff]
        %v1813 = vld [vmem:[#allocation2 + $0xec] sm:$0xf]
        %v1814 = vld [vmem:[#allocation2 + $0xf0] sm:$0xff]
        %v1815 = vld [vmem:[#allocation2 + $0xf8] sm:$0xff]
        %v1816 = vld [vmem:[#allocation2 + $0x100] sm:$0xf]
        %v1817 = vld [vmem:[#allocation2 + $0x104] sm:$0xff]
        %v1818 = vld [vmem:[#allocation2 + $0x10c] sm:$0xff]
        %v1819 = vld [vmem:[#allocation2 + $0x114] sm:$0xf]
        %v1820 = vld [vmem:[#allocation2 + $0x118] sm:$0xff]
        %v1821 = vld [vmem:[#allocation2 + $0x120] sm:$0xff]
        %v1822 = vld [vmem:[#allocation2 + $0x128] sm:$0xf]
        %v1823 = vld [vmem:[#allocation2 + $0x12c] sm:$0xff]
        %v1824 = vld [vmem:[#allocation2 + $0x134] sm:$0xff]
        %v1825 = vld [vmem:[#allocation2 + $0x13c] sm:$0xf]
        %v1827 = vperm.slane %v1777, 0
        %v1828 = vperm.slane %v1777, 1
        %v1879 = vunpack.c.l.b16 %v1778
        %v1880 = vunpack.c.h.b16 %v1778
        %v1881 = vunpack.c.l.b16 %v1779
        %v1882 = vunpack.c.h.b16 %v1779
        %v1883 = vunpack.c.l.b16 %v1780
        %v1884 = vunpack.c.l.b16 %v1781
        %v1885 = vunpack.c.h.b16 %v1781
        %v1886 = vunpack.c.l.b16 %v1782
        %v1887 = vunpack.c.h.b16 %v1782
        %v1888 = vunpack.c.l.b16 %v1783
        %v1889 = vunpack.c.l.b16 %v1784
        %v1890 = vunpack.c.h.b16 %v1784
        %v1891 = vunpack.c.l.b16 %v1785
        %v1892 = vunpack.c.h.b16 %v1785
        %v1893 = vunpack.c.l.b16 %v1786
        %v1894 = vunpack.c.l.b16 %v1787
        %v1895 = vunpack.c.h.b16 %v1787
        %v1896 = vunpack.c.l.b16 %v1788
        %v1897 = vunpack.c.h.b16 %v1788
        %v1898 = vunpack.c.l.b16 %v1789
        %v1899 = vunpack.c.l.b16 %v1790
        %v1900 = vunpack.c.h.b16 %v1790
        %v1901 = vunpack.c.l.b16 %v1791
        %v1902 = vunpack.c.h.b16 %v1791
        %v1903 = vunpack.c.l.b16 %v1792
        %v1904 = vunpack.c.l.b16 %v1793
        %v1905 = vunpack.c.h.b16 %v1793
        %v1906 = vunpack.c.l.b16 %v1794
        %v1907 = vunpack.c.h.b16 %v1794
        %v1908 = vunpack.c.l.b16 %v1795
        %v1909 = vunpack.c.l.b16 %v1796
        %v1910 = vunpack.c.h.b16 %v1796
        %v1911 = vunpack.c.l.b16 %v1797
        %v1912 = vunpack.c.h.b16 %v1797
        %v1913 = vunpack.c.l.b16 %v1798
        %v1914 = vunpack.c.l.b16 %v1799
        %v1915 = vunpack.c.h.b16 %v1799
        %v1916 = vunpack.c.l.b16 %v1800
        %v1917 = vunpack.c.h.b16 %v1800
        %v1918 = vunpack.c.l.b16 %v1801
        %v1919 = vunpack.c.l.b16 %v1802
        %v1920 = vunpack.c.h.b16 %v1802
        %v1921 = vunpack.c.l.b16 %v1803
        %v1922 = vunpack.c.h.b16 %v1803
        %v1923 = vunpack.c.l.b16 %v1804
        %v1924 = vunpack.c.l.b16 %v1805
        %v1925 = vunpack.c.h.b16 %v1805
        %v1926 = vunpack.c.l.b16 %v1806
        %v1927 = vunpack.c.h.b16 %v1806
        %v1928 = vunpack.c.l.b16 %v1807
        %v1929 = vunpack.c.l.b16 %v1808
        %v1930 = vunpack.c.h.b16 %v1808
        %v1931 = vunpack.c.l.b16 %v1809
        %v1932 = vunpack.c.h.b16 %v1809
        %v1933 = vunpack.c.l.b16 %v1810
        %v1934 = vunpack.c.l.b16 %v1811
        %v1935 = vunpack.c.h.b16 %v1811
        %v1936 = vunpack.c.l.b16 %v1812
        %v1937 = vunpack.c.h.b16 %v1812
        %v1938 = vunpack.c.l.b16 %v1813
        %v1939 = vunpack.c.l.b16 %v1814
        %v1940 = vunpack.c.h.b16 %v1814
        %v1941 = vunpack.c.l.b16 %v1815
        %v1942 = vunpack.c.h.b16 %v1815
        %v1943 = vunpack.c.l.b16 %v1816
        %v1944 = vunpack.c.l.b16 %v1817
        %v1945 = vunpack.c.h.b16 %v1817
        %v1946 = vunpack.c.l.b16 %v1818
        %v1947 = vunpack.c.h.b16 %v1818
        %v1948 = vunpack.c.l.b16 %v1819
        %v1949 = vunpack.c.l.b16 %v1820
        %v1950 = vunpack.c.h.b16 %v1820
        %v1951 = vunpack.c.l.b16 %v1821
        %v1952 = vunpack.c.h.b16 %v1821
        %v1953 = vunpack.c.l.b16 %v1822
        %v1954 = vunpack.c.l.b16 %v1823
        %v1955 = vunpack.c.h.b16 %v1823
        %v1956 = vunpack.c.l.b16 %v1824
        %v1957 = vunpack.c.h.b16 %v1824
        %v1958 = vunpack.c.l.b16 %v1825
        %v1959 = vpack.c.b16 %v1884, %v1879
        %v1960 = vpack.c.b16 %v1885, %v1880
        %v1961 = vpack.c.b16 %v1886, %v1881
        %v1962 = vpack.c.b16 %v1887, %v1882
        %v1963 = vpack.c.b16 %v1888, %v1883
        %v1964 = vpack.c.b16 %v1894, %v1889
        %v1965 = vpack.c.b16 %v1895, %v1890
        %v1966 = vpack.c.b16 %v1896, %v1891
        %v1967 = vpack.c.b16 %v1897, %v1892
        %v1968 = vpack.c.b16 %v1898, %v1893
        %v1969 = vpack.c.b16 %v1904, %v1899
        %v1970 = vpack.c.b16 %v1905, %v1900
        %v1971 = vpack.c.b16 %v1906, %v1901
        %v1972 = vpack.c.b16 %v1907, %v1902
        %v1973 = vpack.c.b16 %v1908, %v1903
        %v1974 = vpack.c.b16 %v1914, %v1909
        %v1975 = vpack.c.b16 %v1915, %v1910
        %v1976 = vpack.c.b16 %v1916, %v1911
        %v1977 = vpack.c.b16 %v1917, %v1912
        %v1978 = vpack.c.b16 %v1918, %v1913
        %v1979 = vpack.c.b16 %v1924, %v1919
        %v1980 = vpack.c.b16 %v1925, %v1920
        %v1981 = vpack.c.b16 %v1926, %v1921
        %v1982 = vpack.c.b16 %v1927, %v1922
        %v1983 = vpack.c.b16 %v1928, %v1923
        %v1984 = vpack.c.b16 %v1934, %v1929
        %v1985 = vpack.c.b16 %v1935, %v1930
        %v1986 = vpack.c.b16 %v1936, %v1931
        %v1987 = vpack.c.b16 %v1937, %v1932
        %v1988 = vpack.c.b16 %v1938, %v1933
        %v1989 = vpack.c.b16 %v1944, %v1939
        %v1990 = vpack.c.b16 %v1945, %v1940
        %v1991 = vpack.c.b16 %v1946, %v1941
        %v1992 = vpack.c.b16 %v1947, %v1942
        %v1993 = vpack.c.b16 %v1948, %v1943
        %v1994 = vpack.c.b16 %v1954, %v1949
        %v1995 = vpack.c.b16 %v1955, %v1950
        %v1996 = vpack.c.b16 %v1956, %v1951
        %v1997 = vpack.c.b16 %v1957, %v1952
        %v1998 = vpack.c.b16 %v1958, %v1953
        %v2119 = vunpack.c.l.b16 %v1697
        %v2120 = vunpack.c.h.b16 %v1697
        %v2121 = vunpack.c.l.b16 %v1698
        %v2122 = vunpack.c.h.b16 %v1698
        %v2123 = vunpack.c.l.b16 %v1699
        %v2124 = vunpack.c.h.b16 %v1699
        %v2125 = vunpack.c.l.b16 %v1700
        %v2126 = vunpack.c.h.b16 %v1700
        %v2127 = vunpack.c.l.b16 %v1701
        %v2128 = vunpack.c.h.b16 %v1701
        %v2129 = vunpack.c.l.b16 %v1702
        %v2130 = vunpack.c.h.b16 %v1702
        %v2131 = vunpack.c.l.b16 %v1703
        %v2132 = vunpack.c.h.b16 %v1703
        %v2133 = vunpack.c.l.b16 %v1704
        %v2134 = vunpack.c.h.b16 %v1704
        %v2135 = vunpack.c.l.b16 %v1705
        %v2136 = vunpack.c.h.b16 %v1705
        %v2137 = vunpack.c.l.b16 %v1706
        %v2138 = vunpack.c.h.b16 %v1706
        %v2139 = vunpack.c.l.b16 %v1707
        %v2140 = vunpack.c.h.b16 %v1707
        %v2141 = vunpack.c.l.b16 %v1708
        %v2142 = vunpack.c.h.b16 %v1708
        %v2143 = vunpack.c.l.b16 %v1709
        %v2144 = vunpack.c.h.b16 %v1709
        %v2145 = vunpack.c.l.b16 %v1710
        %v2146 = vunpack.c.h.b16 %v1710
        %v2147 = vunpack.c.l.b16 %v1711
        %v2148 = vunpack.c.h.b16 %v1711
        %v2149 = vunpack.c.l.b16 %v1712
        %v2150 = vunpack.c.h.b16 %v1712
        %v2151 = vunpack.c.l.b16 %v1713
        %v2152 = vunpack.c.h.b16 %v1713
        %v2153 = vunpack.c.l.b16 %v1714
        %v2154 = vunpack.c.h.b16 %v1714
        %v2155 = vunpack.c.l.b16 %v1715
        %v2156 = vunpack.c.h.b16 %v1715
        %v2157 = vunpack.c.l.b16 %v1716
        %v2158 = vunpack.c.h.b16 %v1716
        %v2159 = vunpack.c.l.b16 %v1717
        %v2160 = vunpack.c.h.b16 %v1717
        %v2161 = vunpack.c.l.b16 %v1718
        %v2162 = vunpack.c.h.b16 %v1718
        %v2163 = vunpack.c.l.b16 %v1719
        %v2164 = vunpack.c.h.b16 %v1719
        %v2165 = vunpack.c.l.b16 %v1720
        %v2166 = vunpack.c.h.b16 %v1720
        %v2167 = vunpack.c.l.b16 %v1721
        %v2168 = vunpack.c.h.b16 %v1721
        %v2169 = vunpack.c.l.b16 %v1722
        %v2170 = vunpack.c.h.b16 %v1722
        %v2171 = vunpack.c.l.b16 %v1723
        %v2172 = vunpack.c.h.b16 %v1723
        %v2173 = vunpack.c.l.b16 %v1724
        %v2174 = vunpack.c.h.b16 %v1724
        %v2175 = vunpack.c.l.b16 %v1725
        %v2176 = vunpack.c.h.b16 %v1725
        %v2177 = vunpack.c.l.b16 %v1726
        %v2178 = vunpack.c.h.b16 %v1726
        %v2179 = vunpack.c.l.b16 %v1727
        %v2180 = vunpack.c.h.b16 %v1727
        %v2181 = vunpack.c.l.b16 %v1728
        %v2182 = vunpack.c.h.b16 %v1728
        %v2183 = vunpack.c.l.b16 %v1729
        %v2184 = vunpack.c.h.b16 %v1729
        %v2185 = vunpack.c.l.b16 %v1730
        %v2186 = vunpack.c.h.b16 %v1730
        %v2187 = vunpack.c.l.b16 %v1731
        %v2188 = vunpack.c.h.b16 %v1731
        %v2189 = vunpack.c.l.b16 %v1732
        %v2190 = vunpack.c.h.b16 %v1732
        %v2191 = vunpack.c.l.b16 %v1733
        %v2192 = vunpack.c.h.b16 %v1733
        %v2193 = vunpack.c.l.b16 %v1734
        %v2194 = vunpack.c.h.b16 %v1734
        %v2195 = vunpack.c.l.b16 %v1735
        %v2196 = vunpack.c.h.b16 %v1735
        %v2197 = vunpack.c.l.b16 %v1736
        %v2198 = vunpack.c.h.b16 %v1736
        %v2199 = vunpack.c.l.b16 %v1737
        %v2200 = vunpack.c.h.b16 %v1737
        %v2201 = vunpack.c.l.b16 %v1738
        %v2202 = vunpack.c.h.b16 %v1738
        %v2203 = vunpack.c.l.b16 %v1739
        %v2204 = vunpack.c.h.b16 %v1739
        %v2205 = vunpack.c.l.b16 %v1740
        %v2206 = vunpack.c.h.b16 %v1740
        %v2207 = vunpack.c.l.b16 %v1741
        %v2208 = vunpack.c.h.b16 %v1741
        %v2209 = vunpack.c.l.b16 %v1742
        %v2210 = vunpack.c.h.b16 %v1742
        %v2211 = vunpack.c.l.b16 %v1743
        %v2212 = vunpack.c.h.b16 %v1743
        %v2213 = vunpack.c.l.b16 %v1744
        %v2214 = vunpack.c.h.b16 %v1744
        %v2215 = vunpack.c.l.b16 %v1745
        %v2216 = vunpack.c.h.b16 %v1745
        %v2217 = vunpack.c.l.b16 %v1746
        %v2218 = vunpack.c.h.b16 %v1746
        %v2219 = vunpack.c.l.b16 %v1747
        %v2220 = vunpack.c.h.b16 %v1747
        %v2221 = vunpack.c.l.b16 %v1748
        %v2222 = vunpack.c.h.b16 %v1748
        %v2223 = vunpack.c.l.b16 %v1749
        %v2224 = vunpack.c.h.b16 %v1749
        %v2225 = vunpack.c.l.b16 %v1750
        %v2226 = vunpack.c.h.b16 %v1750
        %v2227 = vunpack.c.l.b16 %v1751
        %v2228 = vunpack.c.h.b16 %v1751
        %v2229 = vunpack.c.l.b16 %v1752
        %v2230 = vunpack.c.h.b16 %v1752
        %v2231 = vunpack.c.l.b16 %v1753
        %v2232 = vunpack.c.h.b16 %v1753
        %v2233 = vunpack.c.l.b16 %v1754
        %v2234 = vunpack.c.h.b16 %v1754
        %v2235 = vunpack.c.l.b16 %v1755
        %v2236 = vunpack.c.h.b16 %v1755
        %v2237 = vunpack.c.l.b16 %v1756
        %v2238 = vunpack.c.h.b16 %v1756
        %v2239 = vunpack.c.l.b16 %v1757
        %v2240 = vunpack.c.h.b16 %v1757
        %v2241 = vunpack.c.l.b16 %v1758
        %v2242 = vunpack.c.h.b16 %v1758
        %v2243 = vunpack.c.l.b16 %v1759
        %v2244 = vunpack.c.h.b16 %v1759
        %v2245 = vunpack.c.l.b16 %v1760
        %v2246 = vunpack.c.h.b16 %v1760
        %v2247 = vunpack.c.l.b16 %v1761
        %v2248 = vunpack.c.h.b16 %v1761
        %v2249 = vunpack.c.l.b16 %v1762
        %v2250 = vunpack.c.h.b16 %v1762
        %v2251 = vunpack.c.l.b16 %v1763
        %v2252 = vunpack.c.h.b16 %v1763
        %v2253 = vunpack.c.l.b16 %v1764
        %v2254 = vunpack.c.h.b16 %v1764
        %v2255 = vunpack.c.l.b16 %v1765
        %v2256 = vunpack.c.h.b16 %v1765
        %v2257 = vunpack.c.l.b16 %v1766
        %v2258 = vunpack.c.h.b16 %v1766
        %v2259 = vunpack.c.l.b16 %v1767
        %v2260 = vunpack.c.h.b16 %v1767
        %v2261 = vunpack.c.l.b16 %v1768
        %v2262 = vunpack.c.h.b16 %v1768
        %v2263 = vunpack.c.l.b16 %v1769
        %v2264 = vunpack.c.h.b16 %v1769
        %v2265 = vunpack.c.l.b16 %v1770
        %v2266 = vunpack.c.h.b16 %v1770
        %v2267 = vunpack.c.l.b16 %v1771
        %v2268 = vunpack.c.h.b16 %v1771
        %v2269 = vunpack.c.l.b16 %v1772
        %v2270 = vunpack.c.h.b16 %v1772
        %v2271 = vunpack.c.l.b16 %v1773
        %v2272 = vunpack.c.h.b16 %v1773
        %v2273 = vunpack.c.l.b16 %v1774
        %v2274 = vunpack.c.h.b16 %v1774
        %v2275 = vunpack.c.l.b16 %v1775
        %v2276 = vunpack.c.h.b16 %v1775
        %v2277 = vunpack.c.l.b16 %v1776
        %v2278 = vunpack.c.h.b16 %v1776
        %v2279 = vpack.c.b16 %v2121, %v2119
        %v2280 = vpack.c.b16 %v2122, %v2120
        %v2281 = vpack.c.b16 %v2125, %v2123
        %v2282 = vpack.c.b16 %v2126, %v2124
        %v2283 = vpack.c.b16 %v2129, %v2127
        %v2284 = vpack.c.b16 %v2130, %v2128
        %v2285 = vpack.c.b16 %v2133, %v2131
        %v2286 = vpack.c.b16 %v2134, %v2132
        %v2287 = vpack.c.b16 %v2137, %v2135
        %v2288 = vpack.c.b16 %v2138, %v2136
        %v2289 = vpack.c.b16 %v2141, %v2139
        %v2290 = vpack.c.b16 %v2142, %v2140
        %v2291 = vpack.c.b16 %v2145, %v2143
        %v2292 = vpack.c.b16 %v2146, %v2144
        %v2293 = vpack.c.b16 %v2149, %v2147
        %v2294 = vpack.c.b16 %v2150, %v2148
        %v2295 = vpack.c.b16 %v2153, %v2151
        %v2296 = vpack.c.b16 %v2154, %v2152
        %v2297 = vpack.c.b16 %v2157, %v2155
        %v2298 = vpack.c.b16 %v2158, %v2156
        %v2299 = vpack.c.b16 %v2161, %v2159
        %v2300 = vpack.c.b16 %v2162, %v2160
        %v2301 = vpack.c.b16 %v2165, %v2163
        %v2302 = vpack.c.b16 %v2166, %v2164
        %v2303 = vpack.c.b16 %v2169, %v2167
        %v2304 = vpack.c.b16 %v2170, %v2168
        %v2305 = vpack.c.b16 %v2173, %v2171
        %v2306 = vpack.c.b16 %v2174, %v2172
        %v2307 = vpack.c.b16 %v2177, %v2175
        %v2308 = vpack.c.b16 %v2178, %v2176
        %v2309 = vpack.c.b16 %v2181, %v2179
        %v2310 = vpack.c.b16 %v2182, %v2180
        %v2311 = vpack.c.b16 %v2185, %v2183
        %v2312 = vpack.c.b16 %v2186, %v2184
        %v2313 = vpack.c.b16 %v2189, %v2187
        %v2314 = vpack.c.b16 %v2190, %v2188
        %v2315 = vpack.c.b16 %v2193, %v2191
        %v2316 = vpack.c.b16 %v2194, %v2192
        %v2317 = vpack.c.b16 %v2197, %v2195
        %v2318 = vpack.c.b16 %v2198, %v2196
        %v2319 = vpack.c.b16 %v2201, %v2199
        %v2320 = vpack.c.b16 %v2202, %v2200
        %v2321 = vpack.c.b16 %v2205, %v2203
        %v2322 = vpack.c.b16 %v2206, %v2204
        %v2323 = vpack.c.b16 %v2209, %v2207
        %v2324 = vpack.c.b16 %v2210, %v2208
        %v2325 = vpack.c.b16 %v2213, %v2211
        %v2326 = vpack.c.b16 %v2214, %v2212
        %v2327 = vpack.c.b16 %v2217, %v2215
        %v2328 = vpack.c.b16 %v2218, %v2216
        %v2329 = vpack.c.b16 %v2221, %v2219
        %v2330 = vpack.c.b16 %v2222, %v2220
        %v2331 = vpack.c.b16 %v2225, %v2223
        %v2332 = vpack.c.b16 %v2226, %v2224
        %v2333 = vpack.c.b16 %v2229, %v2227
        %v2334 = vpack.c.b16 %v2230, %v2228
        %v2335 = vpack.c.b16 %v2233, %v2231
        %v2336 = vpack.c.b16 %v2234, %v2232
        %v2337 = vpack.c.b16 %v2237, %v2235
        %v2338 = vpack.c.b16 %v2238, %v2236
        %v2339 = vpack.c.b16 %v2241, %v2239
        %v2340 = vpack.c.b16 %v2242, %v2240
        %v2341 = vpack.c.b16 %v2245, %v2243
        %v2342 = vpack.c.b16 %v2246, %v2244
        %v2343 = vpack.c.b16 %v2249, %v2247
        %v2344 = vpack.c.b16 %v2250, %v2248
        %v2345 = vpack.c.b16 %v2253, %v2251
        %v2346 = vpack.c.b16 %v2254, %v2252
        %v2347 = vpack.c.b16 %v2257, %v2255
        %v2348 = vpack.c.b16 %v2258, %v2256
        %v2349 = vpack.c.b16 %v2261, %v2259
        %v2350 = vpack.c.b16 %v2262, %v2260
        %v2351 = vpack.c.b16 %v2265, %v2263
        %v2352 = vpack.c.b16 %v2266, %v2264
        %v2353 = vpack.c.b16 %v2269, %v2267
        %v2354 = vpack.c.b16 %v2270, %v2268
        %v2355 = vpack.c.b16 %v2273, %v2271
        %v2356 = vpack.c.b16 %v2274, %v2272
        %v2357 = vpack.c.b16 %v2277, %v2275
        %v2358 = vpack.c.b16 %v2278, %v2276
        %2439 = vmatpush.bf16.msra.mxu0 %v2293
        %2440 = vmatpush.bf16.msra.mxu0 %v2291
        %2441 = vmatpush.bf16.msra.mxu0 %v2289
        %2442 = vmatpush.bf16.msra.mxu0 %v2287
        %2443 = vmatpush.bf16.msra.mxu0 %v2285
        %2444 = vmatpush.bf16.msra.mxu0 %v2283
        %2445 = vmatpush.bf16.msra.mxu0 %v2281
        %2446 = vmatpush.bf16.msra.mxu0 %v2279
        %2447 = vmatmul.bf16.gmra.mxu0 %v1959
        %v2448 = vpop.f32.mrf.mxu0
        %v2449 = vadd.f32 %v1827, %v2448
        %v2450 = vpop.f32.mrf.mxu0
        %v2451 = vadd.f32 %v1827, %v2450
        %2452 = vmatmul.bf16.gmra.mxu0 %v1964
        %v2453 = vpop.f32.mrf.mxu0
        %v2454 = vadd.f32 %v1827, %v2453
        %v2455 = vpop.f32.mrf.mxu0
        %v2456 = vadd.f32 %v1827, %v2455
        %2457 = vmatmul.bf16.gmra.mxu0 %v1969
        %v2458 = vpop.f32.mrf.mxu0
        %v2459 = vadd.f32 %v1827, %v2458
        %v2460 = vpop.f32.mrf.mxu0
        %v2461 = vadd.f32 %v1827, %v2460
        %2462 = vmatmul.bf16.gmra.mxu0 %v1974
        %v2463 = vpop.f32.mrf.mxu0
        %v2464 = vadd.f32 %v1827, %v2463
        %v2465 = vpop.f32.mrf.mxu0
        %v2466 = vadd.f32 %v1827, %v2465
        %2467 = vmatmul.bf16.gmra.mxu0 %v1979
        %v2468 = vpop.f32.mrf.mxu0
        %v2469 = vadd.f32 %v1827, %v2468
        %v2470 = vpop.f32.mrf.mxu0
        %v2471 = vadd.f32 %v1827, %v2470
        %2472 = vmatmul.bf16.gmra.mxu0 %v1984
        %v2473 = vpop.f32.mrf.mxu0
        %v2474 = vadd.f32 %v1827, %v2473
        %v2475 = vpop.f32.mrf.mxu0
        %v2476 = vadd.f32 %v1827, %v2475
        %2477 = vmatmul.bf16.gmra.mxu0 %v1989
        %v2478 = vpop.f32.mrf.mxu0
        %v2479 = vadd.f32 %v1827, %v2478
        %v2480 = vpop.f32.mrf.mxu0
        %v2481 = vadd.f32 %v1827, %v2480
        %2482 = vmatmul.bf16.gmra.mxu0 %v1994
        %v2483 = vpop.f32.mrf.mxu0
        %v2484 = vadd.f32 %v1827, %v2483
        %v2485 = vpop.f32.mrf.mxu0
        %v2486 = vadd.f32 %v1827, %v2485
        %2487 = vdwg.mxu0
        %2488 = vmatpush.bf16.msra.mxu0 %v2309
        %2489 = vmatpush.bf16.msra.mxu0 %v2307
        %2490 = vmatpush.bf16.msra.mxu0 %v2305
        %2491 = vmatpush.bf16.msra.mxu0 %v2303
        %2492 = vmatpush.bf16.msra.mxu0 %v2301
        %2493 = vmatpush.bf16.msra.mxu0 %v2299
        %2494 = vmatpush.bf16.msra.mxu0 %v2297
        %2495 = vmatpush.bf16.msra.mxu0 %v2295
        %2496 = vmatmul.bf16.gmra.mxu0 %v1960
        %v2497 = vpop.f32.mrf.mxu0
        %v2498 = vadd.f32 %v2449, %v2497
        %v2499 = vpop.f32.mrf.mxu0
        %v2500 = vadd.f32 %v2451, %v2499
        %2501 = vmatmul.bf16.gmra.mxu0 %v1965
        %v2502 = vpop.f32.mrf.mxu0
        %v2503 = vadd.f32 %v2454, %v2502
        %v2504 = vpop.f32.mrf.mxu0
        %v2505 = vadd.f32 %v2456, %v2504
        %2506 = vmatmul.bf16.gmra.mxu0 %v1970
        %v2507 = vpop.f32.mrf.mxu0
        %v2508 = vadd.f32 %v2459, %v2507
        %v2509 = vpop.f32.mrf.mxu0
        %v2510 = vadd.f32 %v2461, %v2509
        %2511 = vmatmul.bf16.gmra.mxu0 %v1975
        %v2512 = vpop.f32.mrf.mxu0
        %v2513 = vadd.f32 %v2464, %v2512
        %v2514 = vpop.f32.mrf.mxu0
        %v2515 = vadd.f32 %v2466, %v2514
        %2516 = vmatmul.bf16.gmra.mxu0 %v1980
        %v2517 = vpop.f32.mrf.mxu0
        %v2518 = vadd.f32 %v2469, %v2517
        %v2519 = vpop.f32.mrf.mxu0
        %v2520 = vadd.f32 %v2471, %v2519
        %2521 = vmatmul.bf16.gmra.mxu0 %v1985
        %v2522 = vpop.f32.mrf.mxu0
        %v2523 = vadd.f32 %v2474, %v2522
        %v2524 = vpop.f32.mrf.mxu0
        %v2525 = vadd.f32 %v2476, %v2524
        %2526 = vmatmul.bf16.gmra.mxu0 %v1990
        %v2527 = vpop.f32.mrf.mxu0
        %v2528 = vadd.f32 %v2479, %v2527
        %v2529 = vpop.f32.mrf.mxu0
        %v2530 = vadd.f32 %v2481, %v2529
        %2531 = vmatmul.bf16.gmra.mxu0 %v1995
        %v2532 = vpop.f32.mrf.mxu0
        %v2533 = vadd.f32 %v2484, %v2532
        %v2534 = vpop.f32.mrf.mxu0
        %v2535 = vadd.f32 %v2486, %v2534
        %2536 = vdwg.mxu0
        %2537 = vmatpush.bf16.msra.mxu0 %v2325
        %2538 = vmatpush.bf16.msra.mxu0 %v2323
        %2539 = vmatpush.bf16.msra.mxu0 %v2321
        %2540 = vmatpush.bf16.msra.mxu0 %v2319
        %2541 = vmatpush.bf16.msra.mxu0 %v2317
        %2542 = vmatpush.bf16.msra.mxu0 %v2315
        %2543 = vmatpush.bf16.msra.mxu0 %v2313
        %2544 = vmatpush.bf16.msra.mxu0 %v2311
        %2545 = vmatmul.bf16.gmra.mxu0 %v1961
        %v2546 = vpop.f32.mrf.mxu0
        %v2547 = vadd.f32 %v2498, %v2546
        %v2548 = vpop.f32.mrf.mxu0
        %v2549 = vadd.f32 %v2500, %v2548
        %2550 = vmatmul.bf16.gmra.mxu0 %v1966
        %v2551 = vpop.f32.mrf.mxu0
        %v2552 = vadd.f32 %v2503, %v2551
        %v2553 = vpop.f32.mrf.mxu0
        %v2554 = vadd.f32 %v2505, %v2553
        %2555 = vmatmul.bf16.gmra.mxu0 %v1971
        %v2556 = vpop.f32.mrf.mxu0
        %v2557 = vadd.f32 %v2508, %v2556
        %v2558 = vpop.f32.mrf.mxu0
        %v2559 = vadd.f32 %v2510, %v2558
        %2560 = vmatmul.bf16.gmra.mxu0 %v1976
        %v2561 = vpop.f32.mrf.mxu0
        %v2562 = vadd.f32 %v2513, %v2561
        %v2563 = vpop.f32.mrf.mxu0
        %v2564 = vadd.f32 %v2515, %v2563
        %2565 = vmatmul.bf16.gmra.mxu0 %v1981
        %v2566 = vpop.f32.mrf.mxu0
        %v2567 = vadd.f32 %v2518, %v2566
        %v2568 = vpop.f32.mrf.mxu0
        %v2569 = vadd.f32 %v2520, %v2568
        %2570 = vmatmul.bf16.gmra.mxu0 %v1986
        %v2571 = vpop.f32.mrf.mxu0
        %v2572 = vadd.f32 %v2523, %v2571
        %v2573 = vpop.f32.mrf.mxu0
        %v2574 = vadd.f32 %v2525, %v2573
        %2575 = vmatmul.bf16.gmra.mxu0 %v1991
        %v2576 = vpop.f32.mrf.mxu0
        %v2577 = vadd.f32 %v2528, %v2576
        %v2578 = vpop.f32.mrf.mxu0
        %v2579 = vadd.f32 %v2530, %v2578
        %2580 = vmatmul.bf16.gmra.mxu0 %v1996
        %v2581 = vpop.f32.mrf.mxu0
        %v2582 = vadd.f32 %v2533, %v2581
        %v2583 = vpop.f32.mrf.mxu0
        %v2584 = vadd.f32 %v2535, %v2583
        %2585 = vdwg.mxu0
        %2586 = vmatpush.bf16.msra.mxu0 %v2341
        %2587 = vmatpush.bf16.msra.mxu0 %v2339
        %2588 = vmatpush.bf16.msra.mxu0 %v2337
        %2589 = vmatpush.bf16.msra.mxu0 %v2335
        %2590 = vmatpush.bf16.msra.mxu0 %v2333
        %2591 = vmatpush.bf16.msra.mxu0 %v2331
        %2592 = vmatpush.bf16.msra.mxu0 %v2329
        %2593 = vmatpush.bf16.msra.mxu0 %v2327
        %2594 = vmatmul.bf16.gmra.mxu0 %v1962
        %v2595 = vpop.f32.mrf.mxu0
        %v2596 = vadd.f32 %v2547, %v2595
        %v2597 = vpop.f32.mrf.mxu0
        %v2598 = vadd.f32 %v2549, %v2597
        %2599 = vmatmul.bf16.gmra.mxu0 %v1967
        %v2600 = vpop.f32.mrf.mxu0
        %v2601 = vadd.f32 %v2552, %v2600
        %v2602 = vpop.f32.mrf.mxu0
        %v2603 = vadd.f32 %v2554, %v2602
        %2604 = vmatmul.bf16.gmra.mxu0 %v1972
        %v2605 = vpop.f32.mrf.mxu0
        %v2606 = vadd.f32 %v2557, %v2605
        %v2607 = vpop.f32.mrf.mxu0
        %v2608 = vadd.f32 %v2559, %v2607
        %2609 = vmatmul.bf16.gmra.mxu0 %v1977
        %v2610 = vpop.f32.mrf.mxu0
        %v2611 = vadd.f32 %v2562, %v2610
        %v2612 = vpop.f32.mrf.mxu0
        %v2613 = vadd.f32 %v2564, %v2612
        %2614 = vmatmul.bf16.gmra.mxu0 %v1982
        %v2615 = vpop.f32.mrf.mxu0
        %v2616 = vadd.f32 %v2567, %v2615
        %v2617 = vpop.f32.mrf.mxu0
        %v2618 = vadd.f32 %v2569, %v2617
        %2619 = vmatmul.bf16.gmra.mxu0 %v1987
        %v2620 = vpop.f32.mrf.mxu0
        %v2621 = vadd.f32 %v2572, %v2620
        %v2622 = vpop.f32.mrf.mxu0
        %v2623 = vadd.f32 %v2574, %v2622
        %2624 = vmatmul.bf16.gmra.mxu0 %v1992
        %v2625 = vpop.f32.mrf.mxu0
        %v2626 = vadd.f32 %v2577, %v2625
        %v2627 = vpop.f32.mrf.mxu0
        %v2628 = vadd.f32 %v2579, %v2627
        %2629 = vmatmul.bf16.gmra.mxu0 %v1997
        %v2630 = vpop.f32.mrf.mxu0
        %v2631 = vadd.f32 %v2582, %v2630
        %v2632 = vpop.f32.mrf.mxu0
        %v2633 = vadd.f32 %v2584, %v2632
        %2634 = vdwg.mxu0
        %2635 = vmatpush.bf16.msra.mxu0 %v2357
        %2636 = vmatpush.bf16.msra.mxu0 %v2355
        %2637 = vmatpush.bf16.msra.mxu0 %v2353
        %2638 = vmatpush.bf16.msra.mxu0 %v2351
        %2639 = vmatpush.bf16.msra.mxu0 %v2349
        %2640 = vmatpush.bf16.msra.mxu0 %v2347
        %2641 = vmatpush.bf16.msra.mxu0 %v2345
        %2642 = vmatpush.bf16.msra.mxu0 %v2343
        %2643 = vmatmul.bf16.gmra.mxu0 %v1963
        %v2644 = vpop.f32.mrf.mxu0
        %v2645 = vadd.f32 %v2596, %v2644
        %v2646 = vpop.f32.mrf.mxu0
        %v2647 = vadd.f32 %v2598, %v2646
        %2648 = vmatmul.bf16.gmra.mxu0 %v1968
        %v2649 = vpop.f32.mrf.mxu0
        %v2650 = vadd.f32 %v2601, %v2649
        %v2651 = vpop.f32.mrf.mxu0
        %v2652 = vadd.f32 %v2603, %v2651
        %2653 = vmatmul.bf16.gmra.mxu0 %v1973
        %v2654 = vpop.f32.mrf.mxu0
        %v2655 = vadd.f32 %v2606, %v2654
        %v2656 = vpop.f32.mrf.mxu0
        %v2657 = vadd.f32 %v2608, %v2656
        %2658 = vmatmul.bf16.gmra.mxu0 %v1978
        %v2659 = vpop.f32.mrf.mxu0
        %v2660 = vadd.f32 %v2611, %v2659
        %v2661 = vpop.f32.mrf.mxu0
        %v2662 = vadd.f32 %v2613, %v2661
        %2663 = vmatmul.bf16.gmra.mxu0 %v1983
        %v2664 = vpop.f32.mrf.mxu0
        %v2665 = vadd.f32 %v2616, %v2664
        %v2666 = vpop.f32.mrf.mxu0
        %v2667 = vadd.f32 %v2618, %v2666
        %2668 = vmatmul.bf16.gmra.mxu0 %v1988
        %v2669 = vpop.f32.mrf.mxu0
        %v2670 = vadd.f32 %v2621, %v2669
        %v2671 = vpop.f32.mrf.mxu0
        %v2672 = vadd.f32 %v2623, %v2671
        %2673 = vmatmul.bf16.gmra.mxu0 %v1993
        %v2674 = vpop.f32.mrf.mxu0
        %v2675 = vadd.f32 %v2626, %v2674
        %v2676 = vpop.f32.mrf.mxu0
        %v2677 = vadd.f32 %v2628, %v2676
        %2678 = vmatmul.bf16.gmra.mxu0 %v1998
        %v2679 = vpop.f32.mrf.mxu0
        %v2680 = vadd.f32 %v2631, %v2679
        %v2681 = vpop.f32.mrf.mxu0
        %v2682 = vadd.f32 %v2633, %v2681
        %2683 = vdwg.mxu0
        %2684 = vmatpush.bf16.msra.mxu0 %v2294
        %2685 = vmatpush.bf16.msra.mxu0 %v2292
        %2686 = vmatpush.bf16.msra.mxu0 %v2290
        %2687 = vmatpush.bf16.msra.mxu0 %v2288
        %2688 = vmatpush.bf16.msra.mxu0 %v2286
        %2689 = vmatpush.bf16.msra.mxu0 %v2284
        %2690 = vmatpush.bf16.msra.mxu0 %v2282
        %2691 = vmatpush.bf16.msra.mxu0 %v2280
        %2692 = vmatmul.bf16.gmra.mxu0 %v1959
        %v2693 = vpop.f32.mrf.mxu0
        %v2694 = vadd.f32 %v1828, %v2693
        %v2695 = vpop.f32.mrf.mxu0
        %v2696 = vadd.f32 %v1828, %v2695
        %2697 = vmatmul.bf16.gmra.mxu0 %v1964
        %v2698 = vpop.f32.mrf.mxu0
        %v2699 = vadd.f32 %v1828, %v2698
        %v2700 = vpop.f32.mrf.mxu0
        %v2701 = vadd.f32 %v1828, %v2700
        %2702 = vmatmul.bf16.gmra.mxu0 %v1969
        %v2703 = vpop.f32.mrf.mxu0
        %v2704 = vadd.f32 %v1828, %v2703
        %v2705 = vpop.f32.mrf.mxu0
        %v2706 = vadd.f32 %v1828, %v2705
        %2707 = vmatmul.bf16.gmra.mxu0 %v1974
        %v2708 = vpop.f32.mrf.mxu0
        %v2709 = vadd.f32 %v1828, %v2708
        %v2710 = vpop.f32.mrf.mxu0
        %v2711 = vadd.f32 %v1828, %v2710
        %2712 = vmatmul.bf16.gmra.mxu0 %v1979
        %v2713 = vpop.f32.mrf.mxu0
        %v2714 = vadd.f32 %v1828, %v2713
        %v2715 = vpop.f32.mrf.mxu0
        %v2716 = vadd.f32 %v1828, %v2715
        %2717 = vmatmul.bf16.gmra.mxu0 %v1984
        %v2718 = vpop.f32.mrf.mxu0
        %v2719 = vadd.f32 %v1828, %v2718
        %v2720 = vpop.f32.mrf.mxu0
        %v2721 = vadd.f32 %v1828, %v2720
        %2722 = vmatmul.bf16.gmra.mxu0 %v1989
        %v2723 = vpop.f32.mrf.mxu0
        %v2724 = vadd.f32 %v1828, %v2723
        %v2725 = vpop.f32.mrf.mxu0
        %v2726 = vadd.f32 %v1828, %v2725
        %2727 = vmatmul.bf16.gmra.mxu0 %v1994
        %v2728 = vpop.f32.mrf.mxu0
        %v2729 = vadd.f32 %v1828, %v2728
        %v2730 = vpop.f32.mrf.mxu0
        %v2731 = vadd.f32 %v1828, %v2730
        %2732 = vdwg.mxu0
        %2733 = vmatpush.bf16.msra.mxu0 %v2310
        %2734 = vmatpush.bf16.msra.mxu0 %v2308
        %2735 = vmatpush.bf16.msra.mxu0 %v2306
        %2736 = vmatpush.bf16.msra.mxu0 %v2304
        %2737 = vmatpush.bf16.msra.mxu0 %v2302
        %2738 = vmatpush.bf16.msra.mxu0 %v2300
        %2739 = vmatpush.bf16.msra.mxu0 %v2298
        %2740 = vmatpush.bf16.msra.mxu0 %v2296
        %2741 = vmatmul.bf16.gmra.mxu0 %v1960
        %v2742 = vpop.f32.mrf.mxu0
        %v2743 = vadd.f32 %v2694, %v2742
        %v2744 = vpop.f32.mrf.mxu0
        %v2745 = vadd.f32 %v2696, %v2744
        %2746 = vmatmul.bf16.gmra.mxu0 %v1965
        %v2747 = vpop.f32.mrf.mxu0
        %v2748 = vadd.f32 %v2699, %v2747
        %v2749 = vpop.f32.mrf.mxu0
        %v2750 = vadd.f32 %v2701, %v2749
        %2751 = vmatmul.bf16.gmra.mxu0 %v1970
        %v2752 = vpop.f32.mrf.mxu0
        %v2753 = vadd.f32 %v2704, %v2752
        %v2754 = vpop.f32.mrf.mxu0
        %v2755 = vadd.f32 %v2706, %v2754
        %2756 = vmatmul.bf16.gmra.mxu0 %v1975
        %v2757 = vpop.f32.mrf.mxu0
        %v2758 = vadd.f32 %v2709, %v2757
        %v2759 = vpop.f32.mrf.mxu0
        %v2760 = vadd.f32 %v2711, %v2759
        %2761 = vmatmul.bf16.gmra.mxu0 %v1980
        %v2762 = vpop.f32.mrf.mxu0
        %v2763 = vadd.f32 %v2714, %v2762
        %v2764 = vpop.f32.mrf.mxu0
        %v2765 = vadd.f32 %v2716, %v2764
        %2766 = vmatmul.bf16.gmra.mxu0 %v1985
        %v2767 = vpop.f32.mrf.mxu0
        %v2768 = vadd.f32 %v2719, %v2767
        %v2769 = vpop.f32.mrf.mxu0
        %v2770 = vadd.f32 %v2721, %v2769
        %2771 = vmatmul.bf16.gmra.mxu0 %v1990
        %v2772 = vpop.f32.mrf.mxu0
        %v2773 = vadd.f32 %v2724, %v2772
        %v2774 = vpop.f32.mrf.mxu0
        %v2775 = vadd.f32 %v2726, %v2774
        %2776 = vmatmul.bf16.gmra.mxu0 %v1995
        %v2777 = vpop.f32.mrf.mxu0
        %v2778 = vadd.f32 %v2729, %v2777
        %v2779 = vpop.f32.mrf.mxu0
        %v2780 = vadd.f32 %v2731, %v2779
        %2781 = vdwg.mxu0
        %2782 = vmatpush.bf16.msra.mxu0 %v2326
        %2783 = vmatpush.bf16.msra.mxu0 %v2324
        %2784 = vmatpush.bf16.msra.mxu0 %v2322
        %2785 = vmatpush.bf16.msra.mxu0 %v2320
        %2786 = vmatpush.bf16.msra.mxu0 %v2318
        %2787 = vmatpush.bf16.msra.mxu0 %v2316
        %2788 = vmatpush.bf16.msra.mxu0 %v2314
        %2789 = vmatpush.bf16.msra.mxu0 %v2312
        %2790 = vmatmul.bf16.gmra.mxu0 %v1961
        %v2791 = vpop.f32.mrf.mxu0
        %v2792 = vadd.f32 %v2743, %v2791
        %v2793 = vpop.f32.mrf.mxu0
        %v2794 = vadd.f32 %v2745, %v2793
        %2795 = vmatmul.bf16.gmra.mxu0 %v1966
        %v2796 = vpop.f32.mrf.mxu0
        %v2797 = vadd.f32 %v2748, %v2796
        %v2798 = vpop.f32.mrf.mxu0
        %v2799 = vadd.f32 %v2750, %v2798
        %2800 = vmatmul.bf16.gmra.mxu0 %v1971
        %v2801 = vpop.f32.mrf.mxu0
        %v2802 = vadd.f32 %v2753, %v2801
        %v2803 = vpop.f32.mrf.mxu0
        %v2804 = vadd.f32 %v2755, %v2803
        %2805 = vmatmul.bf16.gmra.mxu0 %v1976
        %v2806 = vpop.f32.mrf.mxu0
        %v2807 = vadd.f32 %v2758, %v2806
        %v2808 = vpop.f32.mrf.mxu0
        %v2809 = vadd.f32 %v2760, %v2808
        %2810 = vmatmul.bf16.gmra.mxu0 %v1981
        %v2811 = vpop.f32.mrf.mxu0
        %v2812 = vadd.f32 %v2763, %v2811
        %v2813 = vpop.f32.mrf.mxu0
        %v2814 = vadd.f32 %v2765, %v2813
        %2815 = vmatmul.bf16.gmra.mxu0 %v1986
        %v2816 = vpop.f32.mrf.mxu0
        %v2817 = vadd.f32 %v2768, %v2816
        %v2818 = vpop.f32.mrf.mxu0
        %v2819 = vadd.f32 %v2770, %v2818
        %2820 = vmatmul.bf16.gmra.mxu0 %v1991
        %v2821 = vpop.f32.mrf.mxu0
        %v2822 = vadd.f32 %v2773, %v2821
        %v2823 = vpop.f32.mrf.mxu0
        %v2824 = vadd.f32 %v2775, %v2823
        %2825 = vmatmul.bf16.gmra.mxu0 %v1996
        %v2826 = vpop.f32.mrf.mxu0
        %v2827 = vadd.f32 %v2778, %v2826
        %v2828 = vpop.f32.mrf.mxu0
        %v2829 = vadd.f32 %v2780, %v2828
        %2830 = vdwg.mxu0
        %2831 = vmatpush.bf16.msra.mxu0 %v2342
        %2832 = vmatpush.bf16.msra.mxu0 %v2340
        %2833 = vmatpush.bf16.msra.mxu0 %v2338
        %2834 = vmatpush.bf16.msra.mxu0 %v2336
        %2835 = vmatpush.bf16.msra.mxu0 %v2334
        %2836 = vmatpush.bf16.msra.mxu0 %v2332
        %2837 = vmatpush.bf16.msra.mxu0 %v2330
        %2838 = vmatpush.bf16.msra.mxu0 %v2328
        %2839 = vmatmul.bf16.gmra.mxu0 %v1962
        %v2840 = vpop.f32.mrf.mxu0
        %v2841 = vadd.f32 %v2792, %v2840
        %v2842 = vpop.f32.mrf.mxu0
        %v2843 = vadd.f32 %v2794, %v2842
        %2844 = vmatmul.bf16.gmra.mxu0 %v1967
        %v2845 = vpop.f32.mrf.mxu0
        %v2846 = vadd.f32 %v2797, %v2845
        %v2847 = vpop.f32.mrf.mxu0
        %v2848 = vadd.f32 %v2799, %v2847
        %2849 = vmatmul.bf16.gmra.mxu0 %v1972
        %v2850 = vpop.f32.mrf.mxu0
        %v2851 = vadd.f32 %v2802, %v2850
        %v2852 = vpop.f32.mrf.mxu0
        %v2853 = vadd.f32 %v2804, %v2852
        %2854 = vmatmul.bf16.gmra.mxu0 %v1977
        %v2855 = vpop.f32.mrf.mxu0
        %v2856 = vadd.f32 %v2807, %v2855
        %v2857 = vpop.f32.mrf.mxu0
        %v2858 = vadd.f32 %v2809, %v2857
        %2859 = vmatmul.bf16.gmra.mxu0 %v1982
        %v2860 = vpop.f32.mrf.mxu0
        %v2861 = vadd.f32 %v2812, %v2860
        %v2862 = vpop.f32.mrf.mxu0
        %v2863 = vadd.f32 %v2814, %v2862
        %2864 = vmatmul.bf16.gmra.mxu0 %v1987
        %v2865 = vpop.f32.mrf.mxu0
        %v2866 = vadd.f32 %v2817, %v2865
        %v2867 = vpop.f32.mrf.mxu0
        %v2868 = vadd.f32 %v2819, %v2867
        %2869 = vmatmul.bf16.gmra.mxu0 %v1992
        %v2870 = vpop.f32.mrf.mxu0
        %v2871 = vadd.f32 %v2822, %v2870
        %v2872 = vpop.f32.mrf.mxu0
        %v2873 = vadd.f32 %v2824, %v2872
        %2874 = vmatmul.bf16.gmra.mxu0 %v1997
        %v2875 = vpop.f32.mrf.mxu0
        %v2876 = vadd.f32 %v2827, %v2875
        %v2877 = vpop.f32.mrf.mxu0
        %v2878 = vadd.f32 %v2829, %v2877
        %2879 = vdwg.mxu0
        %2880 = vmatpush.bf16.msra.mxu0 %v2358
        %2881 = vmatpush.bf16.msra.mxu0 %v2356
        %2882 = vmatpush.bf16.msra.mxu0 %v2354
        %2883 = vmatpush.bf16.msra.mxu0 %v2352
        %2884 = vmatpush.bf16.msra.mxu0 %v2350
        %2885 = vmatpush.bf16.msra.mxu0 %v2348
        %2886 = vmatpush.bf16.msra.mxu0 %v2346
        %2887 = vmatpush.bf16.msra.mxu0 %v2344
        %2888 = vmatmul.bf16.gmra.mxu0 %v1963
        %v2889 = vpop.f32.mrf.mxu0
        %v2890 = vadd.f32 %v2841, %v2889
        %v2891 = vpop.f32.mrf.mxu0
        %v2892 = vadd.f32 %v2843, %v2891
        %2893 = vmatmul.bf16.gmra.mxu0 %v1968
        %v2894 = vpop.f32.mrf.mxu0
        %v2895 = vadd.f32 %v2846, %v2894
        %v2896 = vpop.f32.mrf.mxu0
        %v2897 = vadd.f32 %v2848, %v2896
        %2898 = vmatmul.bf16.gmra.mxu0 %v1973
        %v2899 = vpop.f32.mrf.mxu0
        %v2900 = vadd.f32 %v2851, %v2899
        %v2901 = vpop.f32.mrf.mxu0
        %v2902 = vadd.f32 %v2853, %v2901
        %2903 = vmatmul.bf16.gmra.mxu0 %v1978
        %v2904 = vpop.f32.mrf.mxu0
        %v2905 = vadd.f32 %v2856, %v2904
        %v2906 = vpop.f32.mrf.mxu0
        %v2907 = vadd.f32 %v2858, %v2906
        %2908 = vmatmul.bf16.gmra.mxu0 %v1983
        %v2909 = vpop.f32.mrf.mxu0
        %v2910 = vadd.f32 %v2861, %v2909
        %v2911 = vpop.f32.mrf.mxu0
        %v2912 = vadd.f32 %v2863, %v2911
        %2913 = vmatmul.bf16.gmra.mxu0 %v1988
        %v2914 = vpop.f32.mrf.mxu0
        %v2915 = vadd.f32 %v2866, %v2914
        %v2916 = vpop.f32.mrf.mxu0
        %v2917 = vadd.f32 %v2868, %v2916
        %2918 = vmatmul.bf16.gmra.mxu0 %v1993
        %v2919 = vpop.f32.mrf.mxu0
        %v2920 = vadd.f32 %v2871, %v2919
        %v2921 = vpop.f32.mrf.mxu0
        %v2922 = vadd.f32 %v2873, %v2921
        %2923 = vmatmul.bf16.gmra.mxu0 %v1998
        %v2924 = vpop.f32.mrf.mxu0
        %v2925 = vadd.f32 %v2876, %v2924
        %v2926 = vpop.f32.mrf.mxu0
        %v2927 = vadd.f32 %v2878, %v2926
        %2928 = vdwg.mxu0
        %v2929 = vmax.f32 %v2645, 0.0
        %v2930 = vmax.f32 %v2890, 0.0
        %v2931 = vmax.f32 %v2647, 0.0
        %v2932 = vmax.f32 %v2892, 0.0
        %v2933 = vmax.f32 %v2650, 0.0
        %v2934 = vmax.f32 %v2895, 0.0
        %v2935 = vmax.f32 %v2652, 0.0
        %v2936 = vmax.f32 %v2897, 0.0
        %v2937 = vmax.f32 %v2655, 0.0
        %v2938 = vmax.f32 %v2900, 0.0
        %v2939 = vmax.f32 %v2657, 0.0
        %v2940 = vmax.f32 %v2902, 0.0
        %v2941 = vmax.f32 %v2660, 0.0
        %v2942 = vmax.f32 %v2905, 0.0
        %v2943 = vmax.f32 %v2662, 0.0
        %v2944 = vmax.f32 %v2907, 0.0
        %v2945 = vmax.f32 %v2665, 0.0
        %v2946 = vmax.f32 %v2910, 0.0
        %v2947 = vmax.f32 %v2667, 0.0
        %v2948 = vmax.f32 %v2912, 0.0
        %v2949 = vmax.f32 %v2670, 0.0
        %v2950 = vmax.f32 %v2915, 0.0
        %v2951 = vmax.f32 %v2672, 0.0
        %v2952 = vmax.f32 %v2917, 0.0
        %v2953 = vmax.f32 %v2675, 0.0
        %v2954 = vmax.f32 %v2920, 0.0
        %v2955 = vmax.f32 %v2677, 0.0
        %v2956 = vmax.f32 %v2922, 0.0
        %v2957 = vmax.f32 %v2680, 0.0
        %v2958 = vmax.f32 %v2925, 0.0
        %v2959 = vmax.f32 %v2682, 0.0
        %v2960 = vmax.f32 %v2927, 0.0
        %v2961 = vpack.c.bf16 %v2930, %v2929
        %v2962 = vpack.c.bf16 %v2932, %v2931
        %v2963 = vpack.c.bf16 %v2934, %v2933
        %v2964 = vpack.c.bf16 %v2936, %v2935
        %v2965 = vpack.c.bf16 %v2938, %v2937
        %v2966 = vpack.c.bf16 %v2940, %v2939
        %v2967 = vpack.c.bf16 %v2942, %v2941
        %v2968 = vpack.c.bf16 %v2944, %v2943
        %v2969 = vpack.c.bf16 %v2946, %v2945
        %v2970 = vpack.c.bf16 %v2948, %v2947
        %v2971 = vpack.c.bf16 %v2950, %v2949
        %v2972 = vpack.c.bf16 %v2952, %v2951
        %v2973 = vpack.c.bf16 %v2954, %v2953
        %v2974 = vpack.c.bf16 %v2956, %v2955
        %v2975 = vpack.c.bf16 %v2958, %v2957
        %v2976 = vpack.c.bf16 %v2960, %v2959
        %2977 = vst [vmem:[#allocation3] sm:$0xff] %v2961
        %2978 = vst [vmem:[#allocation3 + $0x18] sm:$0xff] %v2962
        %2979 = vst [vmem:[#allocation3 + $0x30] sm:$0xff] %v2963
        %2980 = vst [vmem:[#allocation3 + $0x48] sm:$0xff] %v2964
        %2981 = vst [vmem:[#allocation3 + $0x60] sm:$0xff] %v2965
        %2982 = vst [vmem:[#allocation3 + $0x78] sm:$0xff] %v2966
        %2983 = vst [vmem:[#allocation3 + $0x90] sm:$0xff] %v2967
        %2984 = vst [vmem:[#allocation3 + $0xa8] sm:$0xff] %v2968
        %2985 = vst [vmem:[#allocation3 + $0xc0] sm:$0xff] %v2969
        %2986 = vst [vmem:[#allocation3 + $0xd8] sm:$0xff] %v2970
        %2987 = vst [vmem:[#allocation3 + $0xf0] sm:$0xff] %v2971
        %2988 = vst [vmem:[#allocation3 + $0x108] sm:$0xff] %v2972
        %2989 = vst [vmem:[#allocation3 + $0x120] sm:$0xff] %v2973
        %2990 = vst [vmem:[#allocation3 + $0x138] sm:$0xff] %v2974
        %2991 = vst [vmem:[#allocation3 + $0x150] sm:$0xff] %v2975
        %2992 = vst [vmem:[#allocation3 + $0x168] sm:$0xff] %v2976
        %v2994 = vshrl.u32 %v2961, 16
        %v2996 = vrot.slane %v2994, 4
        %v2997 = vshll.u32 %v2961, 16
        %v2999 = vrot.slane %v2997, 5
        %v3000 = vor.u32 %v2996, %v2999
        %v3001 = vrot.slane %v3000, 4
        %v3003 = vshll.u32 %v2962, 16
        %v3005 = vrot.slane %v3003, 5
        %v3006 = vsel %vm529, %v3001, %v3005
        %v3007 = vshrl.u32 %v2962, 16
        %v3009 = vrot.slane %v3007, 4
        %v3010 = vor.u32 %v3009, %v3005
        %v3011 = vrot.slane %v3010, 4
        %v3013 = vshll.u32 %v2963, 16
        %v3015 = vrot.slane %v3013, 5
        %v3016 = vsel %vm529, %v3011, %v3015
        %v3017 = vshrl.u32 %v2963, 16
        %v3019 = vrot.slane %v3017, 4
        %v3020 = vor.u32 %v3019, %v3015
        %v3021 = vrot.slane %v3020, 4
        %v3023 = vshll.u32 %v2964, 16
        %v3025 = vrot.slane %v3023, 5
        %v3026 = vsel %vm529, %v3021, %v3025
        %v3027 = vshrl.u32 %v2964, 16
        %v3029 = vrot.slane %v3027, 4
        %v3030 = vor.u32 %v3029, %v3025
        %v3031 = vrot.slane %v3030, 4
        %v3033 = vshll.u32 %v2965, 16
        %v3035 = vrot.slane %v3033, 5
        %v3036 = vsel %vm529, %v3031, %v3035
        %v3037 = vshrl.u32 %v2965, 16
        %v3039 = vrot.slane %v3037, 4
        %v3040 = vor.u32 %v3039, %v3035
        %v3041 = vrot.slane %v3040, 4
        %v3043 = vshll.u32 %v2966, 16
        %v3045 = vrot.slane %v3043, 5
        %v3046 = vsel %vm529, %v3041, %v3045
        %v3047 = vshrl.u32 %v2966, 16
        %v3049 = vrot.slane %v3047, 4
        %v3050 = vor.u32 %v3049, %v3045
        %v3051 = vrot.slane %v3050, 4
        %v3053 = vshll.u32 %v2967, 16
        %v3055 = vrot.slane %v3053, 5
        %v3056 = vsel %vm529, %v3051, %v3055
        %v3057 = vshrl.u32 %v2967, 16
        %v3059 = vrot.slane %v3057, 4
        %v3060 = vor.u32 %v3059, %v3055
        %v3061 = vrot.slane %v3060, 4
        %v3063 = vshll.u32 %v2968, 16
        %v3065 = vrot.slane %v3063, 5
        %v3066 = vsel %vm529, %v3061, %v3065
        %v3067 = vshrl.u32 %v2968, 16
        %v3069 = vrot.slane %v3067, 4
        %v3070 = vor.u32 %v3069, %v3065
        %v3071 = vrot.slane %v3070, 4
        %v3073 = vshll.u32 %v2969, 16
        %v3075 = vrot.slane %v3073, 5
        %v3076 = vsel %vm529, %v3071, %v3075
        %v3077 = vshrl.u32 %v2969, 16
        %v3079 = vrot.slane %v3077, 4
        %v3080 = vor.u32 %v3079, %v3075
        %v3081 = vrot.slane %v3080, 4
        %v3083 = vshll.u32 %v2970, 16
        %v3085 = vrot.slane %v3083, 5
        %v3086 = vsel %vm529, %v3081, %v3085
        %v3087 = vshrl.u32 %v2970, 16
        %v3089 = vrot.slane %v3087, 4
        %v3090 = vor.u32 %v3089, %v3085
        %v3091 = vrot.slane %v3090, 4
        %v3093 = vshll.u32 %v2971, 16
        %v3095 = vrot.slane %v3093, 5
        %v3096 = vsel %vm529, %v3091, %v3095
        %v3097 = vshrl.u32 %v2971, 16
        %v3099 = vrot.slane %v3097, 4
        %v3100 = vor.u32 %v3099, %v3095
        %v3101 = vrot.slane %v3100, 4
        %v3103 = vshll.u32 %v2972, 16
        %v3105 = vrot.slane %v3103, 5
        %v3106 = vsel %vm529, %v3101, %v3105
        %v3107 = vshrl.u32 %v2972, 16
        %v3109 = vrot.slane %v3107, 4
        %v3110 = vor.u32 %v3109, %v3105
        %v3111 = vrot.slane %v3110, 4
        %v3113 = vshll.u32 %v2973, 16
        %v3115 = vrot.slane %v3113, 5
        %v3116 = vsel %vm529, %v3111, %v3115
        %v3117 = vshrl.u32 %v2973, 16
        %v3119 = vrot.slane %v3117, 4
        %v3120 = vor.u32 %v3119, %v3115
        %v3121 = vrot.slane %v3120, 4
        %v3123 = vshll.u32 %v2974, 16
        %v3125 = vrot.slane %v3123, 5
        %v3126 = vsel %vm529, %v3121, %v3125
        %v3127 = vshrl.u32 %v2974, 16
        %v3129 = vrot.slane %v3127, 4
        %v3130 = vor.u32 %v3129, %v3125
        %v3131 = vrot.slane %v3130, 4
        %v3133 = vshll.u32 %v2975, 16
        %v3135 = vrot.slane %v3133, 5
        %v3136 = vsel %vm529, %v3131, %v3135
        %v3137 = vshrl.u32 %v2975, 16
        %v3139 = vrot.slane %v3137, 4
        %v3140 = vor.u32 %v3139, %v3135
        %v3141 = vrot.slane %v3140, 4
        %v3143 = vshll.u32 %v2976, 16
        %v3145 = vrot.slane %v3143, 5
        %v3146 = vsel %vm529, %v3141, %v3145
        %v3147 = vshrl.u32 %v2976, 16
        %v3149 = vrot.slane %v3147, 4
        %v3150 = vor.u32 %v3149, %v3145
        %v3151 = vrot.slane %v3150, 4
        %3168 = vst [vmem:[#allocation3 + $0x8] sm:$0xff] %v3006
        %3169 = vst [vmem:[#allocation3 + $0x20] sm:$0xff] %v3016
        %3170 = vst [vmem:[#allocation3 + $0x38] sm:$0xff] %v3026
        %3171 = vst [vmem:[#allocation3 + $0x50] sm:$0xff] %v3036
        %3172 = vst [vmem:[#allocation3 + $0x68] sm:$0xff] %v3046
        %3173 = vst [vmem:[#allocation3 + $0x80] sm:$0xff] %v3056
        %3174 = vst [vmem:[#allocation3 + $0x98] sm:$0xff] %v3066
        %3175 = vst [vmem:[#allocation3 + $0xb0] sm:$0xff] %v3076
        %3176 = vst [vmem:[#allocation3 + $0xc8] sm:$0xff] %v3086
        %3177 = vst [vmem:[#allocation3 + $0xe0] sm:$0xff] %v3096
        %3178 = vst [vmem:[#allocation3 + $0xf8] sm:$0xff] %v3106
        %3179 = vst [vmem:[#allocation3 + $0x110] sm:$0xff] %v3116
        %3180 = vst [vmem:[#allocation3 + $0x128] sm:$0xff] %v3126
        %3181 = vst [vmem:[#allocation3 + $0x140] sm:$0xff] %v3136
        %3182 = vst [vmem:[#allocation3 + $0x158] sm:$0xff] %v3146
        %vm3183 = vcmask 1047556
        %vm3184 = vsmask.f32 7424
        %vm3185 = vmand %vm3183, %vm3184
        %vm3186 = vmor %vm3185, %vm721
        %v3187 = vld [vmem:[#allocation3 + $0x170] sm:$0xff]
        %v3188 = vsel %vm3186, %v3151, %v3187
        %3189 = vst [vmem:[#allocation3 + $0x170] sm:$0xff] %v3188
        %v3206 = vrot.slane %v2961, 5
        %v3207 = vrot.slane %v3206, 4
        %v3208 = vrot.slane %v2962, 5
        %v3209 = vsel %vm743, %v3207, %v3208
        %v3210 = vrot.slane %v3208, 4
        %v3211 = vrot.slane %v2963, 5
        %v3212 = vsel %vm743, %v3210, %v3211
        %v3213 = vrot.slane %v3211, 4
        %v3214 = vrot.slane %v2964, 5
        %v3215 = vsel %vm743, %v3213, %v3214
        %v3216 = vrot.slane %v3214, 4
        %v3217 = vrot.slane %v2965, 5
        %v3218 = vsel %vm743, %v3216, %v3217
        %v3219 = vrot.slane %v3217, 4
        %v3220 = vrot.slane %v2966, 5
        %v3221 = vsel %vm743, %v3219, %v3220
        %v3222 = vrot.slane %v3220, 4
        %v3223 = vrot.slane %v2967, 5
        %v3224 = vsel %vm743, %v3222, %v3223
        %v3225 = vrot.slane %v3223, 4
        %v3226 = vrot.slane %v2968, 5
        %v3227 = vsel %vm743, %v3225, %v3226
        %v3228 = vrot.slane %v3226, 4
        %v3229 = vrot.slane %v2969, 5
        %v3230 = vsel %vm743, %v3228, %v3229
        %v3231 = vrot.slane %v3229, 4
        %v3232 = vrot.slane %v2970, 5
        %v3233 = vsel %vm743, %v3231, %v3232
        %v3234 = vrot.slane %v3232, 4
        %v3235 = vrot.slane %v2971, 5
        %v3236 = vsel %vm743, %v3234, %v3235
        %v3237 = vrot.slane %v3235, 4
        %v3238 = vrot.slane %v2972, 5
        %v3239 = vsel %vm743, %v3237, %v3238
        %v3240 = vrot.slane %v3238, 4
        %v3241 = vrot.slane %v2973, 5
        %v3242 = vsel %vm743, %v3240, %v3241
        %v3243 = vrot.slane %v3241, 4
        %v3244 = vrot.slane %v2974, 5
        %v3245 = vsel %vm743, %v3243, %v3244
        %v3246 = vrot.slane %v3244, 4
        %v3247 = vrot.slane %v2975, 5
        %v3248 = vsel %vm743, %v3246, %v3247
        %v3249 = vrot.slane %v3247, 4
        %v3250 = vrot.slane %v2976, 5
        %v3251 = vsel %vm743, %v3249, %v3250
        %v3252 = vrot.slane %v3250, 4
        %3269 = vst [vmem:[#allocation3 + $0x10] sm:$0xff] %v3209
        %3270 = vst [vmem:[#allocation3 + $0x28] sm:$0xff] %v3212
        %3271 = vst [vmem:[#allocation3 + $0x40] sm:$0xff] %v3215
        %3272 = vst [vmem:[#allocation3 + $0x58] sm:$0xff] %v3218
        %3273 = vst [vmem:[#allocation3 + $0x70] sm:$0xff] %v3221
        %3274 = vst [vmem:[#allocation3 + $0x88] sm:$0xff] %v3224
        %3275 = vst [vmem:[#allocation3 + $0xa0] sm:$0xff] %v3227
        %3276 = vst [vmem:[#allocation3 + $0xb8] sm:$0xff] %v3230
        %3277 = vst [vmem:[#allocation3 + $0xd0] sm:$0xff] %v3233
        %3278 = vst [vmem:[#allocation3 + $0xe8] sm:$0xff] %v3236
        %3279 = vst [vmem:[#allocation3 + $0x100] sm:$0xff] %v3239
        %3280 = vst [vmem:[#allocation3 + $0x118] sm:$0xff] %v3242
        %3281 = vst [vmem:[#allocation3 + $0x130] sm:$0xff] %v3245
        %3282 = vst [vmem:[#allocation3 + $0x148] sm:$0xff] %v3248
        %3283 = vst [vmem:[#allocation3 + $0x160] sm:$0xff] %v3251
        %3284 = vst [vmem:[#allocation3 + $0x178] sm:$0x77] %v3252
        %v3285 = vld [vmem:[#allocation2 + $0x140] sm:$0xff]
        %v3286 = vld [vmem:[#allocation2 + $0x148] sm:$0xff]
        %v3287 = vld [vmem:[#allocation2 + $0x150] sm:$0xf]
        %v3288 = vld [vmem:[#allocation2 + $0x154] sm:$0xff]
        %v3289 = vld [vmem:[#allocation2 + $0x15c] sm:$0xff]
        %v3290 = vld [vmem:[#allocation2 + $0x164] sm:$0xf]
        %v3291 = vld [vmem:[#allocation2 + $0x168] sm:$0xff]
        %v3292 = vld [vmem:[#allocation2 + $0x170] sm:$0xff]
        %v3293 = vld [vmem:[#allocation2 + $0x178] sm:$0xf]
        %v3294 = vld [vmem:[#allocation2 + $0x17c] sm:$0xff]
        %v3295 = vld [vmem:[#allocation2 + $0x184] sm:$0xff]
        %v3296 = vld [vmem:[#allocation2 + $0x18c] sm:$0xf]
        %v3297 = vld [vmem:[#allocation2 + $0x190] sm:$0xff]
        %v3298 = vld [vmem:[#allocation2 + $0x198] sm:$0xff]
        %v3299 = vld [vmem:[#allocation2 + $0x1a0] sm:$0xf]
        %v3300 = vld [vmem:[#allocation2 + $0x1a4] sm:$0xff]
        %v3301 = vld [vmem:[#allocation2 + $0x1ac] sm:$0xff]
        %v3302 = vld [vmem:[#allocation2 + $0x1b4] sm:$0xf]
        %v3303 = vld [vmem:[#allocation2 + $0x1b8] sm:$0xff]
        %v3304 = vld [vmem:[#allocation2 + $0x1c0] sm:$0xff]
        %v3305 = vld [vmem:[#allocation2 + $0x1c8] sm:$0xf]
        %v3306 = vld [vmem:[#allocation2 + $0x1cc] sm:$0xff]
        %v3307 = vld [vmem:[#allocation2 + $0x1d4] sm:$0xff]
        %v3308 = vld [vmem:[#allocation2 + $0x1dc] sm:$0xf]
        %v3309 = vld [vmem:[#allocation2 + $0x1e0] sm:$0xff]
        %v3310 = vld [vmem:[#allocation2 + $0x1e8] sm:$0xff]
        %v3311 = vld [vmem:[#allocation2 + $0x1f0] sm:$0xf]
        %v3312 = vld [vmem:[#allocation2 + $0x1f4] sm:$0xff]
        %v3313 = vld [vmem:[#allocation2 + $0x1fc] sm:$0xff]
        %v3314 = vld [vmem:[#allocation2 + $0x204] sm:$0xf]
        %v3315 = vld [vmem:[#allocation2 + $0x208] sm:$0xff]
        %v3316 = vld [vmem:[#allocation2 + $0x210] sm:$0xff]
        %v3317 = vld [vmem:[#allocation2 + $0x218] sm:$0xf]
        %v3318 = vld [vmem:[#allocation2 + $0x21c] sm:$0xff]
        %v3319 = vld [vmem:[#allocation2 + $0x224] sm:$0xff]
        %v3320 = vld [vmem:[#allocation2 + $0x22c] sm:$0xf]
        %v3321 = vld [vmem:[#allocation2 + $0x230] sm:$0xff]
        %v3322 = vld [vmem:[#allocation2 + $0x238] sm:$0xff]
        %v3323 = vld [vmem:[#allocation2 + $0x240] sm:$0xf]
        %v3324 = vld [vmem:[#allocation2 + $0x244] sm:$0xff]
        %v3325 = vld [vmem:[#allocation2 + $0x24c] sm:$0xff]
        %v3326 = vld [vmem:[#allocation2 + $0x254] sm:$0xf]
        %v3327 = vld [vmem:[#allocation2 + $0x258] sm:$0xff]
        %v3328 = vld [vmem:[#allocation2 + $0x260] sm:$0xff]
        %v3329 = vld [vmem:[#allocation2 + $0x268] sm:$0xf]
        %v3330 = vld [vmem:[#allocation2 + $0x26c] sm:$0xff]
        %v3331 = vld [vmem:[#allocation2 + $0x274] sm:$0xff]
        %v3332 = vld [vmem:[#allocation2 + $0x27c] sm:$0xf]
        %v3381 = vunpack.c.l.b16 %v3285
        %v3382 = vunpack.c.h.b16 %v3285
        %v3383 = vunpack.c.l.b16 %v3286
        %v3384 = vunpack.c.h.b16 %v3286
        %v3385 = vunpack.c.l.b16 %v3287
        %v3386 = vunpack.c.l.b16 %v3288
        %v3387 = vunpack.c.h.b16 %v3288
        %v3388 = vunpack.c.l.b16 %v3289
        %v3389 = vunpack.c.h.b16 %v3289
        %v3390 = vunpack.c.l.b16 %v3290
        %v3391 = vunpack.c.l.b16 %v3291
        %v3392 = vunpack.c.h.b16 %v3291
        %v3393 = vunpack.c.l.b16 %v3292
        %v3394 = vunpack.c.h.b16 %v3292
        %v3395 = vunpack.c.l.b16 %v3293
        %v3396 = vunpack.c.l.b16 %v3294
        %v3397 = vunpack.c.h.b16 %v3294
        %v3398 = vunpack.c.l.b16 %v3295
        %v3399 = vunpack.c.h.b16 %v3295
        %v3400 = vunpack.c.l.b16 %v3296
        %v3401 = vunpack.c.l.b16 %v3297
        %v3402 = vunpack.c.h.b16 %v3297
        %v3403 = vunpack.c.l.b16 %v3298
        %v3404 = vunpack.c.h.b16 %v3298
        %v3405 = vunpack.c.l.b16 %v3299
        %v3406 = vunpack.c.l.b16 %v3300
        %v3407 = vunpack.c.h.b16 %v3300
        %v3408 = vunpack.c.l.b16 %v3301
        %v3409 = vunpack.c.h.b16 %v3301
        %v3410 = vunpack.c.l.b16 %v3302
        %v3411 = vunpack.c.l.b16 %v3303
        %v3412 = vunpack.c.h.b16 %v3303
        %v3413 = vunpack.c.l.b16 %v3304
        %v3414 = vunpack.c.h.b16 %v3304
        %v3415 = vunpack.c.l.b16 %v3305
        %v3416 = vunpack.c.l.b16 %v3306
        %v3417 = vunpack.c.h.b16 %v3306
        %v3418 = vunpack.c.l.b16 %v3307
        %v3419 = vunpack.c.h.b16 %v3307
        %v3420 = vunpack.c.l.b16 %v3308
        %v3421 = vunpack.c.l.b16 %v3309
        %v3422 = vunpack.c.h.b16 %v3309
        %v3423 = vunpack.c.l.b16 %v3310
        %v3424 = vunpack.c.h.b16 %v3310
        %v3425 = vunpack.c.l.b16 %v3311
        %v3426 = vunpack.c.l.b16 %v3312
        %v3427 = vunpack.c.h.b16 %v3312
        %v3428 = vunpack.c.l.b16 %v3313
        %v3429 = vunpack.c.h.b16 %v3313
        %v3430 = vunpack.c.l.b16 %v3314
        %v3431 = vunpack.c.l.b16 %v3315
        %v3432 = vunpack.c.h.b16 %v3315
        %v3433 = vunpack.c.l.b16 %v3316
        %v3434 = vunpack.c.h.b16 %v3316
        %v3435 = vunpack.c.l.b16 %v3317
        %v3436 = vunpack.c.l.b16 %v3318
        %v3437 = vunpack.c.h.b16 %v3318
        %v3438 = vunpack.c.l.b16 %v3319
        %v3439 = vunpack.c.h.b16 %v3319
        %v3440 = vunpack.c.l.b16 %v3320
        %v3441 = vunpack.c.l.b16 %v3321
        %v3442 = vunpack.c.h.b16 %v3321
        %v3443 = vunpack.c.l.b16 %v3322
        %v3444 = vunpack.c.h.b16 %v3322
        %v3445 = vunpack.c.l.b16 %v3323
        %v3446 = vunpack.c.l.b16 %v3324
        %v3447 = vunpack.c.h.b16 %v3324
        %v3448 = vunpack.c.l.b16 %v3325
        %v3449 = vunpack.c.h.b16 %v3325
        %v3450 = vunpack.c.l.b16 %v3326
        %v3451 = vunpack.c.l.b16 %v3327
        %v3452 = vunpack.c.h.b16 %v3327
        %v3453 = vunpack.c.l.b16 %v3328
        %v3454 = vunpack.c.h.b16 %v3328
        %v3455 = vunpack.c.l.b16 %v3329
        %v3456 = vunpack.c.l.b16 %v3330
        %v3457 = vunpack.c.h.b16 %v3330
        %v3458 = vunpack.c.l.b16 %v3331
        %v3459 = vunpack.c.h.b16 %v3331
        %v3460 = vunpack.c.l.b16 %v3332
        %v3461 = vpack.c.b16 %v3386, %v3381
        %v3462 = vpack.c.b16 %v3387, %v3382
        %v3463 = vpack.c.b16 %v3388, %v3383
        %v3464 = vpack.c.b16 %v3389, %v3384
        %v3465 = vpack.c.b16 %v3390, %v3385
        %v3466 = vpack.c.b16 %v3396, %v3391
        %v3467 = vpack.c.b16 %v3397, %v3392
        %v3468 = vpack.c.b16 %v3398, %v3393
        %v3469 = vpack.c.b16 %v3399, %v3394
        %v3470 = vpack.c.b16 %v3400, %v3395
        %v3471 = vpack.c.b16 %v3406, %v3401
        %v3472 = vpack.c.b16 %v3407, %v3402
        %v3473 = vpack.c.b16 %v3408, %v3403
        %v3474 = vpack.c.b16 %v3409, %v3404
        %v3475 = vpack.c.b16 %v3410, %v3405
        %v3476 = vpack.c.b16 %v3416, %v3411
        %v3477 = vpack.c.b16 %v3417, %v3412
        %v3478 = vpack.c.b16 %v3418, %v3413
        %v3479 = vpack.c.b16 %v3419, %v3414
        %v3480 = vpack.c.b16 %v3420, %v3415
        %v3481 = vpack.c.b16 %v3426, %v3421
        %v3482 = vpack.c.b16 %v3427, %v3422
        %v3483 = vpack.c.b16 %v3428, %v3423
        %v3484 = vpack.c.b16 %v3429, %v3424
        %v3485 = vpack.c.b16 %v3430, %v3425
        %v3486 = vpack.c.b16 %v3436, %v3431
        %v3487 = vpack.c.b16 %v3437, %v3432
        %v3488 = vpack.c.b16 %v3438, %v3433
        %v3489 = vpack.c.b16 %v3439, %v3434
        %v3490 = vpack.c.b16 %v3440, %v3435
        %v3491 = vpack.c.b16 %v3446, %v3441
        %v3492 = vpack.c.b16 %v3447, %v3442
        %v3493 = vpack.c.b16 %v3448, %v3443
        %v3494 = vpack.c.b16 %v3449, %v3444
        %v3495 = vpack.c.b16 %v3450, %v3445
        %v3496 = vpack.c.b16 %v3456, %v3451
        %v3497 = vpack.c.b16 %v3457, %v3452
        %v3498 = vpack.c.b16 %v3458, %v3453
        %v3499 = vpack.c.b16 %v3459, %v3454
        %v3500 = vpack.c.b16 %v3460, %v3455
        %3541 = vmatpush.bf16.msra.mxu0 %v2293
        %3542 = vmatpush.bf16.msra.mxu0 %v2291
        %3543 = vmatpush.bf16.msra.mxu0 %v2289
        %3544 = vmatpush.bf16.msra.mxu0 %v2287
        %3545 = vmatpush.bf16.msra.mxu0 %v2285
        %3546 = vmatpush.bf16.msra.mxu0 %v2283
        %3547 = vmatpush.bf16.msra.mxu0 %v2281
        %3548 = vmatpush.bf16.msra.mxu0 %v2279
        %3549 = vmatmul.bf16.gmra.mxu0 %v3461
        %v3550 = vpop.f32.mrf.mxu0
        %v3551 = vadd.f32 %v1827, %v3550
        %v3552 = vpop.f32.mrf.mxu0
        %v3553 = vadd.f32 %v1827, %v3552
        %3554 = vmatmul.bf16.gmra.mxu0 %v3466
        %v3555 = vpop.f32.mrf.mxu0
        %v3556 = vadd.f32 %v1827, %v3555
        %v3557 = vpop.f32.mrf.mxu0
        %v3558 = vadd.f32 %v1827, %v3557
        %3559 = vmatmul.bf16.gmra.mxu0 %v3471
        %v3560 = vpop.f32.mrf.mxu0
        %v3561 = vadd.f32 %v1827, %v3560
        %v3562 = vpop.f32.mrf.mxu0
        %v3563 = vadd.f32 %v1827, %v3562
        %3564 = vmatmul.bf16.gmra.mxu0 %v3476
        %v3565 = vpop.f32.mrf.mxu0
        %v3566 = vadd.f32 %v1827, %v3565
        %v3567 = vpop.f32.mrf.mxu0
        %v3568 = vadd.f32 %v1827, %v3567
        %3569 = vmatmul.bf16.gmra.mxu0 %v3481
        %v3570 = vpop.f32.mrf.mxu0
        %v3571 = vadd.f32 %v1827, %v3570
        %v3572 = vpop.f32.mrf.mxu0
        %v3573 = vadd.f32 %v1827, %v3572
        %3574 = vmatmul.bf16.gmra.mxu0 %v3486
        %v3575 = vpop.f32.mrf.mxu0
        %v3576 = vadd.f32 %v1827, %v3575
        %v3577 = vpop.f32.mrf.mxu0
        %v3578 = vadd.f32 %v1827, %v3577
        %3579 = vmatmul.bf16.gmra.mxu0 %v3491
        %v3580 = vpop.f32.mrf.mxu0
        %v3581 = vadd.f32 %v1827, %v3580
        %v3582 = vpop.f32.mrf.mxu0
        %v3583 = vadd.f32 %v1827, %v3582
        %3584 = vmatmul.bf16.gmra.mxu0 %v3496
        %v3585 = vpop.f32.mrf.mxu0
        %v3586 = vadd.f32 %v1827, %v3585
        %v3587 = vpop.f32.mrf.mxu0
        %v3588 = vadd.f32 %v1827, %v3587
        %3589 = vdwg.mxu0
        %3590 = vmatpush.bf16.msra.mxu0 %v2309
        %3591 = vmatpush.bf16.msra.mxu0 %v2307
        %3592 = vmatpush.bf16.msra.mxu0 %v2305
        %3593 = vmatpush.bf16.msra.mxu0 %v2303
        %3594 = vmatpush.bf16.msra.mxu0 %v2301
        %3595 = vmatpush.bf16.msra.mxu0 %v2299
        %3596 = vmatpush.bf16.msra.mxu0 %v2297
        %3597 = vmatpush.bf16.msra.mxu0 %v2295
        %3598 = vmatmul.bf16.gmra.mxu0 %v3462
        %v3599 = vpop.f32.mrf.mxu0
        %v3600 = vadd.f32 %v3551, %v3599
        %v3601 = vpop.f32.mrf.mxu0
        %v3602 = vadd.f32 %v3553, %v3601
        %3603 = vmatmul.bf16.gmra.mxu0 %v3467
        %v3604 = vpop.f32.mrf.mxu0
        %v3605 = vadd.f32 %v3556, %v3604
        %v3606 = vpop.f32.mrf.mxu0
        %v3607 = vadd.f32 %v3558, %v3606
        %3608 = vmatmul.bf16.gmra.mxu0 %v3472
        %v3609 = vpop.f32.mrf.mxu0
        %v3610 = vadd.f32 %v3561, %v3609
        %v3611 = vpop.f32.mrf.mxu0
        %v3612 = vadd.f32 %v3563, %v3611
        %3613 = vmatmul.bf16.gmra.mxu0 %v3477
        %v3614 = vpop.f32.mrf.mxu0
        %v3615 = vadd.f32 %v3566, %v3614
        %v3616 = vpop.f32.mrf.mxu0
        %v3617 = vadd.f32 %v3568, %v3616
        %3618 = vmatmul.bf16.gmra.mxu0 %v3482
        %v3619 = vpop.f32.mrf.mxu0
        %v3620 = vadd.f32 %v3571, %v3619
        %v3621 = vpop.f32.mrf.mxu0
        %v3622 = vadd.f32 %v3573, %v3621
        %3623 = vmatmul.bf16.gmra.mxu0 %v3487
        %v3624 = vpop.f32.mrf.mxu0
        %v3625 = vadd.f32 %v3576, %v3624
        %v3626 = vpop.f32.mrf.mxu0
        %v3627 = vadd.f32 %v3578, %v3626
        %3628 = vmatmul.bf16.gmra.mxu0 %v3492
        %v3629 = vpop.f32.mrf.mxu0
        %v3630 = vadd.f32 %v3581, %v3629
        %v3631 = vpop.f32.mrf.mxu0
        %v3632 = vadd.f32 %v3583, %v3631
        %3633 = vmatmul.bf16.gmra.mxu0 %v3497
        %v3634 = vpop.f32.mrf.mxu0
        %v3635 = vadd.f32 %v3586, %v3634
        %v3636 = vpop.f32.mrf.mxu0
        %v3637 = vadd.f32 %v3588, %v3636
        %3638 = vdwg.mxu0
        %3639 = vmatpush.bf16.msra.mxu0 %v2325
        %3640 = vmatpush.bf16.msra.mxu0 %v2323
        %3641 = vmatpush.bf16.msra.mxu0 %v2321
        %3642 = vmatpush.bf16.msra.mxu0 %v2319
        %3643 = vmatpush.bf16.msra.mxu0 %v2317
        %3644 = vmatpush.bf16.msra.mxu0 %v2315
        %3645 = vmatpush.bf16.msra.mxu0 %v2313
        %3646 = vmatpush.bf16.msra.mxu0 %v2311
        %3647 = vmatmul.bf16.gmra.mxu0 %v3463
        %v3648 = vpop.f32.mrf.mxu0
        %v3649 = vadd.f32 %v3600, %v3648
        %v3650 = vpop.f32.mrf.mxu0
        %v3651 = vadd.f32 %v3602, %v3650
        %3652 = vmatmul.bf16.gmra.mxu0 %v3468
        %v3653 = vpop.f32.mrf.mxu0
        %v3654 = vadd.f32 %v3605, %v3653
        %v3655 = vpop.f32.mrf.mxu0
        %v3656 = vadd.f32 %v3607, %v3655
        %3657 = vmatmul.bf16.gmra.mxu0 %v3473
        %v3658 = vpop.f32.mrf.mxu0
        %v3659 = vadd.f32 %v3610, %v3658
        %v3660 = vpop.f32.mrf.mxu0
        %v3661 = vadd.f32 %v3612, %v3660
        %3662 = vmatmul.bf16.gmra.mxu0 %v3478
        %v3663 = vpop.f32.mrf.mxu0
        %v3664 = vadd.f32 %v3615, %v3663
        %v3665 = vpop.f32.mrf.mxu0
        %v3666 = vadd.f32 %v3617, %v3665
        %3667 = vmatmul.bf16.gmra.mxu0 %v3483
        %v3668 = vpop.f32.mrf.mxu0
        %v3669 = vadd.f32 %v3620, %v3668
        %v3670 = vpop.f32.mrf.mxu0
        %v3671 = vadd.f32 %v3622, %v3670
        %3672 = vmatmul.bf16.gmra.mxu0 %v3488
        %v3673 = vpop.f32.mrf.mxu0
        %v3674 = vadd.f32 %v3625, %v3673
        %v3675 = vpop.f32.mrf.mxu0
        %v3676 = vadd.f32 %v3627, %v3675
        %3677 = vmatmul.bf16.gmra.mxu0 %v3493
        %v3678 = vpop.f32.mrf.mxu0
        %v3679 = vadd.f32 %v3630, %v3678
        %v3680 = vpop.f32.mrf.mxu0
        %v3681 = vadd.f32 %v3632, %v3680
        %3682 = vmatmul.bf16.gmra.mxu0 %v3498
        %v3683 = vpop.f32.mrf.mxu0
        %v3684 = vadd.f32 %v3635, %v3683
        %v3685 = vpop.f32.mrf.mxu0
        %v3686 = vadd.f32 %v3637, %v3685
        %3687 = vdwg.mxu0
        %3688 = vmatpush.bf16.msra.mxu0 %v2341
        %3689 = vmatpush.bf16.msra.mxu0 %v2339
        %3690 = vmatpush.bf16.msra.mxu0 %v2337
        %3691 = vmatpush.bf16.msra.mxu0 %v2335
        %3692 = vmatpush.bf16.msra.mxu0 %v2333
        %3693 = vmatpush.bf16.msra.mxu0 %v2331
        %3694 = vmatpush.bf16.msra.mxu0 %v2329
        %3695 = vmatpush.bf16.msra.mxu0 %v2327
        %3696 = vmatmul.bf16.gmra.mxu0 %v3464
        %v3697 = vpop.f32.mrf.mxu0
        %v3698 = vadd.f32 %v3649, %v3697
        %v3699 = vpop.f32.mrf.mxu0
        %v3700 = vadd.f32 %v3651, %v3699
        %3701 = vmatmul.bf16.gmra.mxu0 %v3469
        %v3702 = vpop.f32.mrf.mxu0
        %v3703 = vadd.f32 %v3654, %v3702
        %v3704 = vpop.f32.mrf.mxu0
        %v3705 = vadd.f32 %v3656, %v3704
        %3706 = vmatmul.bf16.gmra.mxu0 %v3474
        %v3707 = vpop.f32.mrf.mxu0
        %v3708 = vadd.f32 %v3659, %v3707
        %v3709 = vpop.f32.mrf.mxu0
        %v3710 = vadd.f32 %v3661, %v3709
        %3711 = vmatmul.bf16.gmra.mxu0 %v3479
        %v3712 = vpop.f32.mrf.mxu0
        %v3713 = vadd.f32 %v3664, %v3712
        %v3714 = vpop.f32.mrf.mxu0
        %v3715 = vadd.f32 %v3666, %v3714
        %3716 = vmatmul.bf16.gmra.mxu0 %v3484
        %v3717 = vpop.f32.mrf.mxu0
        %v3718 = vadd.f32 %v3669, %v3717
        %v3719 = vpop.f32.mrf.mxu0
        %v3720 = vadd.f32 %v3671, %v3719
        %3721 = vmatmul.bf16.gmra.mxu0 %v3489
        %v3722 = vpop.f32.mrf.mxu0
        %v3723 = vadd.f32 %v3674, %v3722
        %v3724 = vpop.f32.mrf.mxu0
        %v3725 = vadd.f32 %v3676, %v3724
        %3726 = vmatmul.bf16.gmra.mxu0 %v3494
        %v3727 = vpop.f32.mrf.mxu0
        %v3728 = vadd.f32 %v3679, %v3727
        %v3729 = vpop.f32.mrf.mxu0
        %v3730 = vadd.f32 %v3681, %v3729
        %3731 = vmatmul.bf16.gmra.mxu0 %v3499
        %v3732 = vpop.f32.mrf.mxu0
        %v3733 = vadd.f32 %v3684, %v3732
        %v3734 = vpop.f32.mrf.mxu0
        %v3735 = vadd.f32 %v3686, %v3734
        %3736 = vdwg.mxu0
        %3737 = vmatpush.bf16.msra.mxu0 %v2357
        %3738 = vmatpush.bf16.msra.mxu0 %v2355
        %3739 = vmatpush.bf16.msra.mxu0 %v2353
        %3740 = vmatpush.bf16.msra.mxu0 %v2351
        %3741 = vmatpush.bf16.msra.mxu0 %v2349
        %3742 = vmatpush.bf16.msra.mxu0 %v2347
        %3743 = vmatpush.bf16.msra.mxu0 %v2345
        %3744 = vmatpush.bf16.msra.mxu0 %v2343
        %3745 = vmatmul.bf16.gmra.mxu0 %v3465
        %v3746 = vpop.f32.mrf.mxu0
        %v3747 = vadd.f32 %v3698, %v3746
        %v3748 = vpop.f32.mrf.mxu0
        %v3749 = vadd.f32 %v3700, %v3748
        %3750 = vmatmul.bf16.gmra.mxu0 %v3470
        %v3751 = vpop.f32.mrf.mxu0
        %v3752 = vadd.f32 %v3703, %v3751
        %v3753 = vpop.f32.mrf.mxu0
        %v3754 = vadd.f32 %v3705, %v3753
        %3755 = vmatmul.bf16.gmra.mxu0 %v3475
        %v3756 = vpop.f32.mrf.mxu0
        %v3757 = vadd.f32 %v3708, %v3756
        %v3758 = vpop.f32.mrf.mxu0
        %v3759 = vadd.f32 %v3710, %v3758
        %3760 = vmatmul.bf16.gmra.mxu0 %v3480
        %v3761 = vpop.f32.mrf.mxu0
        %v3762 = vadd.f32 %v3713, %v3761
        %v3763 = vpop.f32.mrf.mxu0
        %v3764 = vadd.f32 %v3715, %v3763
        %3765 = vmatmul.bf16.gmra.mxu0 %v3485
        %v3766 = vpop.f32.mrf.mxu0
        %v3767 = vadd.f32 %v3718, %v3766
        %v3768 = vpop.f32.mrf.mxu0
        %v3769 = vadd.f32 %v3720, %v3768
        %3770 = vmatmul.bf16.gmra.mxu0 %v3490
        %v3771 = vpop.f32.mrf.mxu0
        %v3772 = vadd.f32 %v3723, %v3771
        %v3773 = vpop.f32.mrf.mxu0
        %v3774 = vadd.f32 %v3725, %v3773
        %3775 = vmatmul.bf16.gmra.mxu0 %v3495
        %v3776 = vpop.f32.mrf.mxu0
        %v3777 = vadd.f32 %v3728, %v3776
        %v3778 = vpop.f32.mrf.mxu0
        %v3779 = vadd.f32 %v3730, %v3778
        %3780 = vmatmul.bf16.gmra.mxu0 %v3500
        %v3781 = vpop.f32.mrf.mxu0
        %v3782 = vadd.f32 %v3733, %v3781
        %v3783 = vpop.f32.mrf.mxu0
        %v3784 = vadd.f32 %v3735, %v3783
        %3785 = vdwg.mxu0
        %3786 = vmatpush.bf16.msra.mxu0 %v2294
        %3787 = vmatpush.bf16.msra.mxu0 %v2292
        %3788 = vmatpush.bf16.msra.mxu0 %v2290
        %3789 = vmatpush.bf16.msra.mxu0 %v2288
        %3790 = vmatpush.bf16.msra.mxu0 %v2286
        %3791 = vmatpush.bf16.msra.mxu0 %v2284
        %3792 = vmatpush.bf16.msra.mxu0 %v2282
        %3793 = vmatpush.bf16.msra.mxu0 %v2280
        %3794 = vmatmul.bf16.gmra.mxu0 %v3461
        %v3795 = vpop.f32.mrf.mxu0
        %v3796 = vadd.f32 %v1828, %v3795
        %v3797 = vpop.f32.mrf.mxu0
        %v3798 = vadd.f32 %v1828, %v3797
        %3799 = vmatmul.bf16.gmra.mxu0 %v3466
        %v3800 = vpop.f32.mrf.mxu0
        %v3801 = vadd.f32 %v1828, %v3800
        %v3802 = vpop.f32.mrf.mxu0
        %v3803 = vadd.f32 %v1828, %v3802
        %3804 = vmatmul.bf16.gmra.mxu0 %v3471
        %v3805 = vpop.f32.mrf.mxu0
        %v3806 = vadd.f32 %v1828, %v3805
        %v3807 = vpop.f32.mrf.mxu0
        %v3808 = vadd.f32 %v1828, %v3807
        %3809 = vmatmul.bf16.gmra.mxu0 %v3476
        %v3810 = vpop.f32.mrf.mxu0
        %v3811 = vadd.f32 %v1828, %v3810
        %v3812 = vpop.f32.mrf.mxu0
        %v3813 = vadd.f32 %v1828, %v3812
        %3814 = vmatmul.bf16.gmra.mxu0 %v3481
        %v3815 = vpop.f32.mrf.mxu0
        %v3816 = vadd.f32 %v1828, %v3815
        %v3817 = vpop.f32.mrf.mxu0
        %v3818 = vadd.f32 %v1828, %v3817
        %3819 = vmatmul.bf16.gmra.mxu0 %v3486
        %v3820 = vpop.f32.mrf.mxu0
        %v3821 = vadd.f32 %v1828, %v3820
        %v3822 = vpop.f32.mrf.mxu0
        %v3823 = vadd.f32 %v1828, %v3822
        %3824 = vmatmul.bf16.gmra.mxu0 %v3491
        %v3825 = vpop.f32.mrf.mxu0
        %v3826 = vadd.f32 %v1828, %v3825
        %v3827 = vpop.f32.mrf.mxu0
        %v3828 = vadd.f32 %v1828, %v3827
        %3829 = vmatmul.bf16.gmra.mxu0 %v3496
        %v3830 = vpop.f32.mrf.mxu0
        %v3831 = vadd.f32 %v1828, %v3830
        %v3832 = vpop.f32.mrf.mxu0
        %v3833 = vadd.f32 %v1828, %v3832
        %3834 = vdwg.mxu0
        %3835 = vmatpush.bf16.msra.mxu0 %v2310
        %3836 = vmatpush.bf16.msra.mxu0 %v2308
        %3837 = vmatpush.bf16.msra.mxu0 %v2306
        %3838 = vmatpush.bf16.msra.mxu0 %v2304
        %3839 = vmatpush.bf16.msra.mxu0 %v2302
        %3840 = vmatpush.bf16.msra.mxu0 %v2300
        %3841 = vmatpush.bf16.msra.mxu0 %v2298
        %3842 = vmatpush.bf16.msra.mxu0 %v2296
        %3843 = vmatmul.bf16.gmra.mxu0 %v3462
        %v3844 = vpop.f32.mrf.mxu0
        %v3845 = vadd.f32 %v3796, %v3844
        %v3846 = vpop.f32.mrf.mxu0
        %v3847 = vadd.f32 %v3798, %v3846
        %3848 = vmatmul.bf16.gmra.mxu0 %v3467
        %v3849 = vpop.f32.mrf.mxu0
        %v3850 = vadd.f32 %v3801, %v3849
        %v3851 = vpop.f32.mrf.mxu0
        %v3852 = vadd.f32 %v3803, %v3851
        %3853 = vmatmul.bf16.gmra.mxu0 %v3472
        %v3854 = vpop.f32.mrf.mxu0
        %v3855 = vadd.f32 %v3806, %v3854
        %v3856 = vpop.f32.mrf.mxu0
        %v3857 = vadd.f32 %v3808, %v3856
        %3858 = vmatmul.bf16.gmra.mxu0 %v3477
        %v3859 = vpop.f32.mrf.mxu0
        %v3860 = vadd.f32 %v3811, %v3859
        %v3861 = vpop.f32.mrf.mxu0
        %v3862 = vadd.f32 %v3813, %v3861
        %3863 = vmatmul.bf16.gmra.mxu0 %v3482
        %v3864 = vpop.f32.mrf.mxu0
        %v3865 = vadd.f32 %v3816, %v3864
        %v3866 = vpop.f32.mrf.mxu0
        %v3867 = vadd.f32 %v3818, %v3866
        %3868 = vmatmul.bf16.gmra.mxu0 %v3487
        %v3869 = vpop.f32.mrf.mxu0
        %v3870 = vadd.f32 %v3821, %v3869
        %v3871 = vpop.f32.mrf.mxu0
        %v3872 = vadd.f32 %v3823, %v3871
        %3873 = vmatmul.bf16.gmra.mxu0 %v3492
        %v3874 = vpop.f32.mrf.mxu0
        %v3875 = vadd.f32 %v3826, %v3874
        %v3876 = vpop.f32.mrf.mxu0
        %v3877 = vadd.f32 %v3828, %v3876
        %3878 = vmatmul.bf16.gmra.mxu0 %v3497
        %v3879 = vpop.f32.mrf.mxu0
        %v3880 = vadd.f32 %v3831, %v3879
        %v3881 = vpop.f32.mrf.mxu0
        %v3882 = vadd.f32 %v3833, %v3881
        %3883 = vdwg.mxu0
        %3884 = vmatpush.bf16.msra.mxu0 %v2326
        %3885 = vmatpush.bf16.msra.mxu0 %v2324
        %3886 = vmatpush.bf16.msra.mxu0 %v2322
        %3887 = vmatpush.bf16.msra.mxu0 %v2320
        %3888 = vmatpush.bf16.msra.mxu0 %v2318
        %3889 = vmatpush.bf16.msra.mxu0 %v2316
        %3890 = vmatpush.bf16.msra.mxu0 %v2314
        %3891 = vmatpush.bf16.msra.mxu0 %v2312
        %3892 = vmatmul.bf16.gmra.mxu0 %v3463
        %v3893 = vpop.f32.mrf.mxu0
        %v3894 = vadd.f32 %v3845, %v3893
        %v3895 = vpop.f32.mrf.mxu0
        %v3896 = vadd.f32 %v3847, %v3895
        %3897 = vmatmul.bf16.gmra.mxu0 %v3468
        %v3898 = vpop.f32.mrf.mxu0
        %v3899 = vadd.f32 %v3850, %v3898
        %v3900 = vpop.f32.mrf.mxu0
        %v3901 = vadd.f32 %v3852, %v3900
        %3902 = vmatmul.bf16.gmra.mxu0 %v3473
        %v3903 = vpop.f32.mrf.mxu0
        %v3904 = vadd.f32 %v3855, %v3903
        %v3905 = vpop.f32.mrf.mxu0
        %v3906 = vadd.f32 %v3857, %v3905
        %3907 = vmatmul.bf16.gmra.mxu0 %v3478
        %v3908 = vpop.f32.mrf.mxu0
        %v3909 = vadd.f32 %v3860, %v3908
        %v3910 = vpop.f32.mrf.mxu0
        %v3911 = vadd.f32 %v3862, %v3910
        %3912 = vmatmul.bf16.gmra.mxu0 %v3483
        %v3913 = vpop.f32.mrf.mxu0
        %v3914 = vadd.f32 %v3865, %v3913
        %v3915 = vpop.f32.mrf.mxu0
        %v3916 = vadd.f32 %v3867, %v3915
        %3917 = vmatmul.bf16.gmra.mxu0 %v3488
        %v3918 = vpop.f32.mrf.mxu0
        %v3919 = vadd.f32 %v3870, %v3918
        %v3920 = vpop.f32.mrf.mxu0
        %v3921 = vadd.f32 %v3872, %v3920
        %3922 = vmatmul.bf16.gmra.mxu0 %v3493
        %v3923 = vpop.f32.mrf.mxu0
        %v3924 = vadd.f32 %v3875, %v3923
        %v3925 = vpop.f32.mrf.mxu0
        %v3926 = vadd.f32 %v3877, %v3925
        %3927 = vmatmul.bf16.gmra.mxu0 %v3498
        %v3928 = vpop.f32.mrf.mxu0
        %v3929 = vadd.f32 %v3880, %v3928
        %v3930 = vpop.f32.mrf.mxu0
        %v3931 = vadd.f32 %v3882, %v3930
        %3932 = vdwg.mxu0
        %3933 = vmatpush.bf16.msra.mxu0 %v2342
        %3934 = vmatpush.bf16.msra.mxu0 %v2340
        %3935 = vmatpush.bf16.msra.mxu0 %v2338
        %3936 = vmatpush.bf16.msra.mxu0 %v2336
        %3937 = vmatpush.bf16.msra.mxu0 %v2334
        %3938 = vmatpush.bf16.msra.mxu0 %v2332
        %3939 = vmatpush.bf16.msra.mxu0 %v2330
        %3940 = vmatpush.bf16.msra.mxu0 %v2328
        %3941 = vmatmul.bf16.gmra.mxu0 %v3464
        %v3942 = vpop.f32.mrf.mxu0
        %v3943 = vadd.f32 %v3894, %v3942
        %v3944 = vpop.f32.mrf.mxu0
        %v3945 = vadd.f32 %v3896, %v3944
        %3946 = vmatmul.bf16.gmra.mxu0 %v3469
        %v3947 = vpop.f32.mrf.mxu0
        %v3948 = vadd.f32 %v3899, %v3947
        %v3949 = vpop.f32.mrf.mxu0
        %v3950 = vadd.f32 %v3901, %v3949
        %3951 = vmatmul.bf16.gmra.mxu0 %v3474
        %v3952 = vpop.f32.mrf.mxu0
        %v3953 = vadd.f32 %v3904, %v3952
        %v3954 = vpop.f32.mrf.mxu0
        %v3955 = vadd.f32 %v3906, %v3954
        %3956 = vmatmul.bf16.gmra.mxu0 %v3479
        %v3957 = vpop.f32.mrf.mxu0
        %v3958 = vadd.f32 %v3909, %v3957
        %v3959 = vpop.f32.mrf.mxu0
        %v3960 = vadd.f32 %v3911, %v3959
        %3961 = vmatmul.bf16.gmra.mxu0 %v3484
        %v3962 = vpop.f32.mrf.mxu0
        %v3963 = vadd.f32 %v3914, %v3962
        %v3964 = vpop.f32.mrf.mxu0
        %v3965 = vadd.f32 %v3916, %v3964
        %3966 = vmatmul.bf16.gmra.mxu0 %v3489
        %v3967 = vpop.f32.mrf.mxu0
        %v3968 = vadd.f32 %v3919, %v3967
        %v3969 = vpop.f32.mrf.mxu0
        %v3970 = vadd.f32 %v3921, %v3969
        %3971 = vmatmul.bf16.gmra.mxu0 %v3494
        %v3972 = vpop.f32.mrf.mxu0
        %v3973 = vadd.f32 %v3924, %v3972
        %v3974 = vpop.f32.mrf.mxu0
        %v3975 = vadd.f32 %v3926, %v3974
        %3976 = vmatmul.bf16.gmra.mxu0 %v3499
        %v3977 = vpop.f32.mrf.mxu0
        %v3978 = vadd.f32 %v3929, %v3977
        %v3979 = vpop.f32.mrf.mxu0
        %v3980 = vadd.f32 %v3931, %v3979
        %3981 = vdwg.mxu0
        %3982 = vmatpush.bf16.msra.mxu0 %v2358
        %3983 = vmatpush.bf16.msra.mxu0 %v2356
        %3984 = vmatpush.bf16.msra.mxu0 %v2354
        %3985 = vmatpush.bf16.msra.mxu0 %v2352
        %3986 = vmatpush.bf16.msra.mxu0 %v2350
        %3987 = vmatpush.bf16.msra.mxu0 %v2348
        %3988 = vmatpush.bf16.msra.mxu0 %v2346
        %3989 = vmatpush.bf16.msra.mxu0 %v2344
        %3990 = vmatmul.bf16.gmra.mxu0 %v3465
        %v3991 = vpop.f32.mrf.mxu0
        %v3992 = vadd.f32 %v3943, %v3991
        %v3993 = vpop.f32.mrf.mxu0
        %v3994 = vadd.f32 %v3945, %v3993
        %3995 = vmatmul.bf16.gmra.mxu0 %v3470
        %v3996 = vpop.f32.mrf.mxu0
        %v3997 = vadd.f32 %v3948, %v3996
        %v3998 = vpop.f32.mrf.mxu0
        %v3999 = vadd.f32 %v3950, %v3998
        %4000 = vmatmul.bf16.gmra.mxu0 %v3475
        %v4001 = vpop.f32.mrf.mxu0
        %v4002 = vadd.f32 %v3953, %v4001
        %v4003 = vpop.f32.mrf.mxu0
        %v4004 = vadd.f32 %v3955, %v4003
        %4005 = vmatmul.bf16.gmra.mxu0 %v3480
        %v4006 = vpop.f32.mrf.mxu0
        %v4007 = vadd.f32 %v3958, %v4006
        %v4008 = vpop.f32.mrf.mxu0
        %v4009 = vadd.f32 %v3960, %v4008
        %4010 = vmatmul.bf16.gmra.mxu0 %v3485
        %v4011 = vpop.f32.mrf.mxu0
        %v4012 = vadd.f32 %v3963, %v4011
        %v4013 = vpop.f32.mrf.mxu0
        %v4014 = vadd.f32 %v3965, %v4013
        %4015 = vmatmul.bf16.gmra.mxu0 %v3490
        %v4016 = vpop.f32.mrf.mxu0
        %v4017 = vadd.f32 %v3968, %v4016
        %v4018 = vpop.f32.mrf.mxu0
        %v4019 = vadd.f32 %v3970, %v4018
        %4020 = vmatmul.bf16.gmra.mxu0 %v3495
        %v4021 = vpop.f32.mrf.mxu0
        %v4022 = vadd.f32 %v3973, %v4021
        %v4023 = vpop.f32.mrf.mxu0
        %v4024 = vadd.f32 %v3975, %v4023
        %4025 = vmatmul.bf16.gmra.mxu0 %v3500
        %v4026 = vpop.f32.mrf.mxu0
        %v4027 = vadd.f32 %v3978, %v4026
        %v4028 = vpop.f32.mrf.mxu0
        %v4029 = vadd.f32 %v3980, %v4028
        %4030 = vdwg.mxu0
        %v4031 = vmax.f32 %v3747, 0.0
        %v4032 = vmax.f32 %v3992, 0.0
        %v4033 = vmax.f32 %v3749, 0.0
        %v4034 = vmax.f32 %v3994, 0.0
        %v4035 = vmax.f32 %v3752, 0.0
        %v4036 = vmax.f32 %v3997, 0.0
        %v4037 = vmax.f32 %v3754, 0.0
        %v4038 = vmax.f32 %v3999, 0.0
        %v4039 = vmax.f32 %v3757, 0.0
        %v4040 = vmax.f32 %v4002, 0.0
        %v4041 = vmax.f32 %v3759, 0.0
        %v4042 = vmax.f32 %v4004, 0.0
        %v4043 = vmax.f32 %v3762, 0.0
        %v4044 = vmax.f32 %v4007, 0.0
        %v4045 = vmax.f32 %v3764, 0.0
        %v4046 = vmax.f32 %v4009, 0.0
        %v4047 = vmax.f32 %v3767, 0.0
        %v4048 = vmax.f32 %v4012, 0.0
        %v4049 = vmax.f32 %v3769, 0.0
        %v4050 = vmax.f32 %v4014, 0.0
        %v4051 = vmax.f32 %v3772, 0.0
        %v4052 = vmax.f32 %v4017, 0.0
        %v4053 = vmax.f32 %v3774, 0.0
        %v4054 = vmax.f32 %v4019, 0.0
        %v4055 = vmax.f32 %v3777, 0.0
        %v4056 = vmax.f32 %v4022, 0.0
        %v4057 = vmax.f32 %v3779, 0.0
        %v4058 = vmax.f32 %v4024, 0.0
        %v4059 = vmax.f32 %v3782, 0.0
        %v4060 = vmax.f32 %v4027, 0.0
        %v4061 = vmax.f32 %v3784, 0.0
        %v4062 = vmax.f32 %v4029, 0.0
        %v4063 = vpack.c.bf16 %v4032, %v4031
        %v4064 = vpack.c.bf16 %v4034, %v4033
        %v4065 = vpack.c.bf16 %v4036, %v4035
        %v4066 = vpack.c.bf16 %v4038, %v4037
        %v4067 = vpack.c.bf16 %v4040, %v4039
        %v4068 = vpack.c.bf16 %v4042, %v4041
        %v4069 = vpack.c.bf16 %v4044, %v4043
        %v4070 = vpack.c.bf16 %v4046, %v4045
        %v4071 = vpack.c.bf16 %v4048, %v4047
        %v4072 = vpack.c.bf16 %v4050, %v4049
        %v4073 = vpack.c.bf16 %v4052, %v4051
        %v4074 = vpack.c.bf16 %v4054, %v4053
        %v4075 = vpack.c.bf16 %v4056, %v4055
        %v4076 = vpack.c.bf16 %v4058, %v4057
        %v4077 = vpack.c.bf16 %v4060, %v4059
        %v4078 = vpack.c.bf16 %v4062, %v4061
        %4079 = vst [vmem:[#allocation3 + $0x180] sm:$0xff] %v4063
        %4080 = vst [vmem:[#allocation3 + $0x198] sm:$0xff] %v4064
        %4081 = vst [vmem:[#allocation3 + $0x1b0] sm:$0xff] %v4065
        %4082 = vst [vmem:[#allocation3 + $0x1c8] sm:$0xff] %v4066
        %4083 = vst [vmem:[#allocation3 + $0x1e0] sm:$0xff] %v4067
        %4084 = vst [vmem:[#allocation3 + $0x1f8] sm:$0xff] %v4068
        %4085 = vst [vmem:[#allocation3 + $0x210] sm:$0xff] %v4069
        %4086 = vst [vmem:[#allocation3 + $0x228] sm:$0xff] %v4070
        %4087 = vst [vmem:[#allocation3 + $0x240] sm:$0xff] %v4071
        %4088 = vst [vmem:[#allocation3 + $0x258] sm:$0xff] %v4072
        %4089 = vst [vmem:[#allocation3 + $0x270] sm:$0xff] %v4073
        %4090 = vst [vmem:[#allocation3 + $0x288] sm:$0xff] %v4074
        %4091 = vst [vmem:[#allocation3 + $0x2a0] sm:$0xff] %v4075
        %4092 = vst [vmem:[#allocation3 + $0x2b8] sm:$0xff] %v4076
        %4093 = vst [vmem:[#allocation3 + $0x2d0] sm:$0xff] %v4077
        %4094 = vst [vmem:[#allocation3 + $0x2e8] sm:$0xff] %v4078
        %v4096 = vshll.u32 %v4063, 16
        %v4098 = vrot.slane %v4096, 5
        %v4099 = vshrl.u32 %v4063, 16
        %v4101 = vrot.slane %v4099, 4
        %v4102 = vor.u32 %v4101, %v4098
        %v4103 = vrot.slane %v4102, 4
        %v4105 = vshll.u32 %v4064, 16
        %v4107 = vrot.slane %v4105, 5
        %v4108 = vsel %vm529, %v4103, %v4107
        %v4109 = vshrl.u32 %v4064, 16
        %v4111 = vrot.slane %v4109, 4
        %v4112 = vor.u32 %v4111, %v4107
        %v4113 = vrot.slane %v4112, 4
        %v4115 = vshll.u32 %v4065, 16
        %v4117 = vrot.slane %v4115, 5
        %v4118 = vsel %vm529, %v4113, %v4117
        %v4119 = vshrl.u32 %v4065, 16
        %v4121 = vrot.slane %v4119, 4
        %v4122 = vor.u32 %v4121, %v4117
        %v4123 = vrot.slane %v4122, 4
        %v4125 = vshll.u32 %v4066, 16
        %v4127 = vrot.slane %v4125, 5
        %v4128 = vsel %vm529, %v4123, %v4127
        %v4129 = vshrl.u32 %v4066, 16
        %v4131 = vrot.slane %v4129, 4
        %v4132 = vor.u32 %v4131, %v4127
        %v4133 = vrot.slane %v4132, 4
        %v4135 = vshll.u32 %v4067, 16
        %v4137 = vrot.slane %v4135, 5
        %v4138 = vsel %vm529, %v4133, %v4137
        %v4139 = vshrl.u32 %v4067, 16
        %v4141 = vrot.slane %v4139, 4
        %v4142 = vor.u32 %v4141, %v4137
        %v4143 = vrot.slane %v4142, 4
        %v4145 = vshll.u32 %v4068, 16
        %v4147 = vrot.slane %v4145, 5
        %v4148 = vsel %vm529, %v4143, %v4147
        %v4149 = vshrl.u32 %v4068, 16
        %v4151 = vrot.slane %v4149, 4
        %v4152 = vor.u32 %v4151, %v4147
        %v4153 = vrot.slane %v4152, 4
        %v4155 = vshll.u32 %v4069, 16
        %v4157 = vrot.slane %v4155, 5
        %v4158 = vsel %vm529, %v4153, %v4157
        %v4159 = vshrl.u32 %v4069, 16
        %v4161 = vrot.slane %v4159, 4
        %v4162 = vor.u32 %v4161, %v4157
        %v4163 = vrot.slane %v4162, 4
        %v4165 = vshll.u32 %v4070, 16
        %v4167 = vrot.slane %v4165, 5
        %v4168 = vsel %vm529, %v4163, %v4167
        %v4169 = vshrl.u32 %v4070, 16
        %v4171 = vrot.slane %v4169, 4
        %v4172 = vor.u32 %v4171, %v4167
        %v4173 = vrot.slane %v4172, 4
        %v4175 = vshll.u32 %v4071, 16
        %v4177 = vrot.slane %v4175, 5
        %v4178 = vsel %vm529, %v4173, %v4177
        %v4179 = vshrl.u32 %v4071, 16
        %v4181 = vrot.slane %v4179, 4
        %v4182 = vor.u32 %v4181, %v4177
        %v4183 = vrot.slane %v4182, 4
        %v4185 = vshll.u32 %v4072, 16
        %v4187 = vrot.slane %v4185, 5
        %v4188 = vsel %vm529, %v4183, %v4187
        %v4189 = vshrl.u32 %v4072, 16
        %v4191 = vrot.slane %v4189, 4
        %v4192 = vor.u32 %v4191, %v4187
        %v4193 = vrot.slane %v4192, 4
        %v4195 = vshll.u32 %v4073, 16
        %v4197 = vrot.slane %v4195, 5
        %v4198 = vsel %vm529, %v4193, %v4197
        %v4199 = vshrl.u32 %v4073, 16
        %v4201 = vrot.slane %v4199, 4
        %v4202 = vor.u32 %v4201, %v4197
        %v4203 = vrot.slane %v4202, 4
        %v4205 = vshll.u32 %v4074, 16
        %v4207 = vrot.slane %v4205, 5
        %v4208 = vsel %vm529, %v4203, %v4207
        %v4209 = vshrl.u32 %v4074, 16
        %v4211 = vrot.slane %v4209, 4
        %v4212 = vor.u32 %v4211, %v4207
        %v4213 = vrot.slane %v4212, 4
        %v4215 = vshll.u32 %v4075, 16
        %v4217 = vrot.slane %v4215, 5
        %v4218 = vsel %vm529, %v4213, %v4217
        %v4219 = vshrl.u32 %v4075, 16
        %v4221 = vrot.slane %v4219, 4
        %v4222 = vor.u32 %v4221, %v4217
        %v4223 = vrot.slane %v4222, 4
        %v4225 = vshll.u32 %v4076, 16
        %v4227 = vrot.slane %v4225, 5
        %v4228 = vsel %vm529, %v4223, %v4227
        %v4229 = vshrl.u32 %v4076, 16
        %v4231 = vrot.slane %v4229, 4
        %v4232 = vor.u32 %v4231, %v4227
        %v4233 = vrot.slane %v4232, 4
        %v4235 = vshll.u32 %v4077, 16
        %v4237 = vrot.slane %v4235, 5
        %v4238 = vsel %vm529, %v4233, %v4237
        %v4239 = vshrl.u32 %v4077, 16
        %v4241 = vrot.slane %v4239, 4
        %v4242 = vor.u32 %v4241, %v4237
        %v4243 = vrot.slane %v4242, 4
        %v4245 = vshll.u32 %v4078, 16
        %v4247 = vrot.slane %v4245, 5
        %v4248 = vsel %vm529, %v4243, %v4247
        %v4249 = vshrl.u32 %v4078, 16
        %v4251 = vrot.slane %v4249, 4
        %v4252 = vor.u32 %v4251, %v4247
        %v4253 = vrot.slane %v4252, 4
        %vm4271 = vcmask 1047559
        %vm4272 = vsmask.f32 7966
        %vm4273 = vmand %vm4271, %vm4272
        %vm4274 = vmor %vm4273, %vm1377
        %v4275 = vld [vmem:[#allocation3 + $0x170] sm:$0x88]
        %v4276 = vsel %vm4274, %v4098, %v4275
        %4277 = vst [vmem:[#allocation3 + $0x170] sm:$0x88] %v4276
        %4278 = vst [vmem:[#allocation3 + $0x188] sm:$0xff] %v4108
        %4279 = vst [vmem:[#allocation3 + $0x1a0] sm:$0xff] %v4118
        %4280 = vst [vmem:[#allocation3 + $0x1b8] sm:$0xff] %v4128
        %4281 = vst [vmem:[#allocation3 + $0x1d0] sm:$0xff] %v4138
        %4282 = vst [vmem:[#allocation3 + $0x1e8] sm:$0xff] %v4148
        %4283 = vst [vmem:[#allocation3 + $0x200] sm:$0xff] %v4158
        %4284 = vst [vmem:[#allocation3 + $0x218] sm:$0xff] %v4168
        %4285 = vst [vmem:[#allocation3 + $0x230] sm:$0xff] %v4178
        %4286 = vst [vmem:[#allocation3 + $0x248] sm:$0xff] %v4188
        %4287 = vst [vmem:[#allocation3 + $0x260] sm:$0xff] %v4198
        %4288 = vst [vmem:[#allocation3 + $0x278] sm:$0xff] %v4208
        %4289 = vst [vmem:[#allocation3 + $0x290] sm:$0xff] %v4218
        %4290 = vst [vmem:[#allocation3 + $0x2a8] sm:$0xff] %v4228
        %4291 = vst [vmem:[#allocation3 + $0x2c0] sm:$0xff] %v4238
        %4292 = vst [vmem:[#allocation3 + $0x2d8] sm:$0xff] %v4248
        %v4293 = vld [vmem:[#allocation3 + $0x2f0] sm:$0xff]
        %v4294 = vsel %vm3186, %v4253, %v4293
        %4295 = vst [vmem:[#allocation3 + $0x2f0] sm:$0xff] %v4294
        %v4312 = vrot.slane %v4063, 5
        %v4313 = vrot.slane %v4312, 4
        %v4314 = vrot.slane %v4064, 5
        %v4315 = vsel %vm743, %v4313, %v4314
        %v4316 = vrot.slane %v4314, 4
        %v4317 = vrot.slane %v4065, 5
        %v4318 = vsel %vm743, %v4316, %v4317
        %v4319 = vrot.slane %v4317, 4
        %v4320 = vrot.slane %v4066, 5
        %v4321 = vsel %vm743, %v4319, %v4320
        %v4322 = vrot.slane %v4320, 4
        %v4323 = vrot.slane %v4067, 5
        %v4324 = vsel %vm743, %v4322, %v4323
        %v4325 = vrot.slane %v4323, 4
        %v4326 = vrot.slane %v4068, 5
        %v4327 = vsel %vm743, %v4325, %v4326
        %v4328 = vrot.slane %v4326, 4
        %v4329 = vrot.slane %v4069, 5
        %v4330 = vsel %vm743, %v4328, %v4329
        %v4331 = vrot.slane %v4329, 4
        %v4332 = vrot.slane %v4070, 5
        %v4333 = vsel %vm743, %v4331, %v4332
        %v4334 = vrot.slane %v4332, 4
        %v4335 = vrot.slane %v4071, 5
        %v4336 = vsel %vm743, %v4334, %v4335
        %v4337 = vrot.slane %v4335, 4
        %v4338 = vrot.slane %v4072, 5
        %v4339 = vsel %vm743, %v4337, %v4338
        %v4340 = vrot.slane %v4338, 4
        %v4341 = vrot.slane %v4073, 5
        %v4342 = vsel %vm743, %v4340, %v4341
        %v4343 = vrot.slane %v4341, 4
        %v4344 = vrot.slane %v4074, 5
        %v4345 = vsel %vm743, %v4343, %v4344
        %v4346 = vrot.slane %v4344, 4
        %v4347 = vrot.slane %v4075, 5
        %v4348 = vsel %vm743, %v4346, %v4347
        %v4349 = vrot.slane %v4347, 4
        %v4350 = vrot.slane %v4076, 5
        %v4351 = vsel %vm743, %v4349, %v4350
        %v4352 = vrot.slane %v4350, 4
        %v4353 = vrot.slane %v4077, 5
        %v4354 = vsel %vm743, %v4352, %v4353
        %v4355 = vrot.slane %v4353, 4
        %v4356 = vrot.slane %v4078, 5
        %v4357 = vsel %vm743, %v4355, %v4356
        %v4358 = vrot.slane %v4356, 4
        %4376 = vst [vmem:[#allocation3 + $0x178] sm:$0x88] %v4312
        %4377 = vst [vmem:[#allocation3 + $0x190] sm:$0xff] %v4315
        %4378 = vst [vmem:[#allocation3 + $0x1a8] sm:$0xff] %v4318
        %4379 = vst [vmem:[#allocation3 + $0x1c0] sm:$0xff] %v4321
        %4380 = vst [vmem:[#allocation3 + $0x1d8] sm:$0xff] %v4324
        %4381 = vst [vmem:[#allocation3 + $0x1f0] sm:$0xff] %v4327
        %4382 = vst [vmem:[#allocation3 + $0x208] sm:$0xff] %v4330
        %4383 = vst [vmem:[#allocation3 + $0x220] sm:$0xff] %v4333
        %4384 = vst [vmem:[#allocation3 + $0x238] sm:$0xff] %v4336
        %4385 = vst [vmem:[#allocation3 + $0x250] sm:$0xff] %v4339
        %4386 = vst [vmem:[#allocation3 + $0x268] sm:$0xff] %v4342
        %4387 = vst [vmem:[#allocation3 + $0x280] sm:$0xff] %v4345
        %4388 = vst [vmem:[#allocation3 + $0x298] sm:$0xff] %v4348
        %4389 = vst [vmem:[#allocation3 + $0x2b0] sm:$0xff] %v4351
        %4390 = vst [vmem:[#allocation3 + $0x2c8] sm:$0xff] %v4354
        %4391 = vst [vmem:[#allocation3 + $0x2e0] sm:$0xff] %v4357
        %4392 = vst [vmem:[#allocation3 + $0x2f8] sm:$0x77] %v4358
        %v4393 = vld [vmem:[%s3] sm:$0xf]
        %v4394 = vld [vmem:[%s3 + $0x4] sm:$0xf]
        %v4395 = vld [vmem:[%s3 + $0x8] sm:$0xf]
        %v4396 = vld [vmem:[%s3 + $0xc] sm:$0xf]
        %v4397 = vld [vmem:[%s3 + $0x10] sm:$0xf]
        %v4398 = vld [vmem:[%s3 + $0x14] sm:$0xf]
        %v4399 = vld [vmem:[%s3 + $0x18] sm:$0xf]
        %v4400 = vld [vmem:[%s3 + $0x1c] sm:$0xf]
        %v4401 = vld [vmem:[%s3 + $0x20] sm:$0xf]
        %v4402 = vld [vmem:[%s3 + $0x24] sm:$0xf]
        %v4403 = vld [vmem:[%s3 + $0x28] sm:$0xf]
        %v4404 = vld [vmem:[%s3 + $0x2c] sm:$0xf]
        %v4405 = vld [vmem:[%s3 + $0x30] sm:$0xf]
        %v4406 = vld [vmem:[%s3 + $0x34] sm:$0xf]
        %v4407 = vld [vmem:[%s3 + $0x38] sm:$0xf]
        %v4408 = vld [vmem:[%s3 + $0x3c] sm:$0xf]
        %v4409 = vld [vmem:[%s3 + $0x40] sm:$0xf]
        %v4410 = vld [vmem:[%s3 + $0x44] sm:$0xf]
        %v4411 = vld [vmem:[%s3 + $0x48] sm:$0xf]
        %v4412 = vld [vmem:[%s3 + $0x4c] sm:$0xf]
        %v4413 = vld [vmem:[%s3 + $0x50] sm:$0xf]
        %v4414 = vld [vmem:[%s3 + $0x54] sm:$0xf]
        %v4415 = vld [vmem:[%s3 + $0x58] sm:$0xf]
        %v4416 = vld [vmem:[%s3 + $0x5c] sm:$0xf]
        %v4417 = vld [vmem:[%s3 + $0x60] sm:$0xf]
        %v4418 = vld [vmem:[%s3 + $0x64] sm:$0xf]
        %v4419 = vld [vmem:[%s3 + $0x68] sm:$0xf]
        %v4420 = vld [vmem:[%s3 + $0x6c] sm:$0xf]
        %v4421 = vld [vmem:[%s3 + $0x70] sm:$0xf]
        %v4422 = vld [vmem:[%s3 + $0x74] sm:$0xf]
        %v4423 = vld [vmem:[%s3 + $0x78] sm:$0xf]
        %v4424 = vld [vmem:[%s3 + $0x7c] sm:$0xf]
        %v4425 = vld [vmem:[%s3 + $0x80] sm:$0xf]
        %v4426 = vld [vmem:[%s3 + $0x84] sm:$0xf]
        %v4427 = vld [vmem:[%s3 + $0x88] sm:$0xf]
        %v4428 = vld [vmem:[%s3 + $0x8c] sm:$0xf]
        %v4429 = vld [vmem:[%s3 + $0x90] sm:$0xf]
        %v4430 = vld [vmem:[%s3 + $0x94] sm:$0xf]
        %v4431 = vld [vmem:[%s3 + $0x98] sm:$0xf]
        %v4432 = vld [vmem:[%s3 + $0x9c] sm:$0xf]
        %v4433 = vld [vmem:[%s3 + $0xa0] sm:$0xf]
        %v4434 = vld [vmem:[%s3 + $0xa4] sm:$0xf]
        %v4435 = vld [vmem:[%s3 + $0xa8] sm:$0xf]
        %v4436 = vld [vmem:[%s3 + $0xac] sm:$0xf]
        %v4437 = vld [vmem:[%s3 + $0xb0] sm:$0xf]
        %v4438 = vld [vmem:[%s3 + $0xb4] sm:$0xf]
        %v4439 = vld [vmem:[%s3 + $0xb8] sm:$0xf]
        %v4440 = vld [vmem:[%s3 + $0xbc] sm:$0xf]
        %v4441 = vld [vmem:[%s3 + $0xc0] sm:$0xf]
        %v4442 = vld [vmem:[%s3 + $0xc4] sm:$0xf]
        %v4443 = vld [vmem:[%s3 + $0xc8] sm:$0xf]
        %v4444 = vld [vmem:[%s3 + $0xcc] sm:$0xf]
        %v4445 = vld [vmem:[%s3 + $0xd0] sm:$0xf]
        %v4446 = vld [vmem:[%s3 + $0xd4] sm:$0xf]
        %v4447 = vld [vmem:[%s3 + $0xd8] sm:$0xf]
        %v4448 = vld [vmem:[%s3 + $0xdc] sm:$0xf]
        %v4449 = vld [vmem:[%s3 + $0xe0] sm:$0xf]
        %v4450 = vld [vmem:[%s3 + $0xe4] sm:$0xf]
        %v4451 = vld [vmem:[%s3 + $0xe8] sm:$0xf]
        %v4452 = vld [vmem:[%s3 + $0xec] sm:$0xf]
        %v4453 = vld [vmem:[%s3 + $0xf0] sm:$0xf]
        %v4454 = vld [vmem:[%s3 + $0xf4] sm:$0xf]
        %v4455 = vld [vmem:[%s3 + $0xf8] sm:$0xf]
        %v4456 = vld [vmem:[%s3 + $0xfc] sm:$0xf]
        %v4457 = vld [vmem:[%s3 + $0x100] sm:$0xf]
        %v4458 = vld [vmem:[%s3 + $0x104] sm:$0xf]
        %v4459 = vld [vmem:[%s3 + $0x108] sm:$0xf]
        %v4460 = vld [vmem:[%s3 + $0x10c] sm:$0xf]
        %v4461 = vld [vmem:[%s3 + $0x110] sm:$0xf]
        %v4462 = vld [vmem:[%s3 + $0x114] sm:$0xf]
        %v4463 = vld [vmem:[%s3 + $0x118] sm:$0xf]
        %v4464 = vld [vmem:[%s3 + $0x11c] sm:$0xf]
        %v4465 = vld [vmem:[%s3 + $0x120] sm:$0xf]
        %v4466 = vld [vmem:[%s3 + $0x124] sm:$0xf]
        %v4467 = vld [vmem:[%s3 + $0x128] sm:$0xf]
        %v4468 = vld [vmem:[%s3 + $0x12c] sm:$0xf]
        %v4469 = vld [vmem:[%s3 + $0x130] sm:$0xf]
        %v4470 = vld [vmem:[%s3 + $0x134] sm:$0xf]
        %v4471 = vld [vmem:[%s3 + $0x138] sm:$0xf]
        %v4472 = vld [vmem:[%s3 + $0x13c] sm:$0xf]
        %v4473 = vld [vmem:[%s3 + $0x140] sm:$0xf]
        %v4474 = vld [vmem:[%s3 + $0x144] sm:$0xf]
        %v4475 = vld [vmem:[%s3 + $0x148] sm:$0xf]
        %v4476 = vld [vmem:[%s3 + $0x14c] sm:$0xf]
        %v4477 = vld [vmem:[%s3 + $0x150] sm:$0xf]
        %v4478 = vld [vmem:[%s3 + $0x154] sm:$0xf]
        %v4479 = vld [vmem:[%s3 + $0x158] sm:$0xf]
        %v4480 = vld [vmem:[%s3 + $0x15c] sm:$0xf]
        %v4481 = vld [vmem:[%s3 + $0x160] sm:$0xf]
        %v4482 = vld [vmem:[%s3 + $0x164] sm:$0xf]
        %v4483 = vld [vmem:[%s3 + $0x168] sm:$0xf]
        %v4484 = vld [vmem:[%s3 + $0x16c] sm:$0xf]
        %v4485 = vld [vmem:[%s3 + $0x170] sm:$0xf]
        %v4486 = vld [vmem:[%s3 + $0x174] sm:$0xf]
        %v4487 = vld [vmem:[%s3 + $0x178] sm:$0xf]
        %v4488 = vld [vmem:[%s3 + $0x17c] sm:$0xf]
        %v4489 = vld [vmem:[%s6] sm:$0x1]
        %v4490 = vld [vmem:[#allocation3] sm:$0xff]
        %v4491 = vld [vmem:[#allocation3 + $0x8] sm:$0xff]
        %v4492 = vld [vmem:[#allocation3 + $0x10] sm:$0xff]
        %v4493 = vld [vmem:[#allocation3 + $0x18] sm:$0xff]
        %v4494 = vld [vmem:[#allocation3 + $0x20] sm:$0xff]
        %v4495 = vld [vmem:[#allocation3 + $0x28] sm:$0xff]
        %v4496 = vld [vmem:[#allocation3 + $0x30] sm:$0xff]
        %v4497 = vld [vmem:[#allocation3 + $0x38] sm:$0xff]
        %v4498 = vld [vmem:[#allocation3 + $0x40] sm:$0xff]
        %v4499 = vld [vmem:[#allocation3 + $0x48] sm:$0xff]
        %v4500 = vld [vmem:[#allocation3 + $0x50] sm:$0xff]
        %v4501 = vld [vmem:[#allocation3 + $0x58] sm:$0xff]
        %v4502 = vld [vmem:[#allocation3 + $0x60] sm:$0xff]
        %v4503 = vld [vmem:[#allocation3 + $0x68] sm:$0xff]
        %v4504 = vld [vmem:[#allocation3 + $0x70] sm:$0xff]
        %v4505 = vld [vmem:[#allocation3 + $0x78] sm:$0xff]
        %v4506 = vld [vmem:[#allocation3 + $0x80] sm:$0xff]
        %v4507 = vld [vmem:[#allocation3 + $0x88] sm:$0xff]
        %v4508 = vld [vmem:[#allocation3 + $0x90] sm:$0xff]
        %v4509 = vld [vmem:[#allocation3 + $0x98] sm:$0xff]
        %v4510 = vld [vmem:[#allocation3 + $0xa0] sm:$0xff]
        %v4511 = vld [vmem:[#allocation3 + $0xa8] sm:$0xff]
        %v4512 = vld [vmem:[#allocation3 + $0xb0] sm:$0xff]
        %v4513 = vld [vmem:[#allocation3 + $0xb8] sm:$0xff]
        %v4514 = vld [vmem:[#allocation3 + $0xc0] sm:$0xff]
        %v4515 = vld [vmem:[#allocation3 + $0xc8] sm:$0xff]
        %v4516 = vld [vmem:[#allocation3 + $0xd0] sm:$0xff]
        %v4517 = vld [vmem:[#allocation3 + $0xd8] sm:$0xff]
        %v4518 = vld [vmem:[#allocation3 + $0xe0] sm:$0xff]
        %v4519 = vld [vmem:[#allocation3 + $0xe8] sm:$0xff]
        %v4520 = vld [vmem:[#allocation3 + $0xf0] sm:$0xff]
        %v4521 = vld [vmem:[#allocation3 + $0xf8] sm:$0xff]
        %v4522 = vld [vmem:[#allocation3 + $0x100] sm:$0xff]
        %v4523 = vld [vmem:[#allocation3 + $0x108] sm:$0xff]
        %v4524 = vld [vmem:[#allocation3 + $0x110] sm:$0xff]
        %v4525 = vld [vmem:[#allocation3 + $0x118] sm:$0xff]
        %v4526 = vld [vmem:[#allocation3 + $0x120] sm:$0xff]
        %v4527 = vld [vmem:[#allocation3 + $0x128] sm:$0xff]
        %v4528 = vld [vmem:[#allocation3 + $0x130] sm:$0xff]
        %v4529 = vld [vmem:[#allocation3 + $0x138] sm:$0xff]
        %v4530 = vld [vmem:[#allocation3 + $0x140] sm:$0xff]
        %v4531 = vld [vmem:[#allocation3 + $0x148] sm:$0xff]
        %v4532 = vld [vmem:[#allocation3 + $0x150] sm:$0xff]
        %v4533 = vld [vmem:[#allocation3 + $0x158] sm:$0xff]
        %v4534 = vld [vmem:[#allocation3 + $0x160] sm:$0xff]
        %v4535 = vld [vmem:[#allocation3 + $0x168] sm:$0xff]
        %v4536 = vld [vmem:[#allocation3 + $0x170] sm:$0xff]
        %v4537 = vld [vmem:[#allocation3 + $0x178] sm:$0xff]
        %v4539 = vperm.slane %v4489, 0
        %v4589 = vunpack.c.l.b16 %v4490
        %v4590 = vunpack.c.h.b16 %v4490
        %v4591 = vunpack.c.l.b16 %v4491
        %v4592 = vunpack.c.h.b16 %v4491
        %v4593 = vunpack.c.l.b16 %v4492
        %v4594 = vunpack.c.h.b16 %v4492
        %v4595 = vunpack.c.l.b16 %v4493
        %v4596 = vunpack.c.h.b16 %v4493
        %v4597 = vunpack.c.l.b16 %v4494
        %v4598 = vunpack.c.h.b16 %v4494
        %v4599 = vunpack.c.l.b16 %v4495
        %v4600 = vunpack.c.h.b16 %v4495
        %v4601 = vunpack.c.l.b16 %v4496
        %v4602 = vunpack.c.h.b16 %v4496
        %v4603 = vunpack.c.l.b16 %v4497
        %v4604 = vunpack.c.h.b16 %v4497
        %v4605 = vunpack.c.l.b16 %v4498
        %v4606 = vunpack.c.h.b16 %v4498
        %v4607 = vunpack.c.l.b16 %v4499
        %v4608 = vunpack.c.h.b16 %v4499
        %v4609 = vunpack.c.l.b16 %v4500
        %v4610 = vunpack.c.h.b16 %v4500
        %v4611 = vunpack.c.l.b16 %v4501
        %v4612 = vunpack.c.h.b16 %v4501
        %v4613 = vunpack.c.l.b16 %v4502
        %v4614 = vunpack.c.h.b16 %v4502
        %v4615 = vunpack.c.l.b16 %v4503
        %v4616 = vunpack.c.h.b16 %v4503
        %v4617 = vunpack.c.l.b16 %v4504
        %v4618 = vunpack.c.h.b16 %v4504
        %v4619 = vunpack.c.l.b16 %v4505
        %v4620 = vunpack.c.h.b16 %v4505
        %v4621 = vunpack.c.l.b16 %v4506
        %v4622 = vunpack.c.h.b16 %v4506
        %v4623 = vunpack.c.l.b16 %v4507
        %v4624 = vunpack.c.h.b16 %v4507
        %v4625 = vunpack.c.l.b16 %v4508
        %v4626 = vunpack.c.h.b16 %v4508
        %v4627 = vunpack.c.l.b16 %v4509
        %v4628 = vunpack.c.h.b16 %v4509
        %v4629 = vunpack.c.l.b16 %v4510
        %v4630 = vunpack.c.h.b16 %v4510
        %v4631 = vunpack.c.l.b16 %v4511
        %v4632 = vunpack.c.h.b16 %v4511
        %v4633 = vunpack.c.l.b16 %v4512
        %v4634 = vunpack.c.h.b16 %v4512
        %v4635 = vunpack.c.l.b16 %v4513
        %v4636 = vunpack.c.h.b16 %v4513
        %v4637 = vunpack.c.l.b16 %v4514
        %v4638 = vunpack.c.h.b16 %v4514
        %v4639 = vunpack.c.l.b16 %v4515
        %v4640 = vunpack.c.h.b16 %v4515
        %v4641 = vunpack.c.l.b16 %v4516
        %v4642 = vunpack.c.h.b16 %v4516
        %v4643 = vunpack.c.l.b16 %v4517
        %v4644 = vunpack.c.h.b16 %v4517
        %v4645 = vunpack.c.l.b16 %v4518
        %v4646 = vunpack.c.h.b16 %v4518
        %v4647 = vunpack.c.l.b16 %v4519
        %v4648 = vunpack.c.h.b16 %v4519
        %v4649 = vunpack.c.l.b16 %v4520
        %v4650 = vunpack.c.h.b16 %v4520
        %v4651 = vunpack.c.l.b16 %v4521
        %v4652 = vunpack.c.h.b16 %v4521
        %v4653 = vunpack.c.l.b16 %v4522
        %v4654 = vunpack.c.h.b16 %v4522
        %v4655 = vunpack.c.l.b16 %v4523
        %v4656 = vunpack.c.h.b16 %v4523
        %v4657 = vunpack.c.l.b16 %v4524
        %v4658 = vunpack.c.h.b16 %v4524
        %v4659 = vunpack.c.l.b16 %v4525
        %v4660 = vunpack.c.h.b16 %v4525
        %v4661 = vunpack.c.l.b16 %v4526
        %v4662 = vunpack.c.h.b16 %v4526
        %v4663 = vunpack.c.l.b16 %v4527
        %v4664 = vunpack.c.h.b16 %v4527
        %v4665 = vunpack.c.l.b16 %v4528
        %v4666 = vunpack.c.h.b16 %v4528
        %v4667 = vunpack.c.l.b16 %v4529
        %v4668 = vunpack.c.h.b16 %v4529
        %v4669 = vunpack.c.l.b16 %v4530
        %v4670 = vunpack.c.h.b16 %v4530
        %v4671 = vunpack.c.l.b16 %v4531
        %v4672 = vunpack.c.h.b16 %v4531
        %v4673 = vunpack.c.l.b16 %v4532
        %v4674 = vunpack.c.h.b16 %v4532
        %v4675 = vunpack.c.l.b16 %v4533
        %v4676 = vunpack.c.h.b16 %v4533
        %v4677 = vunpack.c.l.b16 %v4534
        %v4678 = vunpack.c.h.b16 %v4534
        %v4679 = vunpack.c.l.b16 %v4535
        %v4680 = vunpack.c.h.b16 %v4535
        %v4681 = vunpack.c.l.b16 %v4536
        %v4682 = vunpack.c.h.b16 %v4536
        %v4683 = vunpack.c.l.b16 %v4537
        %v4684 = vunpack.c.h.b16 %v4537
        %v4685 = vpack.c.b16 %v4595, %v4589
        %v4686 = vpack.c.b16 %v4596, %v4590
        %v4687 = vpack.c.b16 %v4597, %v4591
        %v4688 = vpack.c.b16 %v4598, %v4592
        %v4689 = vpack.c.b16 %v4599, %v4593
        %v4690 = vpack.c.b16 %v4600, %v4594
        %v4691 = vpack.c.b16 %v4607, %v4601
        %v4692 = vpack.c.b16 %v4608, %v4602
        %v4693 = vpack.c.b16 %v4609, %v4603
        %v4694 = vpack.c.b16 %v4610, %v4604
        %v4695 = vpack.c.b16 %v4611, %v4605
        %v4696 = vpack.c.b16 %v4612, %v4606
        %v4697 = vpack.c.b16 %v4619, %v4613
        %v4698 = vpack.c.b16 %v4620, %v4614
        %v4699 = vpack.c.b16 %v4621, %v4615
        %v4700 = vpack.c.b16 %v4622, %v4616
        %v4701 = vpack.c.b16 %v4623, %v4617
        %v4702 = vpack.c.b16 %v4624, %v4618
        %v4703 = vpack.c.b16 %v4631, %v4625
        %v4704 = vpack.c.b16 %v4632, %v4626
        %v4705 = vpack.c.b16 %v4633, %v4627
        %v4706 = vpack.c.b16 %v4634, %v4628
        %v4707 = vpack.c.b16 %v4635, %v4629
        %v4708 = vpack.c.b16 %v4636, %v4630
        %v4709 = vpack.c.b16 %v4643, %v4637
        %v4710 = vpack.c.b16 %v4644, %v4638
        %v4711 = vpack.c.b16 %v4645, %v4639
        %v4712 = vpack.c.b16 %v4646, %v4640
        %v4713 = vpack.c.b16 %v4647, %v4641
        %v4714 = vpack.c.b16 %v4648, %v4642
        %v4715 = vpack.c.b16 %v4655, %v4649
        %v4716 = vpack.c.b16 %v4656, %v4650
        %v4717 = vpack.c.b16 %v4657, %v4651
        %v4718 = vpack.c.b16 %v4658, %v4652
        %v4719 = vpack.c.b16 %v4659, %v4653
        %v4720 = vpack.c.b16 %v4660, %v4654
        %v4721 = vpack.c.b16 %v4667, %v4661
        %v4722 = vpack.c.b16 %v4668, %v4662
        %v4723 = vpack.c.b16 %v4669, %v4663
        %v4724 = vpack.c.b16 %v4670, %v4664
        %v4725 = vpack.c.b16 %v4671, %v4665
        %v4726 = vpack.c.b16 %v4672, %v4666
        %v4727 = vpack.c.b16 %v4679, %v4673
        %v4728 = vpack.c.b16 %v4680, %v4674
        %v4729 = vpack.c.b16 %v4681, %v4675
        %v4730 = vpack.c.b16 %v4682, %v4676
        %v4731 = vpack.c.b16 %v4683, %v4677
        %v4732 = vpack.c.b16 %v4684, %v4678
        %v4877 = vunpack.c.l.b16 %v4393
        %v4878 = vunpack.c.l.b16 %v4394
        %v4879 = vunpack.c.l.b16 %v4395
        %v4880 = vunpack.c.l.b16 %v4396
        %v4881 = vunpack.c.l.b16 %v4397
        %v4882 = vunpack.c.l.b16 %v4398
        %v4883 = vunpack.c.l.b16 %v4399
        %v4884 = vunpack.c.l.b16 %v4400
        %v4885 = vunpack.c.l.b16 %v4401
        %v4886 = vunpack.c.l.b16 %v4402
        %v4887 = vunpack.c.l.b16 %v4403
        %v4888 = vunpack.c.l.b16 %v4404
        %v4889 = vunpack.c.l.b16 %v4405
        %v4890 = vunpack.c.l.b16 %v4406
        %v4891 = vunpack.c.l.b16 %v4407
        %v4892 = vunpack.c.l.b16 %v4408
        %v4893 = vunpack.c.l.b16 %v4409
        %v4894 = vunpack.c.l.b16 %v4410
        %v4895 = vunpack.c.l.b16 %v4411
        %v4896 = vunpack.c.l.b16 %v4412
        %v4897 = vunpack.c.l.b16 %v4413
        %v4898 = vunpack.c.l.b16 %v4414
        %v4899 = vunpack.c.l.b16 %v4415
        %v4900 = vunpack.c.l.b16 %v4416
        %v4901 = vunpack.c.l.b16 %v4417
        %v4902 = vunpack.c.l.b16 %v4418
        %v4903 = vunpack.c.l.b16 %v4419
        %v4904 = vunpack.c.l.b16 %v4420
        %v4905 = vunpack.c.l.b16 %v4421
        %v4906 = vunpack.c.l.b16 %v4422
        %v4907 = vunpack.c.l.b16 %v4423
        %v4908 = vunpack.c.l.b16 %v4424
        %v4909 = vunpack.c.l.b16 %v4425
        %v4910 = vunpack.c.l.b16 %v4426
        %v4911 = vunpack.c.l.b16 %v4427
        %v4912 = vunpack.c.l.b16 %v4428
        %v4913 = vunpack.c.l.b16 %v4429
        %v4914 = vunpack.c.l.b16 %v4430
        %v4915 = vunpack.c.l.b16 %v4431
        %v4916 = vunpack.c.l.b16 %v4432
        %v4917 = vunpack.c.l.b16 %v4433
        %v4918 = vunpack.c.l.b16 %v4434
        %v4919 = vunpack.c.l.b16 %v4435
        %v4920 = vunpack.c.l.b16 %v4436
        %v4921 = vunpack.c.l.b16 %v4437
        %v4922 = vunpack.c.l.b16 %v4438
        %v4923 = vunpack.c.l.b16 %v4439
        %v4924 = vunpack.c.l.b16 %v4440
        %v4925 = vunpack.c.l.b16 %v4441
        %v4926 = vunpack.c.l.b16 %v4442
        %v4927 = vunpack.c.l.b16 %v4443
        %v4928 = vunpack.c.l.b16 %v4444
        %v4929 = vunpack.c.l.b16 %v4445
        %v4930 = vunpack.c.l.b16 %v4446
        %v4931 = vunpack.c.l.b16 %v4447
        %v4932 = vunpack.c.l.b16 %v4448
        %v4933 = vunpack.c.l.b16 %v4449
        %v4934 = vunpack.c.l.b16 %v4450
        %v4935 = vunpack.c.l.b16 %v4451
        %v4936 = vunpack.c.l.b16 %v4452
        %v4937 = vunpack.c.l.b16 %v4453
        %v4938 = vunpack.c.l.b16 %v4454
        %v4939 = vunpack.c.l.b16 %v4455
        %v4940 = vunpack.c.l.b16 %v4456
        %v4941 = vunpack.c.l.b16 %v4457
        %v4942 = vunpack.c.l.b16 %v4458
        %v4943 = vunpack.c.l.b16 %v4459
        %v4944 = vunpack.c.l.b16 %v4460
        %v4945 = vunpack.c.l.b16 %v4461
        %v4946 = vunpack.c.l.b16 %v4462
        %v4947 = vunpack.c.l.b16 %v4463
        %v4948 = vunpack.c.l.b16 %v4464
        %v4949 = vunpack.c.l.b16 %v4465
        %v4950 = vunpack.c.l.b16 %v4466
        %v4951 = vunpack.c.l.b16 %v4467
        %v4952 = vunpack.c.l.b16 %v4468
        %v4953 = vunpack.c.l.b16 %v4469
        %v4954 = vunpack.c.l.b16 %v4470
        %v4955 = vunpack.c.l.b16 %v4471
        %v4956 = vunpack.c.l.b16 %v4472
        %v4957 = vunpack.c.l.b16 %v4473
        %v4958 = vunpack.c.l.b16 %v4474
        %v4959 = vunpack.c.l.b16 %v4475
        %v4960 = vunpack.c.l.b16 %v4476
        %v4961 = vunpack.c.l.b16 %v4477
        %v4962 = vunpack.c.l.b16 %v4478
        %v4963 = vunpack.c.l.b16 %v4479
        %v4964 = vunpack.c.l.b16 %v4480
        %v4965 = vunpack.c.l.b16 %v4481
        %v4966 = vunpack.c.l.b16 %v4482
        %v4967 = vunpack.c.l.b16 %v4483
        %v4968 = vunpack.c.l.b16 %v4484
        %v4969 = vunpack.c.l.b16 %v4485
        %v4970 = vunpack.c.l.b16 %v4486
        %v4971 = vunpack.c.l.b16 %v4487
        %v4972 = vunpack.c.l.b16 %v4488
        %v4973 = vpack.c.b16 %v4878, %v4877
        %v4974 = vpack.c.b16 %v4880, %v4879
        %v4975 = vpack.c.b16 %v4882, %v4881
        %v4976 = vpack.c.b16 %v4884, %v4883
        %v4977 = vpack.c.b16 %v4886, %v4885
        %v4978 = vpack.c.b16 %v4888, %v4887
        %v4979 = vpack.c.b16 %v4890, %v4889
        %v4980 = vpack.c.b16 %v4892, %v4891
        %v4981 = vpack.c.b16 %v4894, %v4893
        %v4982 = vpack.c.b16 %v4896, %v4895
        %v4983 = vpack.c.b16 %v4898, %v4897
        %v4984 = vpack.c.b16 %v4900, %v4899
        %v4985 = vpack.c.b16 %v4902, %v4901
        %v4986 = vpack.c.b16 %v4904, %v4903
        %v4987 = vpack.c.b16 %v4906, %v4905
        %v4988 = vpack.c.b16 %v4908, %v4907
        %v4989 = vpack.c.b16 %v4910, %v4909
        %v4990 = vpack.c.b16 %v4912, %v4911
        %v4991 = vpack.c.b16 %v4914, %v4913
        %v4992 = vpack.c.b16 %v4916, %v4915
        %v4993 = vpack.c.b16 %v4918, %v4917
        %v4994 = vpack.c.b16 %v4920, %v4919
        %v4995 = vpack.c.b16 %v4922, %v4921
        %v4996 = vpack.c.b16 %v4924, %v4923
        %v4997 = vpack.c.b16 %v4926, %v4925
        %v4998 = vpack.c.b16 %v4928, %v4927
        %v4999 = vpack.c.b16 %v4930, %v4929
        %v5000 = vpack.c.b16 %v4932, %v4931
        %v5001 = vpack.c.b16 %v4934, %v4933
        %v5002 = vpack.c.b16 %v4936, %v4935
        %v5003 = vpack.c.b16 %v4938, %v4937
        %v5004 = vpack.c.b16 %v4940, %v4939
        %v5005 = vpack.c.b16 %v4942, %v4941
        %v5006 = vpack.c.b16 %v4944, %v4943
        %v5007 = vpack.c.b16 %v4946, %v4945
        %v5008 = vpack.c.b16 %v4948, %v4947
        %v5009 = vpack.c.b16 %v4950, %v4949
        %v5010 = vpack.c.b16 %v4952, %v4951
        %v5011 = vpack.c.b16 %v4954, %v4953
        %v5012 = vpack.c.b16 %v4956, %v4955
        %v5013 = vpack.c.b16 %v4958, %v4957
        %v5014 = vpack.c.b16 %v4960, %v4959
        %v5015 = vpack.c.b16 %v4962, %v4961
        %v5016 = vpack.c.b16 %v4964, %v4963
        %v5017 = vpack.c.b16 %v4966, %v4965
        %v5018 = vpack.c.b16 %v4968, %v4967
        %v5019 = vpack.c.b16 %v4970, %v4969
        %v5020 = vpack.c.b16 %v4972, %v4971
        %5069 = vmatpush.bf16.msra.mxu0 %v4980
        %5070 = vmatpush.bf16.msra.mxu0 %v4979
        %5071 = vmatpush.bf16.msra.mxu0 %v4978
        %5072 = vmatpush.bf16.msra.mxu0 %v4977
        %5073 = vmatpush.bf16.msra.mxu0 %v4976
        %5074 = vmatpush.bf16.msra.mxu0 %v4975
        %5075 = vmatpush.bf16.msra.mxu0 %v4974
        %5076 = vmatpush.bf16.msra.mxu0 %v4973
        %5077 = vmatmul.bf16.gmra.mxu0 %v4685
        %v5078 = vpop.f32.mrf.mxu0
        %v5079 = vadd.f32 %v4539, %v5078
        %v5080 = vpop.f32.mrf.mxu0
        %v5081 = vadd.f32 %v4539, %v5080
        %5082 = vmatmul.bf16.gmra.mxu0 %v4691
        %v5083 = vpop.f32.mrf.mxu0
        %v5084 = vadd.f32 %v4539, %v5083
        %v5085 = vpop.f32.mrf.mxu0
        %v5086 = vadd.f32 %v4539, %v5085
        %5087 = vmatmul.bf16.gmra.mxu0 %v4697
        %v5088 = vpop.f32.mrf.mxu0
        %v5089 = vadd.f32 %v4539, %v5088
        %v5090 = vpop.f32.mrf.mxu0
        %v5091 = vadd.f32 %v4539, %v5090
        %5092 = vmatmul.bf16.gmra.mxu0 %v4703
        %v5093 = vpop.f32.mrf.mxu0
        %v5094 = vadd.f32 %v4539, %v5093
        %v5095 = vpop.f32.mrf.mxu0
        %v5096 = vadd.f32 %v4539, %v5095
        %5097 = vmatmul.bf16.gmra.mxu0 %v4709
        %v5098 = vpop.f32.mrf.mxu0
        %v5099 = vadd.f32 %v4539, %v5098
        %v5100 = vpop.f32.mrf.mxu0
        %v5101 = vadd.f32 %v4539, %v5100
        %5102 = vmatmul.bf16.gmra.mxu0 %v4715
        %v5103 = vpop.f32.mrf.mxu0
        %v5104 = vadd.f32 %v4539, %v5103
        %v5105 = vpop.f32.mrf.mxu0
        %v5106 = vadd.f32 %v4539, %v5105
        %5107 = vmatmul.bf16.gmra.mxu0 %v4721
        %v5108 = vpop.f32.mrf.mxu0
        %v5109 = vadd.f32 %v4539, %v5108
        %v5110 = vpop.f32.mrf.mxu0
        %v5111 = vadd.f32 %v4539, %v5110
        %5112 = vmatmul.bf16.gmra.mxu0 %v4727
        %v5113 = vpop.f32.mrf.mxu0
        %v5114 = vadd.f32 %v4539, %v5113
        %v5115 = vpop.f32.mrf.mxu0
        %v5116 = vadd.f32 %v4539, %v5115
        %5117 = vdwg.mxu0
        %5118 = vmatpush.bf16.msra.mxu0 %v4988
        %5119 = vmatpush.bf16.msra.mxu0 %v4987
        %5120 = vmatpush.bf16.msra.mxu0 %v4986
        %5121 = vmatpush.bf16.msra.mxu0 %v4985
        %5122 = vmatpush.bf16.msra.mxu0 %v4984
        %5123 = vmatpush.bf16.msra.mxu0 %v4983
        %5124 = vmatpush.bf16.msra.mxu0 %v4982
        %5125 = vmatpush.bf16.msra.mxu0 %v4981
        %5126 = vmatmul.bf16.gmra.mxu0 %v4686
        %v5127 = vpop.f32.mrf.mxu0
        %v5128 = vadd.f32 %v5079, %v5127
        %v5129 = vpop.f32.mrf.mxu0
        %v5130 = vadd.f32 %v5081, %v5129
        %5131 = vmatmul.bf16.gmra.mxu0 %v4692
        %v5132 = vpop.f32.mrf.mxu0
        %v5133 = vadd.f32 %v5084, %v5132
        %v5134 = vpop.f32.mrf.mxu0
        %v5135 = vadd.f32 %v5086, %v5134
        %5136 = vmatmul.bf16.gmra.mxu0 %v4698
        %v5137 = vpop.f32.mrf.mxu0
        %v5138 = vadd.f32 %v5089, %v5137
        %v5139 = vpop.f32.mrf.mxu0
        %v5140 = vadd.f32 %v5091, %v5139
        %5141 = vmatmul.bf16.gmra.mxu0 %v4704
        %v5142 = vpop.f32.mrf.mxu0
        %v5143 = vadd.f32 %v5094, %v5142
        %v5144 = vpop.f32.mrf.mxu0
        %v5145 = vadd.f32 %v5096, %v5144
        %5146 = vmatmul.bf16.gmra.mxu0 %v4710
        %v5147 = vpop.f32.mrf.mxu0
        %v5148 = vadd.f32 %v5099, %v5147
        %v5149 = vpop.f32.mrf.mxu0
        %v5150 = vadd.f32 %v5101, %v5149
        %5151 = vmatmul.bf16.gmra.mxu0 %v4716
        %v5152 = vpop.f32.mrf.mxu0
        %v5153 = vadd.f32 %v5104, %v5152
        %v5154 = vpop.f32.mrf.mxu0
        %v5155 = vadd.f32 %v5106, %v5154
        %5156 = vmatmul.bf16.gmra.mxu0 %v4722
        %v5157 = vpop.f32.mrf.mxu0
        %v5158 = vadd.f32 %v5109, %v5157
        %v5159 = vpop.f32.mrf.mxu0
        %v5160 = vadd.f32 %v5111, %v5159
        %5161 = vmatmul.bf16.gmra.mxu0 %v4728
        %v5162 = vpop.f32.mrf.mxu0
        %v5163 = vadd.f32 %v5114, %v5162
        %v5164 = vpop.f32.mrf.mxu0
        %v5165 = vadd.f32 %v5116, %v5164
        %5166 = vdwg.mxu0
        %5167 = vmatpush.bf16.msra.mxu0 %v4996
        %5168 = vmatpush.bf16.msra.mxu0 %v4995
        %5169 = vmatpush.bf16.msra.mxu0 %v4994
        %5170 = vmatpush.bf16.msra.mxu0 %v4993
        %5171 = vmatpush.bf16.msra.mxu0 %v4992
        %5172 = vmatpush.bf16.msra.mxu0 %v4991
        %5173 = vmatpush.bf16.msra.mxu0 %v4990
        %5174 = vmatpush.bf16.msra.mxu0 %v4989
        %5175 = vmatmul.bf16.gmra.mxu0 %v4687
        %v5176 = vpop.f32.mrf.mxu0
        %v5177 = vadd.f32 %v5128, %v5176
        %v5178 = vpop.f32.mrf.mxu0
        %v5179 = vadd.f32 %v5130, %v5178
        %5180 = vmatmul.bf16.gmra.mxu0 %v4693
        %v5181 = vpop.f32.mrf.mxu0
        %v5182 = vadd.f32 %v5133, %v5181
        %v5183 = vpop.f32.mrf.mxu0
        %v5184 = vadd.f32 %v5135, %v5183
        %5185 = vmatmul.bf16.gmra.mxu0 %v4699
        %v5186 = vpop.f32.mrf.mxu0
        %v5187 = vadd.f32 %v5138, %v5186
        %v5188 = vpop.f32.mrf.mxu0
        %v5189 = vadd.f32 %v5140, %v5188
        %5190 = vmatmul.bf16.gmra.mxu0 %v4705
        %v5191 = vpop.f32.mrf.mxu0
        %v5192 = vadd.f32 %v5143, %v5191
        %v5193 = vpop.f32.mrf.mxu0
        %v5194 = vadd.f32 %v5145, %v5193
        %5195 = vmatmul.bf16.gmra.mxu0 %v4711
        %v5196 = vpop.f32.mrf.mxu0
        %v5197 = vadd.f32 %v5148, %v5196
        %v5198 = vpop.f32.mrf.mxu0
        %v5199 = vadd.f32 %v5150, %v5198
        %5200 = vmatmul.bf16.gmra.mxu0 %v4717
        %v5201 = vpop.f32.mrf.mxu0
        %v5202 = vadd.f32 %v5153, %v5201
        %v5203 = vpop.f32.mrf.mxu0
        %v5204 = vadd.f32 %v5155, %v5203
        %5205 = vmatmul.bf16.gmra.mxu0 %v4723
        %v5206 = vpop.f32.mrf.mxu0
        %v5207 = vadd.f32 %v5158, %v5206
        %v5208 = vpop.f32.mrf.mxu0
        %v5209 = vadd.f32 %v5160, %v5208
        %5210 = vmatmul.bf16.gmra.mxu0 %v4729
        %v5211 = vpop.f32.mrf.mxu0
        %v5212 = vadd.f32 %v5163, %v5211
        %v5213 = vpop.f32.mrf.mxu0
        %v5214 = vadd.f32 %v5165, %v5213
        %5215 = vdwg.mxu0
        %5216 = vmatpush.bf16.msra.mxu0 %v5004
        %5217 = vmatpush.bf16.msra.mxu0 %v5003
        %5218 = vmatpush.bf16.msra.mxu0 %v5002
        %5219 = vmatpush.bf16.msra.mxu0 %v5001
        %5220 = vmatpush.bf16.msra.mxu0 %v5000
        %5221 = vmatpush.bf16.msra.mxu0 %v4999
        %5222 = vmatpush.bf16.msra.mxu0 %v4998
        %5223 = vmatpush.bf16.msra.mxu0 %v4997
        %5224 = vmatmul.bf16.gmra.mxu0 %v4688
        %v5225 = vpop.f32.mrf.mxu0
        %v5226 = vadd.f32 %v5177, %v5225
        %v5227 = vpop.f32.mrf.mxu0
        %v5228 = vadd.f32 %v5179, %v5227
        %5229 = vmatmul.bf16.gmra.mxu0 %v4694
        %v5230 = vpop.f32.mrf.mxu0
        %v5231 = vadd.f32 %v5182, %v5230
        %v5232 = vpop.f32.mrf.mxu0
        %v5233 = vadd.f32 %v5184, %v5232
        %5234 = vmatmul.bf16.gmra.mxu0 %v4700
        %v5235 = vpop.f32.mrf.mxu0
        %v5236 = vadd.f32 %v5187, %v5235
        %v5237 = vpop.f32.mrf.mxu0
        %v5238 = vadd.f32 %v5189, %v5237
        %5239 = vmatmul.bf16.gmra.mxu0 %v4706
        %v5240 = vpop.f32.mrf.mxu0
        %v5241 = vadd.f32 %v5192, %v5240
        %v5242 = vpop.f32.mrf.mxu0
        %v5243 = vadd.f32 %v5194, %v5242
        %5244 = vmatmul.bf16.gmra.mxu0 %v4712
        %v5245 = vpop.f32.mrf.mxu0
        %v5246 = vadd.f32 %v5197, %v5245
        %v5247 = vpop.f32.mrf.mxu0
        %v5248 = vadd.f32 %v5199, %v5247
        %5249 = vmatmul.bf16.gmra.mxu0 %v4718
        %v5250 = vpop.f32.mrf.mxu0
        %v5251 = vadd.f32 %v5202, %v5250
        %v5252 = vpop.f32.mrf.mxu0
        %v5253 = vadd.f32 %v5204, %v5252
        %5254 = vmatmul.bf16.gmra.mxu0 %v4724
        %v5255 = vpop.f32.mrf.mxu0
        %v5256 = vadd.f32 %v5207, %v5255
        %v5257 = vpop.f32.mrf.mxu0
        %v5258 = vadd.f32 %v5209, %v5257
        %5259 = vmatmul.bf16.gmra.mxu0 %v4730
        %v5260 = vpop.f32.mrf.mxu0
        %v5261 = vadd.f32 %v5212, %v5260
        %v5262 = vpop.f32.mrf.mxu0
        %v5263 = vadd.f32 %v5214, %v5262
        %5264 = vdwg.mxu0
        %5265 = vmatpush.bf16.msra.mxu0 %v5012
        %5266 = vmatpush.bf16.msra.mxu0 %v5011
        %5267 = vmatpush.bf16.msra.mxu0 %v5010
        %5268 = vmatpush.bf16.msra.mxu0 %v5009
        %5269 = vmatpush.bf16.msra.mxu0 %v5008
        %5270 = vmatpush.bf16.msra.mxu0 %v5007
        %5271 = vmatpush.bf16.msra.mxu0 %v5006
        %5272 = vmatpush.bf16.msra.mxu0 %v5005
        %5273 = vmatmul.bf16.gmra.mxu0 %v4689
        %v5274 = vpop.f32.mrf.mxu0
        %v5275 = vadd.f32 %v5226, %v5274
        %v5276 = vpop.f32.mrf.mxu0
        %v5277 = vadd.f32 %v5228, %v5276
        %5278 = vmatmul.bf16.gmra.mxu0 %v4695
        %v5279 = vpop.f32.mrf.mxu0
        %v5280 = vadd.f32 %v5231, %v5279
        %v5281 = vpop.f32.mrf.mxu0
        %v5282 = vadd.f32 %v5233, %v5281
        %5283 = vmatmul.bf16.gmra.mxu0 %v4701
        %v5284 = vpop.f32.mrf.mxu0
        %v5285 = vadd.f32 %v5236, %v5284
        %v5286 = vpop.f32.mrf.mxu0
        %v5287 = vadd.f32 %v5238, %v5286
        %5288 = vmatmul.bf16.gmra.mxu0 %v4707
        %v5289 = vpop.f32.mrf.mxu0
        %v5290 = vadd.f32 %v5241, %v5289
        %v5291 = vpop.f32.mrf.mxu0
        %v5292 = vadd.f32 %v5243, %v5291
        %5293 = vmatmul.bf16.gmra.mxu0 %v4713
        %v5294 = vpop.f32.mrf.mxu0
        %v5295 = vadd.f32 %v5246, %v5294
        %v5296 = vpop.f32.mrf.mxu0
        %v5297 = vadd.f32 %v5248, %v5296
        %5298 = vmatmul.bf16.gmra.mxu0 %v4719
        %v5299 = vpop.f32.mrf.mxu0
        %v5300 = vadd.f32 %v5251, %v5299
        %v5301 = vpop.f32.mrf.mxu0
        %v5302 = vadd.f32 %v5253, %v5301
        %5303 = vmatmul.bf16.gmra.mxu0 %v4725
        %v5304 = vpop.f32.mrf.mxu0
        %v5305 = vadd.f32 %v5256, %v5304
        %v5306 = vpop.f32.mrf.mxu0
        %v5307 = vadd.f32 %v5258, %v5306
        %5308 = vmatmul.bf16.gmra.mxu0 %v4731
        %v5309 = vpop.f32.mrf.mxu0
        %v5310 = vadd.f32 %v5261, %v5309
        %v5311 = vpop.f32.mrf.mxu0
        %v5312 = vadd.f32 %v5263, %v5311
        %5313 = vdwg.mxu0
        %5314 = vmatpush.bf16.msra.mxu0 %v5020
        %5315 = vmatpush.bf16.msra.mxu0 %v5019
        %5316 = vmatpush.bf16.msra.mxu0 %v5018
        %5317 = vmatpush.bf16.msra.mxu0 %v5017
        %5318 = vmatpush.bf16.msra.mxu0 %v5016
        %5319 = vmatpush.bf16.msra.mxu0 %v5015
        %5320 = vmatpush.bf16.msra.mxu0 %v5014
        %5321 = vmatpush.bf16.msra.mxu0 %v5013
        %5322 = vmatmul.bf16.gmra.mxu0 %v4690
        %v5323 = vpop.f32.mrf.mxu0
        %v5324 = vadd.f32 %v5275, %v5323
        %v5325 = vpop.f32.mrf.mxu0
        %v5326 = vadd.f32 %v5277, %v5325
        %5327 = vmatmul.bf16.gmra.mxu0 %v4696
        %v5328 = vpop.f32.mrf.mxu0
        %v5329 = vadd.f32 %v5280, %v5328
        %v5330 = vpop.f32.mrf.mxu0
        %v5331 = vadd.f32 %v5282, %v5330
        %5332 = vmatmul.bf16.gmra.mxu0 %v4702
        %v5333 = vpop.f32.mrf.mxu0
        %v5334 = vadd.f32 %v5285, %v5333
        %v5335 = vpop.f32.mrf.mxu0
        %v5336 = vadd.f32 %v5287, %v5335
        %5337 = vmatmul.bf16.gmra.mxu0 %v4708
        %v5338 = vpop.f32.mrf.mxu0
        %v5339 = vadd.f32 %v5290, %v5338
        %v5340 = vpop.f32.mrf.mxu0
        %v5341 = vadd.f32 %v5292, %v5340
        %5342 = vmatmul.bf16.gmra.mxu0 %v4714
        %v5343 = vpop.f32.mrf.mxu0
        %v5344 = vadd.f32 %v5295, %v5343
        %v5345 = vpop.f32.mrf.mxu0
        %v5346 = vadd.f32 %v5297, %v5345
        %5347 = vmatmul.bf16.gmra.mxu0 %v4720
        %v5348 = vpop.f32.mrf.mxu0
        %v5349 = vadd.f32 %v5300, %v5348
        %v5350 = vpop.f32.mrf.mxu0
        %v5351 = vadd.f32 %v5302, %v5350
        %5352 = vmatmul.bf16.gmra.mxu0 %v4726
        %v5353 = vpop.f32.mrf.mxu0
        %v5354 = vadd.f32 %v5305, %v5353
        %v5355 = vpop.f32.mrf.mxu0
        %v5356 = vadd.f32 %v5307, %v5355
        %5357 = vmatmul.bf16.gmra.mxu0 %v4732
        %v5358 = vpop.f32.mrf.mxu0
        %v5359 = vadd.f32 %v5310, %v5358
        %v5360 = vpop.f32.mrf.mxu0
        %v5361 = vadd.f32 %v5312, %v5360
        %5362 = vdwg.mxu0
        %v5363 = vmax.f32 %v5324, 0.0
        %v5364 = vmax.f32 %v5326, 0.0
        %v5365 = vmax.f32 %v5329, 0.0
        %v5366 = vmax.f32 %v5331, 0.0
        %v5367 = vmax.f32 %v5334, 0.0
        %v5368 = vmax.f32 %v5336, 0.0
        %v5369 = vmax.f32 %v5339, 0.0
        %v5370 = vmax.f32 %v5341, 0.0
        %v5371 = vmax.f32 %v5344, 0.0
        %v5372 = vmax.f32 %v5346, 0.0
        %v5373 = vmax.f32 %v5349, 0.0
        %v5374 = vmax.f32 %v5351, 0.0
        %v5375 = vmax.f32 %v5354, 0.0
        %v5376 = vmax.f32 %v5356, 0.0
        %v5377 = vmax.f32 %v5359, 0.0
        %v5378 = vmax.f32 %v5361, 0.0
        %v5379 = vpack.c.bf16 %v5363, %v5363
        %v5380 = vpack.c.bf16 %v5364, %v5364
        %v5381 = vpack.c.bf16 %v5365, %v5365
        %v5382 = vpack.c.bf16 %v5366, %v5366
        %v5383 = vpack.c.bf16 %v5367, %v5367
        %v5384 = vpack.c.bf16 %v5368, %v5368
        %v5385 = vpack.c.bf16 %v5369, %v5369
        %v5386 = vpack.c.bf16 %v5370, %v5370
        %v5387 = vpack.c.bf16 %v5371, %v5371
        %v5388 = vpack.c.bf16 %v5372, %v5372
        %v5389 = vpack.c.bf16 %v5373, %v5373
        %v5390 = vpack.c.bf16 %v5374, %v5374
        %v5391 = vpack.c.bf16 %v5375, %v5375
        %v5392 = vpack.c.bf16 %v5376, %v5376
        %v5393 = vpack.c.bf16 %v5377, %v5377
        %v5394 = vpack.c.bf16 %v5378, %v5378
        %5395 = vst [vmem:[#allocation4] sm:$0xf] %v5379
        %5396 = vst [vmem:[#allocation4 + $0x4] sm:$0xf] %v5380
        %5397 = vst [vmem:[#allocation4 + $0x8] sm:$0xf] %v5381
        %5398 = vst [vmem:[#allocation4 + $0xc] sm:$0xf] %v5382
        %5399 = vst [vmem:[#allocation4 + $0x10] sm:$0xf] %v5383
        %5400 = vst [vmem:[#allocation4 + $0x14] sm:$0xf] %v5384
        %5401 = vst [vmem:[#allocation4 + $0x18] sm:$0xf] %v5385
        %5402 = vst [vmem:[#allocation4 + $0x1c] sm:$0xf] %v5386
        %5403 = vst [vmem:[#allocation4 + $0x20] sm:$0xf] %v5387
        %5404 = vst [vmem:[#allocation4 + $0x24] sm:$0xf] %v5388
        %5405 = vst [vmem:[#allocation4 + $0x28] sm:$0xf] %v5389
        %5406 = vst [vmem:[#allocation4 + $0x2c] sm:$0xf] %v5390
        %5407 = vst [vmem:[#allocation4 + $0x30] sm:$0xf] %v5391
        %5408 = vst [vmem:[#allocation4 + $0x34] sm:$0xf] %v5392
        %5409 = vst [vmem:[#allocation4 + $0x38] sm:$0xf] %v5393
        %5410 = vst [vmem:[#allocation4 + $0x3c] sm:$0xf] %v5394
        %v5411 = vld [vmem:[#allocation3 + $0x180] sm:$0xff]
        %v5412 = vld [vmem:[#allocation3 + $0x188] sm:$0xff]
        %v5413 = vld [vmem:[#allocation3 + $0x190] sm:$0xff]
        %v5414 = vld [vmem:[#allocation3 + $0x198] sm:$0xff]
        %v5415 = vld [vmem:[#allocation3 + $0x1a0] sm:$0xff]
        %v5416 = vld [vmem:[#allocation3 + $0x1a8] sm:$0xff]
        %v5417 = vld [vmem:[#allocation3 + $0x1b0] sm:$0xff]
        %v5418 = vld [vmem:[#allocation3 + $0x1b8] sm:$0xff]
        %v5419 = vld [vmem:[#allocation3 + $0x1c0] sm:$0xff]
        %v5420 = vld [vmem:[#allocation3 + $0x1c8] sm:$0xff]
        %v5421 = vld [vmem:[#allocation3 + $0x1d0] sm:$0xff]
        %v5422 = vld [vmem:[#allocation3 + $0x1d8] sm:$0xff]
        %v5423 = vld [vmem:[#allocation3 + $0x1e0] sm:$0xff]
        %v5424 = vld [vmem:[#allocation3 + $0x1e8] sm:$0xff]
        %v5425 = vld [vmem:[#allocation3 + $0x1f0] sm:$0xff]
        %v5426 = vld [vmem:[#allocation3 + $0x1f8] sm:$0xff]
        %v5427 = vld [vmem:[#allocation3 + $0x200] sm:$0xff]
        %v5428 = vld [vmem:[#allocation3 + $0x208] sm:$0xff]
        %v5429 = vld [vmem:[#allocation3 + $0x210] sm:$0xff]
        %v5430 = vld [vmem:[#allocation3 + $0x218] sm:$0xff]
        %v5431 = vld [vmem:[#allocation3 + $0x220] sm:$0xff]
        %v5432 = vld [vmem:[#allocation3 + $0x228] sm:$0xff]
        %v5433 = vld [vmem:[#allocation3 + $0x230] sm:$0xff]
        %v5434 = vld [vmem:[#allocation3 + $0x238] sm:$0xff]
        %v5435 = vld [vmem:[#allocation3 + $0x240] sm:$0xff]
        %v5436 = vld [vmem:[#allocation3 + $0x248] sm:$0xff]
        %v5437 = vld [vmem:[#allocation3 + $0x250] sm:$0xff]
        %v5438 = vld [vmem:[#allocation3 + $0x258] sm:$0xff]
        %v5439 = vld [vmem:[#allocation3 + $0x260] sm:$0xff]
        %v5440 = vld [vmem:[#allocation3 + $0x268] sm:$0xff]
        %v5441 = vld [vmem:[#allocation3 + $0x270] sm:$0xff]
        %v5442 = vld [vmem:[#allocation3 + $0x278] sm:$0xff]
        %v5443 = vld [vmem:[#allocation3 + $0x280] sm:$0xff]
        %v5444 = vld [vmem:[#allocation3 + $0x288] sm:$0xff]
        %v5445 = vld [vmem:[#allocation3 + $0x290] sm:$0xff]
        %v5446 = vld [vmem:[#allocation3 + $0x298] sm:$0xff]
        %v5447 = vld [vmem:[#allocation3 + $0x2a0] sm:$0xff]
        %v5448 = vld [vmem:[#allocation3 + $0x2a8] sm:$0xff]
        %v5449 = vld [vmem:[#allocation3 + $0x2b0] sm:$0xff]
        %v5450 = vld [vmem:[#allocation3 + $0x2b8] sm:$0xff]
        %v5451 = vld [vmem:[#allocation3 + $0x2c0] sm:$0xff]
        %v5452 = vld [vmem:[#allocation3 + $0x2c8] sm:$0xff]
        %v5453 = vld [vmem:[#allocation3 + $0x2d0] sm:$0xff]
        %v5454 = vld [vmem:[#allocation3 + $0x2d8] sm:$0xff]
        %v5455 = vld [vmem:[#allocation3 + $0x2e0] sm:$0xff]
        %v5456 = vld [vmem:[#allocation3 + $0x2e8] sm:$0xff]
        %v5457 = vld [vmem:[#allocation3 + $0x2f0] sm:$0xff]
        %v5458 = vld [vmem:[#allocation3 + $0x2f8] sm:$0xff]
        %v5507 = vunpack.c.l.b16 %v5411
        %v5508 = vunpack.c.h.b16 %v5411
        %v5509 = vunpack.c.l.b16 %v5412
        %v5510 = vunpack.c.h.b16 %v5412
        %v5511 = vunpack.c.l.b16 %v5413
        %v5512 = vunpack.c.h.b16 %v5413
        %v5513 = vunpack.c.l.b16 %v5414
        %v5514 = vunpack.c.h.b16 %v5414
        %v5515 = vunpack.c.l.b16 %v5415
        %v5516 = vunpack.c.h.b16 %v5415
        %v5517 = vunpack.c.l.b16 %v5416
        %v5518 = vunpack.c.h.b16 %v5416
        %v5519 = vunpack.c.l.b16 %v5417
        %v5520 = vunpack.c.h.b16 %v5417
        %v5521 = vunpack.c.l.b16 %v5418
        %v5522 = vunpack.c.h.b16 %v5418
        %v5523 = vunpack.c.l.b16 %v5419
        %v5524 = vunpack.c.h.b16 %v5419
        %v5525 = vunpack.c.l.b16 %v5420
        %v5526 = vunpack.c.h.b16 %v5420
        %v5527 = vunpack.c.l.b16 %v5421
        %v5528 = vunpack.c.h.b16 %v5421
        %v5529 = vunpack.c.l.b16 %v5422
        %v5530 = vunpack.c.h.b16 %v5422
        %v5531 = vunpack.c.l.b16 %v5423
        %v5532 = vunpack.c.h.b16 %v5423
        %v5533 = vunpack.c.l.b16 %v5424
        %v5534 = vunpack.c.h.b16 %v5424
        %v5535 = vunpack.c.l.b16 %v5425
        %v5536 = vunpack.c.h.b16 %v5425
        %v5537 = vunpack.c.l.b16 %v5426
        %v5538 = vunpack.c.h.b16 %v5426
        %v5539 = vunpack.c.l.b16 %v5427
        %v5540 = vunpack.c.h.b16 %v5427
        %v5541 = vunpack.c.l.b16 %v5428
        %v5542 = vunpack.c.h.b16 %v5428
        %v5543 = vunpack.c.l.b16 %v5429
        %v5544 = vunpack.c.h.b16 %v5429
        %v5545 = vunpack.c.l.b16 %v5430
        %v5546 = vunpack.c.h.b16 %v5430
        %v5547 = vunpack.c.l.b16 %v5431
        %v5548 = vunpack.c.h.b16 %v5431
        %v5549 = vunpack.c.l.b16 %v5432
        %v5550 = vunpack.c.h.b16 %v5432
        %v5551 = vunpack.c.l.b16 %v5433
        %v5552 = vunpack.c.h.b16 %v5433
        %v5553 = vunpack.c.l.b16 %v5434
        %v5554 = vunpack.c.h.b16 %v5434
        %v5555 = vunpack.c.l.b16 %v5435
        %v5556 = vunpack.c.h.b16 %v5435
        %v5557 = vunpack.c.l.b16 %v5436
        %v5558 = vunpack.c.h.b16 %v5436
        %v5559 = vunpack.c.l.b16 %v5437
        %v5560 = vunpack.c.h.b16 %v5437
        %v5561 = vunpack.c.l.b16 %v5438
        %v5562 = vunpack.c.h.b16 %v5438
        %v5563 = vunpack.c.l.b16 %v5439
        %v5564 = vunpack.c.h.b16 %v5439
        %v5565 = vunpack.c.l.b16 %v5440
        %v5566 = vunpack.c.h.b16 %v5440
        %v5567 = vunpack.c.l.b16 %v5441
        %v5568 = vunpack.c.h.b16 %v5441
        %v5569 = vunpack.c.l.b16 %v5442
        %v5570 = vunpack.c.h.b16 %v5442
        %v5571 = vunpack.c.l.b16 %v5443
        %v5572 = vunpack.c.h.b16 %v5443
        %v5573 = vunpack.c.l.b16 %v5444
        %v5574 = vunpack.c.h.b16 %v5444
        %v5575 = vunpack.c.l.b16 %v5445
        %v5576 = vunpack.c.h.b16 %v5445
        %v5577 = vunpack.c.l.b16 %v5446
        %v5578 = vunpack.c.h.b16 %v5446
        %v5579 = vunpack.c.l.b16 %v5447
        %v5580 = vunpack.c.h.b16 %v5447
        %v5581 = vunpack.c.l.b16 %v5448
        %v5582 = vunpack.c.h.b16 %v5448
        %v5583 = vunpack.c.l.b16 %v5449
        %v5584 = vunpack.c.h.b16 %v5449
        %v5585 = vunpack.c.l.b16 %v5450
        %v5586 = vunpack.c.h.b16 %v5450
        %v5587 = vunpack.c.l.b16 %v5451
        %v5588 = vunpack.c.h.b16 %v5451
        %v5589 = vunpack.c.l.b16 %v5452
        %v5590 = vunpack.c.h.b16 %v5452
        %v5591 = vunpack.c.l.b16 %v5453
        %v5592 = vunpack.c.h.b16 %v5453
        %v5593 = vunpack.c.l.b16 %v5454
        %v5594 = vunpack.c.h.b16 %v5454
        %v5595 = vunpack.c.l.b16 %v5455
        %v5596 = vunpack.c.h.b16 %v5455
        %v5597 = vunpack.c.l.b16 %v5456
        %v5598 = vunpack.c.h.b16 %v5456
        %v5599 = vunpack.c.l.b16 %v5457
        %v5600 = vunpack.c.h.b16 %v5457
        %v5601 = vunpack.c.l.b16 %v5458
        %v5602 = vunpack.c.h.b16 %v5458
        %v5603 = vpack.c.b16 %v5513, %v5507
        %v5604 = vpack.c.b16 %v5514, %v5508
        %v5605 = vpack.c.b16 %v5515, %v5509
        %v5606 = vpack.c.b16 %v5516, %v5510
        %v5607 = vpack.c.b16 %v5517, %v5511
        %v5608 = vpack.c.b16 %v5518, %v5512
        %v5609 = vpack.c.b16 %v5525, %v5519
        %v5610 = vpack.c.b16 %v5526, %v5520
        %v5611 = vpack.c.b16 %v5527, %v5521
        %v5612 = vpack.c.b16 %v5528, %v5522
        %v5613 = vpack.c.b16 %v5529, %v5523
        %v5614 = vpack.c.b16 %v5530, %v5524
        %v5615 = vpack.c.b16 %v5537, %v5531
        %v5616 = vpack.c.b16 %v5538, %v5532
        %v5617 = vpack.c.b16 %v5539, %v5533
        %v5618 = vpack.c.b16 %v5540, %v5534
        %v5619 = vpack.c.b16 %v5541, %v5535
        %v5620 = vpack.c.b16 %v5542, %v5536
        %v5621 = vpack.c.b16 %v5549, %v5543
        %v5622 = vpack.c.b16 %v5550, %v5544
        %v5623 = vpack.c.b16 %v5551, %v5545
        %v5624 = vpack.c.b16 %v5552, %v5546
        %v5625 = vpack.c.b16 %v5553, %v5547
        %v5626 = vpack.c.b16 %v5554, %v5548
        %v5627 = vpack.c.b16 %v5561, %v5555
        %v5628 = vpack.c.b16 %v5562, %v5556
        %v5629 = vpack.c.b16 %v5563, %v5557
        %v5630 = vpack.c.b16 %v5564, %v5558
        %v5631 = vpack.c.b16 %v5565, %v5559
        %v5632 = vpack.c.b16 %v5566, %v5560
        %v5633 = vpack.c.b16 %v5573, %v5567
        %v5634 = vpack.c.b16 %v5574, %v5568
        %v5635 = vpack.c.b16 %v5575, %v5569
        %v5636 = vpack.c.b16 %v5576, %v5570
        %v5637 = vpack.c.b16 %v5577, %v5571
        %v5638 = vpack.c.b16 %v5578, %v5572
        %v5639 = vpack.c.b16 %v5585, %v5579
        %v5640 = vpack.c.b16 %v5586, %v5580
        %v5641 = vpack.c.b16 %v5587, %v5581
        %v5642 = vpack.c.b16 %v5588, %v5582
        %v5643 = vpack.c.b16 %v5589, %v5583
        %v5644 = vpack.c.b16 %v5590, %v5584
        %v5645 = vpack.c.b16 %v5597, %v5591
        %v5646 = vpack.c.b16 %v5598, %v5592
        %v5647 = vpack.c.b16 %v5599, %v5593
        %v5648 = vpack.c.b16 %v5600, %v5594
        %v5649 = vpack.c.b16 %v5601, %v5595
        %v5650 = vpack.c.b16 %v5602, %v5596
        %5699 = vmatpush.bf16.msra.mxu0 %v4980
        %5700 = vmatpush.bf16.msra.mxu0 %v4979
        %5701 = vmatpush.bf16.msra.mxu0 %v4978
        %5702 = vmatpush.bf16.msra.mxu0 %v4977
        %5703 = vmatpush.bf16.msra.mxu0 %v4976
        %5704 = vmatpush.bf16.msra.mxu0 %v4975
        %5705 = vmatpush.bf16.msra.mxu0 %v4974
        %5706 = vmatpush.bf16.msra.mxu0 %v4973
        %5707 = vmatmul.bf16.gmra.mxu0 %v5603
        %v5708 = vpop.f32.mrf.mxu0
        %v5709 = vadd.f32 %v4539, %v5708
        %v5710 = vpop.f32.mrf.mxu0
        %v5711 = vadd.f32 %v4539, %v5710
        %5712 = vmatmul.bf16.gmra.mxu0 %v5609
        %v5713 = vpop.f32.mrf.mxu0
        %v5714 = vadd.f32 %v4539, %v5713
        %v5715 = vpop.f32.mrf.mxu0
        %v5716 = vadd.f32 %v4539, %v5715
        %5717 = vmatmul.bf16.gmra.mxu0 %v5615
        %v5718 = vpop.f32.mrf.mxu0
        %v5719 = vadd.f32 %v4539, %v5718
        %v5720 = vpop.f32.mrf.mxu0
        %v5721 = vadd.f32 %v4539, %v5720
        %5722 = vmatmul.bf16.gmra.mxu0 %v5621
        %v5723 = vpop.f32.mrf.mxu0
        %v5724 = vadd.f32 %v4539, %v5723
        %v5725 = vpop.f32.mrf.mxu0
        %v5726 = vadd.f32 %v4539, %v5725
        %5727 = vmatmul.bf16.gmra.mxu0 %v5627
        %v5728 = vpop.f32.mrf.mxu0
        %v5729 = vadd.f32 %v4539, %v5728
        %v5730 = vpop.f32.mrf.mxu0
        %v5731 = vadd.f32 %v4539, %v5730
        %5732 = vmatmul.bf16.gmra.mxu0 %v5633
        %v5733 = vpop.f32.mrf.mxu0
        %v5734 = vadd.f32 %v4539, %v5733
        %v5735 = vpop.f32.mrf.mxu0
        %v5736 = vadd.f32 %v4539, %v5735
        %5737 = vmatmul.bf16.gmra.mxu0 %v5639
        %v5738 = vpop.f32.mrf.mxu0
        %v5739 = vadd.f32 %v4539, %v5738
        %v5740 = vpop.f32.mrf.mxu0
        %v5741 = vadd.f32 %v4539, %v5740
        %5742 = vmatmul.bf16.gmra.mxu0 %v5645
        %v5743 = vpop.f32.mrf.mxu0
        %v5744 = vadd.f32 %v4539, %v5743
        %v5745 = vpop.f32.mrf.mxu0
        %v5746 = vadd.f32 %v4539, %v5745
        %5747 = vdwg.mxu0
        %5748 = vmatpush.bf16.msra.mxu0 %v4988
        %5749 = vmatpush.bf16.msra.mxu0 %v4987
        %5750 = vmatpush.bf16.msra.mxu0 %v4986
        %5751 = vmatpush.bf16.msra.mxu0 %v4985
        %5752 = vmatpush.bf16.msra.mxu0 %v4984
        %5753 = vmatpush.bf16.msra.mxu0 %v4983
        %5754 = vmatpush.bf16.msra.mxu0 %v4982
        %5755 = vmatpush.bf16.msra.mxu0 %v4981
        %5756 = vmatmul.bf16.gmra.mxu0 %v5604
        %v5757 = vpop.f32.mrf.mxu0
        %v5758 = vadd.f32 %v5709, %v5757
        %v5759 = vpop.f32.mrf.mxu0
        %v5760 = vadd.f32 %v5711, %v5759
        %5761 = vmatmul.bf16.gmra.mxu0 %v5610
        %v5762 = vpop.f32.mrf.mxu0
        %v5763 = vadd.f32 %v5714, %v5762
        %v5764 = vpop.f32.mrf.mxu0
        %v5765 = vadd.f32 %v5716, %v5764
        %5766 = vmatmul.bf16.gmra.mxu0 %v5616
        %v5767 = vpop.f32.mrf.mxu0
        %v5768 = vadd.f32 %v5719, %v5767
        %v5769 = vpop.f32.mrf.mxu0
        %v5770 = vadd.f32 %v5721, %v5769
        %5771 = vmatmul.bf16.gmra.mxu0 %v5622
        %v5772 = vpop.f32.mrf.mxu0
        %v5773 = vadd.f32 %v5724, %v5772
        %v5774 = vpop.f32.mrf.mxu0
        %v5775 = vadd.f32 %v5726, %v5774
        %5776 = vmatmul.bf16.gmra.mxu0 %v5628
        %v5777 = vpop.f32.mrf.mxu0
        %v5778 = vadd.f32 %v5729, %v5777
        %v5779 = vpop.f32.mrf.mxu0
        %v5780 = vadd.f32 %v5731, %v5779
        %5781 = vmatmul.bf16.gmra.mxu0 %v5634
        %v5782 = vpop.f32.mrf.mxu0
        %v5783 = vadd.f32 %v5734, %v5782
        %v5784 = vpop.f32.mrf.mxu0
        %v5785 = vadd.f32 %v5736, %v5784
        %5786 = vmatmul.bf16.gmra.mxu0 %v5640
        %v5787 = vpop.f32.mrf.mxu0
        %v5788 = vadd.f32 %v5739, %v5787
        %v5789 = vpop.f32.mrf.mxu0
        %v5790 = vadd.f32 %v5741, %v5789
        %5791 = vmatmul.bf16.gmra.mxu0 %v5646
        %v5792 = vpop.f32.mrf.mxu0
        %v5793 = vadd.f32 %v5744, %v5792
        %v5794 = vpop.f32.mrf.mxu0
        %v5795 = vadd.f32 %v5746, %v5794
        %5796 = vdwg.mxu0
        %5797 = vmatpush.bf16.msra.mxu0 %v4996
        %5798 = vmatpush.bf16.msra.mxu0 %v4995
        %5799 = vmatpush.bf16.msra.mxu0 %v4994
        %5800 = vmatpush.bf16.msra.mxu0 %v4993
        %5801 = vmatpush.bf16.msra.mxu0 %v4992
        %5802 = vmatpush.bf16.msra.mxu0 %v4991
        %5803 = vmatpush.bf16.msra.mxu0 %v4990
        %5804 = vmatpush.bf16.msra.mxu0 %v4989
        %5805 = vmatmul.bf16.gmra.mxu0 %v5605
        %v5806 = vpop.f32.mrf.mxu0
        %v5807 = vadd.f32 %v5758, %v5806
        %v5808 = vpop.f32.mrf.mxu0
        %v5809 = vadd.f32 %v5760, %v5808
        %5810 = vmatmul.bf16.gmra.mxu0 %v5611
        %v5811 = vpop.f32.mrf.mxu0
        %v5812 = vadd.f32 %v5763, %v5811
        %v5813 = vpop.f32.mrf.mxu0
        %v5814 = vadd.f32 %v5765, %v5813
        %5815 = vmatmul.bf16.gmra.mxu0 %v5617
        %v5816 = vpop.f32.mrf.mxu0
        %v5817 = vadd.f32 %v5768, %v5816
        %v5818 = vpop.f32.mrf.mxu0
        %v5819 = vadd.f32 %v5770, %v5818
        %5820 = vmatmul.bf16.gmra.mxu0 %v5623
        %v5821 = vpop.f32.mrf.mxu0
        %v5822 = vadd.f32 %v5773, %v5821
        %v5823 = vpop.f32.mrf.mxu0
        %v5824 = vadd.f32 %v5775, %v5823
        %5825 = vmatmul.bf16.gmra.mxu0 %v5629
        %v5826 = vpop.f32.mrf.mxu0
        %v5827 = vadd.f32 %v5778, %v5826
        %v5828 = vpop.f32.mrf.mxu0
        %v5829 = vadd.f32 %v5780, %v5828
        %5830 = vmatmul.bf16.gmra.mxu0 %v5635
        %v5831 = vpop.f32.mrf.mxu0
        %v5832 = vadd.f32 %v5783, %v5831
        %v5833 = vpop.f32.mrf.mxu0
        %v5834 = vadd.f32 %v5785, %v5833
        %5835 = vmatmul.bf16.gmra.mxu0 %v5641
        %v5836 = vpop.f32.mrf.mxu0
        %v5837 = vadd.f32 %v5788, %v5836
        %v5838 = vpop.f32.mrf.mxu0
        %v5839 = vadd.f32 %v5790, %v5838
        %5840 = vmatmul.bf16.gmra.mxu0 %v5647
        %v5841 = vpop.f32.mrf.mxu0
        %v5842 = vadd.f32 %v5793, %v5841
        %v5843 = vpop.f32.mrf.mxu0
        %v5844 = vadd.f32 %v5795, %v5843
        %5845 = vdwg.mxu0
        %5846 = vmatpush.bf16.msra.mxu0 %v5004
        %5847 = vmatpush.bf16.msra.mxu0 %v5003
        %5848 = vmatpush.bf16.msra.mxu0 %v5002
        %5849 = vmatpush.bf16.msra.mxu0 %v5001
        %5850 = vmatpush.bf16.msra.mxu0 %v5000
        %5851 = vmatpush.bf16.msra.mxu0 %v4999
        %5852 = vmatpush.bf16.msra.mxu0 %v4998
        %5853 = vmatpush.bf16.msra.mxu0 %v4997
        %5854 = vmatmul.bf16.gmra.mxu0 %v5606
        %v5855 = vpop.f32.mrf.mxu0
        %v5856 = vadd.f32 %v5807, %v5855
        %v5857 = vpop.f32.mrf.mxu0
        %v5858 = vadd.f32 %v5809, %v5857
        %5859 = vmatmul.bf16.gmra.mxu0 %v5612
        %v5860 = vpop.f32.mrf.mxu0
        %v5861 = vadd.f32 %v5812, %v5860
        %v5862 = vpop.f32.mrf.mxu0
        %v5863 = vadd.f32 %v5814, %v5862
        %5864 = vmatmul.bf16.gmra.mxu0 %v5618
        %v5865 = vpop.f32.mrf.mxu0
        %v5866 = vadd.f32 %v5817, %v5865
        %v5867 = vpop.f32.mrf.mxu0
        %v5868 = vadd.f32 %v5819, %v5867
        %5869 = vmatmul.bf16.gmra.mxu0 %v5624
        %v5870 = vpop.f32.mrf.mxu0
        %v5871 = vadd.f32 %v5822, %v5870
        %v5872 = vpop.f32.mrf.mxu0
        %v5873 = vadd.f32 %v5824, %v5872
        %5874 = vmatmul.bf16.gmra.mxu0 %v5630
        %v5875 = vpop.f32.mrf.mxu0
        %v5876 = vadd.f32 %v5827, %v5875
        %v5877 = vpop.f32.mrf.mxu0
        %v5878 = vadd.f32 %v5829, %v5877
        %5879 = vmatmul.bf16.gmra.mxu0 %v5636
        %v5880 = vpop.f32.mrf.mxu0
        %v5881 = vadd.f32 %v5832, %v5880
        %v5882 = vpop.f32.mrf.mxu0
        %v5883 = vadd.f32 %v5834, %v5882
        %5884 = vmatmul.bf16.gmra.mxu0 %v5642
        %v5885 = vpop.f32.mrf.mxu0
        %v5886 = vadd.f32 %v5837, %v5885
        %v5887 = vpop.f32.mrf.mxu0
        %v5888 = vadd.f32 %v5839, %v5887
        %5889 = vmatmul.bf16.gmra.mxu0 %v5648
        %v5890 = vpop.f32.mrf.mxu0
        %v5891 = vadd.f32 %v5842, %v5890
        %v5892 = vpop.f32.mrf.mxu0
        %v5893 = vadd.f32 %v5844, %v5892
        %5894 = vdwg.mxu0
        %5895 = vmatpush.bf16.msra.mxu0 %v5012
        %5896 = vmatpush.bf16.msra.mxu0 %v5011
        %5897 = vmatpush.bf16.msra.mxu0 %v5010
        %5898 = vmatpush.bf16.msra.mxu0 %v5009
        %5899 = vmatpush.bf16.msra.mxu0 %v5008
        %5900 = vmatpush.bf16.msra.mxu0 %v5007
        %5901 = vmatpush.bf16.msra.mxu0 %v5006
        %5902 = vmatpush.bf16.msra.mxu0 %v5005
        %5903 = vmatmul.bf16.gmra.mxu0 %v5607
        %v5904 = vpop.f32.mrf.mxu0
        %v5905 = vadd.f32 %v5856, %v5904
        %v5906 = vpop.f32.mrf.mxu0
        %v5907 = vadd.f32 %v5858, %v5906
        %5908 = vmatmul.bf16.gmra.mxu0 %v5613
        %v5909 = vpop.f32.mrf.mxu0
        %v5910 = vadd.f32 %v5861, %v5909
        %v5911 = vpop.f32.mrf.mxu0
        %v5912 = vadd.f32 %v5863, %v5911
        %5913 = vmatmul.bf16.gmra.mxu0 %v5619
        %v5914 = vpop.f32.mrf.mxu0
        %v5915 = vadd.f32 %v5866, %v5914
        %v5916 = vpop.f32.mrf.mxu0
        %v5917 = vadd.f32 %v5868, %v5916
        %5918 = vmatmul.bf16.gmra.mxu0 %v5625
        %v5919 = vpop.f32.mrf.mxu0
        %v5920 = vadd.f32 %v5871, %v5919
        %v5921 = vpop.f32.mrf.mxu0
        %v5922 = vadd.f32 %v5873, %v5921
        %5923 = vmatmul.bf16.gmra.mxu0 %v5631
        %v5924 = vpop.f32.mrf.mxu0
        %v5925 = vadd.f32 %v5876, %v5924
        %v5926 = vpop.f32.mrf.mxu0
        %v5927 = vadd.f32 %v5878, %v5926
        %5928 = vmatmul.bf16.gmra.mxu0 %v5637
        %v5929 = vpop.f32.mrf.mxu0
        %v5930 = vadd.f32 %v5881, %v5929
        %v5931 = vpop.f32.mrf.mxu0
        %v5932 = vadd.f32 %v5883, %v5931
        %5933 = vmatmul.bf16.gmra.mxu0 %v5643
        %v5934 = vpop.f32.mrf.mxu0
        %v5935 = vadd.f32 %v5886, %v5934
        %v5936 = vpop.f32.mrf.mxu0
        %v5937 = vadd.f32 %v5888, %v5936
        %5938 = vmatmul.bf16.gmra.mxu0 %v5649
        %v5939 = vpop.f32.mrf.mxu0
        %v5940 = vadd.f32 %v5891, %v5939
        %v5941 = vpop.f32.mrf.mxu0
        %v5942 = vadd.f32 %v5893, %v5941
        %5943 = vdwg.mxu0
        %5944 = vmatpush.bf16.msra.mxu0 %v5020
        %5945 = vmatpush.bf16.msra.mxu0 %v5019
        %5946 = vmatpush.bf16.msra.mxu0 %v5018
        %5947 = vmatpush.bf16.msra.mxu0 %v5017
        %5948 = vmatpush.bf16.msra.mxu0 %v5016
        %5949 = vmatpush.bf16.msra.mxu0 %v5015
        %5950 = vmatpush.bf16.msra.mxu0 %v5014
        %5951 = vmatpush.bf16.msra.mxu0 %v5013
        %5952 = vmatmul.bf16.gmra.mxu0 %v5608
        %v5953 = vpop.f32.mrf.mxu0
        %v5954 = vadd.f32 %v5905, %v5953
        %v5955 = vpop.f32.mrf.mxu0
        %v5956 = vadd.f32 %v5907, %v5955
        %5957 = vmatmul.bf16.gmra.mxu0 %v5614
        %v5958 = vpop.f32.mrf.mxu0
        %v5959 = vadd.f32 %v5910, %v5958
        %v5960 = vpop.f32.mrf.mxu0
        %v5961 = vadd.f32 %v5912, %v5960
        %5962 = vmatmul.bf16.gmra.mxu0 %v5620
        %v5963 = vpop.f32.mrf.mxu0
        %v5964 = vadd.f32 %v5915, %v5963
        %v5965 = vpop.f32.mrf.mxu0
        %v5966 = vadd.f32 %v5917, %v5965
        %5967 = vmatmul.bf16.gmra.mxu0 %v5626
        %v5968 = vpop.f32.mrf.mxu0
        %v5969 = vadd.f32 %v5920, %v5968
        %v5970 = vpop.f32.mrf.mxu0
        %v5971 = vadd.f32 %v5922, %v5970
        %5972 = vmatmul.bf16.gmra.mxu0 %v5632
        %v5973 = vpop.f32.mrf.mxu0
        %v5974 = vadd.f32 %v5925, %v5973
        %v5975 = vpop.f32.mrf.mxu0
        %v5976 = vadd.f32 %v5927, %v5975
        %5977 = vmatmul.bf16.gmra.mxu0 %v5638
        %v5978 = vpop.f32.mrf.mxu0
        %v5979 = vadd.f32 %v5930, %v5978
        %v5980 = vpop.f32.mrf.mxu0
        %v5981 = vadd.f32 %v5932, %v5980
        %5982 = vmatmul.bf16.gmra.mxu0 %v5644
        %v5983 = vpop.f32.mrf.mxu0
        %v5984 = vadd.f32 %v5935, %v5983
        %v5985 = vpop.f32.mrf.mxu0
        %v5986 = vadd.f32 %v5937, %v5985
        %5987 = vmatmul.bf16.gmra.mxu0 %v5650
        %v5988 = vpop.f32.mrf.mxu0
        %v5989 = vadd.f32 %v5940, %v5988
        %v5990 = vpop.f32.mrf.mxu0
        %v5991 = vadd.f32 %v5942, %v5990
        %5992 = vdwg.mxu0
        %v5993 = vmax.f32 %v5954, 0.0
        %v5994 = vmax.f32 %v5956, 0.0
        %v5995 = vmax.f32 %v5959, 0.0
        %v5996 = vmax.f32 %v5961, 0.0
        %v5997 = vmax.f32 %v5964, 0.0
        %v5998 = vmax.f32 %v5966, 0.0
        %v5999 = vmax.f32 %v5969, 0.0
        %v6000 = vmax.f32 %v5971, 0.0
        %v6001 = vmax.f32 %v5974, 0.0
        %v6002 = vmax.f32 %v5976, 0.0
        %v6003 = vmax.f32 %v5979, 0.0
        %v6004 = vmax.f32 %v5981, 0.0
        %v6005 = vmax.f32 %v5984, 0.0
        %v6006 = vmax.f32 %v5986, 0.0
        %v6007 = vmax.f32 %v5989, 0.0
        %v6008 = vmax.f32 %v5991, 0.0
        %v6009 = vpack.c.bf16 %v5993, %v5993
        %v6010 = vpack.c.bf16 %v5994, %v5994
        %v6011 = vpack.c.bf16 %v5995, %v5995
        %v6012 = vpack.c.bf16 %v5996, %v5996
        %v6013 = vpack.c.bf16 %v5997, %v5997
        %v6014 = vpack.c.bf16 %v5998, %v5998
        %v6015 = vpack.c.bf16 %v5999, %v5999
        %v6016 = vpack.c.bf16 %v6000, %v6000
        %v6017 = vpack.c.bf16 %v6001, %v6001
        %v6018 = vpack.c.bf16 %v6002, %v6002
        %v6019 = vpack.c.bf16 %v6003, %v6003
        %v6020 = vpack.c.bf16 %v6004, %v6004
        %v6021 = vpack.c.bf16 %v6005, %v6005
        %v6022 = vpack.c.bf16 %v6006, %v6006
        %v6023 = vpack.c.bf16 %v6007, %v6007
        %v6024 = vpack.c.bf16 %v6008, %v6008
        %6025 = vst [vmem:[#allocation4 + $0x40] sm:$0xf] %v6009
        %6026 = vst [vmem:[#allocation4 + $0x44] sm:$0xf] %v6010
        %6027 = vst [vmem:[#allocation4 + $0x48] sm:$0xf] %v6011
        %6028 = vst [vmem:[#allocation4 + $0x4c] sm:$0xf] %v6012
        %6029 = vst [vmem:[#allocation4 + $0x50] sm:$0xf] %v6013
        %6030 = vst [vmem:[#allocation4 + $0x54] sm:$0xf] %v6014
        %6031 = vst [vmem:[#allocation4 + $0x58] sm:$0xf] %v6015
        %6032 = vst [vmem:[#allocation4 + $0x5c] sm:$0xf] %v6016
        %6033 = vst [vmem:[#allocation4 + $0x60] sm:$0xf] %v6017
        %6034 = vst [vmem:[#allocation4 + $0x64] sm:$0xf] %v6018
        %6035 = vst [vmem:[#allocation4 + $0x68] sm:$0xf] %v6019
        %6036 = vst [vmem:[#allocation4 + $0x6c] sm:$0xf] %v6020
        %6037 = vst [vmem:[#allocation4 + $0x70] sm:$0xf] %v6021
        %6038 = vst [vmem:[#allocation4 + $0x74] sm:$0xf] %v6022
        %6039 = vst [vmem:[#allocation4 + $0x78] sm:$0xf] %v6023
        %6040 = vst [vmem:[#allocation4 + $0x7c] sm:$0xf] %v6024
        %v6041 = vld [vmem:[%s7] sm:$0xff]
        %v6042 = vld [vmem:[#allocation4] sm:$0xf]
        %v6043 = vld [vmem:[#allocation4 + $0x4] sm:$0xf]
        %v6044 = vld [vmem:[#allocation4 + $0x8] sm:$0xf]
        %v6045 = vld [vmem:[#allocation4 + $0xc] sm:$0xf]
        %v6046 = vld [vmem:[#allocation4 + $0x10] sm:$0xf]
        %v6047 = vld [vmem:[#allocation4 + $0x14] sm:$0xf]
        %v6048 = vld [vmem:[#allocation4 + $0x18] sm:$0xf]
        %v6049 = vld [vmem:[#allocation4 + $0x1c] sm:$0xf]
        %v6050 = vld [vmem:[#allocation4 + $0x20] sm:$0xf]
        %v6051 = vld [vmem:[#allocation4 + $0x24] sm:$0xf]
        %v6052 = vld [vmem:[#allocation4 + $0x28] sm:$0xf]
        %v6053 = vld [vmem:[#allocation4 + $0x2c] sm:$0xf]
        %v6054 = vld [vmem:[#allocation4 + $0x30] sm:$0xf]
        %v6055 = vld [vmem:[#allocation4 + $0x34] sm:$0xf]
        %v6056 = vld [vmem:[#allocation4 + $0x38] sm:$0xf]
        %v6057 = vld [vmem:[#allocation4 + $0x3c] sm:$0xf]
        %v6058 = vld [vmem:[#allocation4 + $0x40] sm:$0xf]
        %v6059 = vld [vmem:[#allocation4 + $0x44] sm:$0xf]
        %v6060 = vld [vmem:[#allocation4 + $0x48] sm:$0xf]
        %v6061 = vld [vmem:[#allocation4 + $0x4c] sm:$0xf]
        %v6062 = vld [vmem:[#allocation4 + $0x50] sm:$0xf]
        %v6063 = vld [vmem:[#allocation4 + $0x54] sm:$0xf]
        %v6064 = vld [vmem:[#allocation4 + $0x58] sm:$0xf]
        %v6065 = vld [vmem:[#allocation4 + $0x5c] sm:$0xf]
        %v6066 = vld [vmem:[#allocation4 + $0x60] sm:$0xf]
        %v6067 = vld [vmem:[#allocation4 + $0x64] sm:$0xf]
        %v6068 = vld [vmem:[#allocation4 + $0x68] sm:$0xf]
        %v6069 = vld [vmem:[#allocation4 + $0x6c] sm:$0xf]
        %v6070 = vld [vmem:[#allocation4 + $0x70] sm:$0xf]
        %v6071 = vld [vmem:[#allocation4 + $0x74] sm:$0xf]
        %v6072 = vld [vmem:[#allocation4 + $0x78] sm:$0xf]
        %v6073 = vld [vmem:[#allocation4 + $0x7c] sm:$0xf]
        %v6075 = vunpack.c.l.b16 %v6041
        %v6076 = vunpack.c.h.b16 %v6041
        %v6077 = vpack.c.b16 %v6075, %v6075
        %v6078 = vpack.c.b16 %v6076, %v6076
        %v6113 = vunpack.c.l.b16 %v6042
        %v6114 = vunpack.c.l.b16 %v6043
        %v6115 = vunpack.c.l.b16 %v6044
        %v6116 = vunpack.c.l.b16 %v6045
        %v6117 = vunpack.c.l.b16 %v6046
        %v6118 = vunpack.c.l.b16 %v6047
        %v6119 = vunpack.c.l.b16 %v6048
        %v6120 = vunpack.c.l.b16 %v6049
        %v6121 = vunpack.c.l.b16 %v6050
        %v6122 = vunpack.c.l.b16 %v6051
        %v6123 = vunpack.c.l.b16 %v6052
        %v6124 = vunpack.c.l.b16 %v6053
        %v6125 = vunpack.c.l.b16 %v6054
        %v6126 = vunpack.c.l.b16 %v6055
        %v6127 = vunpack.c.l.b16 %v6056
        %v6128 = vunpack.c.l.b16 %v6057
        %v6129 = vunpack.c.l.b16 %v6058
        %v6130 = vunpack.c.l.b16 %v6059
        %v6131 = vunpack.c.l.b16 %v6060
        %v6132 = vunpack.c.l.b16 %v6061
        %v6133 = vunpack.c.l.b16 %v6062
        %v6134 = vunpack.c.l.b16 %v6063
        %v6135 = vunpack.c.l.b16 %v6064
        %v6136 = vunpack.c.l.b16 %v6065
        %v6137 = vunpack.c.l.b16 %v6066
        %v6138 = vunpack.c.l.b16 %v6067
        %v6139 = vunpack.c.l.b16 %v6068
        %v6140 = vunpack.c.l.b16 %v6069
        %v6141 = vunpack.c.l.b16 %v6070
        %v6142 = vunpack.c.l.b16 %v6071
        %v6143 = vunpack.c.l.b16 %v6072
        %v6144 = vunpack.c.l.b16 %v6073
        %v6145 = vpack.c.b16 %v6114, %v6113
        %v6146 = vpack.c.b16 %v6116, %v6115
        %v6147 = vpack.c.b16 %v6118, %v6117
        %v6148 = vpack.c.b16 %v6120, %v6119
        %v6149 = vpack.c.b16 %v6122, %v6121
        %v6150 = vpack.c.b16 %v6124, %v6123
        %v6151 = vpack.c.b16 %v6126, %v6125
        %v6152 = vpack.c.b16 %v6128, %v6127
        %v6153 = vpack.c.b16 %v6130, %v6129
        %v6154 = vpack.c.b16 %v6132, %v6131
        %v6155 = vpack.c.b16 %v6134, %v6133
        %v6156 = vpack.c.b16 %v6136, %v6135
        %v6157 = vpack.c.b16 %v6138, %v6137
        %v6158 = vpack.c.b16 %v6140, %v6139
        %v6159 = vpack.c.b16 %v6142, %v6141
        %v6160 = vpack.c.b16 %v6144, %v6143
        %6177 = vmatpush.bf16.msra.mxu0 %v6152
        %6178 = vmatpush.bf16.msra.mxu0 %v6151
        %6179 = vmatpush.bf16.msra.mxu0 %v6150
        %6180 = vmatpush.bf16.msra.mxu0 %v6149
        %6181 = vmatpush.bf16.msra.mxu0 %v6148
        %6182 = vmatpush.bf16.msra.mxu0 %v6147
        %6183 = vmatpush.bf16.msra.mxu0 %v6146
        %6184 = vmatpush.bf16.msra.mxu0 %v6145
        %6185 = vmatmul.bf16.gmra.mxu0 %v6077
        %v6186 = vpop.f32.mrf.mxu0
        %v6187 = vadd.f32 0.0, %v6186
        %v6188 = vpop.f32.mrf.mxu0
        %6189 = vdwg.mxu0
        %6190 = vmatpush.bf16.msra.mxu0 %v6160
        %6191 = vmatpush.bf16.msra.mxu0 %v6159
        %6192 = vmatpush.bf16.msra.mxu0 %v6158
        %6193 = vmatpush.bf16.msra.mxu0 %v6157
        %6194 = vmatpush.bf16.msra.mxu0 %v6156
        %6195 = vmatpush.bf16.msra.mxu0 %v6155
        %6196 = vmatpush.bf16.msra.mxu0 %v6154
        %6197 = vmatpush.bf16.msra.mxu0 %v6153
        %6198 = vmatmul.bf16.gmra.mxu0 %v6078
        %v6199 = vpop.f32.mrf.mxu0
        %v6200 = vadd.f32 %v6187, %v6199
        %v6201 = vpop.f32.mrf.mxu0
        %6202 = vdwg.mxu0
        %v6203 = vmul.f32 %v6200, 0.05263158
        %6204 = vst [vmem:[%s299] sm:$0xff] %v6203
        %s6205 = sand.u32 %s203, 1
        %s6206 = scalar_lea.sflag [#allocation6], %s6205
        %s6207 = sand.u32 %s203, 1
        %s6208 = smul.addr %s6207, 8
        %s6209 = scalar_lea.vmem [#allocation5], %s6208
        // Predicated region
        $region53: #{conv1d_three_layers.1} parent=51 // pred_check
          %p6210 = pneg %p213
        $region54: #{conv1d_three_layers.1} parent=51 // pred_check_branch
          %6212 = sbr.rel (%p6210) target = $region56
        $region55: #{conv1d_three_layers.1} parent=51 // pred_region
          %6214 = vsyncadd %s6206, 0
          %s6215 = smul.addr %s22, 8
          %s6216 = scalar_lea.hbm %s8, %s6215
          %s6218 = sshll.u32 %s6209, 4
          %s6219 = int_to_ptr.vmem [resolvable:$true] %s6218
          %s6220 = sshll.u32 %s6216, 4
          %s6221 = int_to_ptr.hbm [resolvable:$true] %s6220
          %6223 = dma.vmem_to_hbm [thread:$0]  %s6219, 128, %s6221, %s6206
        $region56: #{conv1d_three_layers.1} parent=51 // pred_fallthru
          _
      $region52: #{conv1d_three_layers.1} parent=5 // pred_fallthru
        _
      %p6224 = scmp.le.s32.totalorder 2, %s17
      // Predicated region
      $region57: #{conv1d_three_layers.1} parent=5 // pred_check
        %p6225 = pneg %p6224
      $region58: #{conv1d_three_layers.1} parent=5 // pred_check_branch
        %6227 = sbr.rel (%p6225) target = $region60
      $region59: #{conv1d_three_layers.1} parent=5 // pred_region
        %s6228 = ssub.s32 %s17, 2
        // Predicated region
        $region61: #{conv1d_three_layers.1} parent=59 // pred_check
          %p6229 = pneg %p219
        $region62: #{conv1d_three_layers.1} parent=59 // pred_check_branch
          %6231 = sbr.rel (%p6229) target = $region64
        $region63: #{conv1d_three_layers.1} parent=59 // pred_region
          %s6232 = sand.u32 %s204, 1
          %s6233 = scalar_lea.sflag [#allocation6], %s6232
          %s6234 = sand.u32 %s204, 1
          %s6235 = smul.addr %s6234, 8
          %s6236 = scalar_lea.vmem [#allocation5], %s6235
          %6238 = dma.done %s6233, 128
        $region64: #{conv1d_three_layers.1} parent=59 // pred_fallthru
          _
      $region60: #{conv1d_three_layers.1} parent=5 // pred_fallthru
        _
    $region6: #{conv1d_three_layers.1} parent=1 // loop_footer
      %s21 = sadd.s32 1, %s17
    $region7: #{conv1d_three_layers.1} parent=1 // loop_footer_branch
      %16 = sbr.rel target = $region3
    $region8: #{conv1d_three_layers.1} parent=1 // loop_exit
      _
    %6239 = vsyncpa [#allocation6], 1
    %s6240 = scalar_lea.sflag [#allocation6], 1
    %6241 = vsyncpa %s6240, 1

</llo_original>
